<compile_context>
chip_gen: v7x
topology: tpu7x:2x2x1
jax: 0.10.0
libtpu: 0.0.40
codegen_flags: <defaults>
</compile_context>

<pallas_src>
import jax
import jax.numpy as jnp
from jax import lax
from jax.experimental import pallas as pl
from jax.experimental.pallas import tpu as pltpu

# Problem sizes (small, consistent with the module's __init__)
N = 128   # number of nodes
F = 8     # in_channels
H = 32    # hidden_channels
C = 16    # out_channels
ROW_BLOCK = 64   # rows of dist / output per grid step (2 blocks -> 2 TCs on v7x)
# n_layers = 2  -> each f: Linear(1,H) -> ReLU -> Dropout(0) -> Linear(H,C)
#               -> rho:    Linear(1,H) -> ReLU -> Linear(H,1)


def gnan_kernel(x_ref, dist_ref, norm_ref,
                wblk_ref, b1f_ref, w2f_ref, b2s_ref,
                rw1_ref, rb1_ref, rw2_ref, rb2_ref,
                out_ref):
    # ---- per-feature MLPs collapsed into two MXU matmuls ---------------------
    # W_block is block-diagonal: (x @ W_block)[:, f*H:(f+1)*H] = x[:, f:f+1] * w1[f]
    h = jnp.dot(x_ref[...], wblk_ref[...], preferred_element_type=jnp.float32)
    h = jnp.maximum(h + b1f_ref[...], 0.0)                           # [N, F*H]
    f_sums = (jnp.dot(h, w2f_ref[...], preferred_element_type=jnp.float32)
              + b2s_ref[...])                                        # [N, C]

    # ---- rho applied elementwise to this row-block of the distance matrix ----
    dist = dist_ref[...]                                             # [RB, N]
    norm = norm_ref[...]
    # EUP reciprocal issued before the VALU-bound loop (overlaps), refined with
    # one Newton step so accuracy matches exact f32 division.
    inv_norm = pl.reciprocal(norm, approx=True)
    inv_norm = inv_norm * (2.0 - norm * inv_norm)

    # rho(d) = sum_h relu(d * rw1[h] + rb1[h]) * rw2[h] + rb2   (scalar output)
    r0 = jnp.full(dist.shape, rb2_ref[0], dtype=jnp.float32)

    def body(hi, r):
        w = rw1_ref[hi]                                              # SMEM scalars
        b = rb1_ref[hi]
        v = rw2_ref[hi]
        return r + jnp.maximum(dist * w + b, 0.0) * v

    r = lax.fori_loop(0, H, body, r0, unroll=True)                   # full unroll

    # normalize_rho=True (rho output width is 1 -> divide by normalization row)
    r = r * inv_norm

    # out[j, :] = sum_k r[j, k] * f_sums[k, :]   (MXU matmul)
    out_ref[...] = jnp.dot(r, f_sums, preferred_element_type=jnp.float32)


def gnan_forward(x, dist, norm, w1, b1, w2, b2, rw1, rb1, rw2, rb2):
    # ---- host-side parameter repacking (pure JAX, outside the kernel) --------
    # w_block[f, g*H + h] = w1[g, h] if f == g else 0
    w_block = jnp.einsum('fg,fh->fgh', jnp.eye(F, dtype=w1.dtype), w1).reshape(F, F * H)
    b1_flat = b1.reshape(1, F * H)
    w2_flat = w2.reshape(F * H, C)
    b2_sum = b2.sum(axis=0).reshape(1, C)

    smem = pltpu.MemorySpace.SMEM
    grid = (N // ROW_BLOCK,)

    flops = (4 * N * N * H               # rho elementwise loop
             + 2 * N * F * (F * H)       # x @ W_block
             + 2 * N * (F * H) * C       # h @ w2_flat
             + 2 * N * N * C)            # rho @ f_sums
    bytes_accessed = 4 * (N * F + 2 * N * N + F * F * H + F * H + F * H * C + C
                          + 3 * H + 1 + N * C)

    return pl.pallas_call(
        gnan_kernel,
        out_shape=jax.ShapeDtypeStruct((N, C), jnp.float32),
        grid=grid,
        in_specs=[
            pl.BlockSpec((N, F), lambda i: (0, 0)),           # x (full, revisited)
            pl.BlockSpec((ROW_BLOCK, N), lambda i: (i, 0)),   # dist row-block
            pl.BlockSpec((ROW_BLOCK, N), lambda i: (i, 0)),   # norm row-block
            pl.BlockSpec((F, F * H), lambda i: (0, 0)),       # W_block
            pl.BlockSpec((1, F * H), lambda i: (0, 0)),       # b1_flat
            pl.BlockSpec((F * H, C), lambda i: (0, 0)),       # w2_flat
            pl.BlockSpec((1, C), lambda i: (0, 0)),           # b2_sum
            pl.BlockSpec(memory_space=smem),                  # rw1
            pl.BlockSpec(memory_space=smem),                  # rb1
            pl.BlockSpec(memory_space=smem),                  # rw2
            pl.BlockSpec(memory_space=smem),                  # rb2
        ],
        out_specs=pl.BlockSpec((ROW_BLOCK, C), lambda i: (i, 0)),
        compiler_params=pltpu.CompilerParams(dimension_semantics=("parallel",)),
        cost_estimate=pl.CostEstimate(flops=flops, transcendentals=N * N,
                                      bytes_accessed=bytes_accessed),
    )(x, dist, norm, w_block, b1_flat, w2_flat, b2_sum, rw1, rb1, rw2, rb2)


def gnan_reference(x, dist, norm, w1, b1, w2, b2, rw1, rb1, rw2, rb2):
    # pure-JAX reference mirroring the PyTorch forward
    h = jnp.maximum(x[:, :, None] * w1[None] + b1[None], 0.0)          # [N, F, H]
    fx = jnp.einsum('nfh,fhc->nfc', h, w2) + b2[None]                  # [N, F, C]
    f_sums = fx.sum(axis=1)                                            # [N, C]
    hr = jnp.maximum(dist[:, :, None] * rw1 + rb1, 0.0)                # [N, N, H]
    rho = hr @ rw2 + rb2[0]                                            # [N, N]
    rho = rho / norm
    return rho @ f_sums                                                # [N, C]


if __name__ == "__main__":
    key = jax.random.PRNGKey(0)
    ks = jax.random.split(key, 12)

    # inputs (synthetic "graph": features, pairwise distances, normalization)
    x = jax.random.normal(ks[0], (N, F), jnp.float32)
    dist = jnp.abs(jax.random.normal(ks[1], (N, N), jnp.float32))
    norm = 1.0 + jax.random.uniform(ks[2], (N, N), jnp.float32)

    # deterministic parameter init (per-feature MLPs + rho MLP), xavier-ish scale
    w1 = 0.5 * jax.random.normal(ks[3], (F, H), jnp.float32)     # Linear(1,H) weights
    b1 = 0.1 * jax.random.normal(ks[4], (F, H), jnp.float32)
    w2 = 0.2 * jax.random.normal(ks[5], (F, H, C), jnp.float32)  # Linear(H,C)^T
    b2 = 0.1 * jax.random.normal(ks[6], (F, C), jnp.float32)
    rw1 = 0.5 * jax.random.normal(ks[7], (H,), jnp.float32)      # rho Linear(1,H)
    rb1 = 0.1 * jax.random.normal(ks[8], (H,), jnp.float32)
    rw2 = 0.2 * jax.random.normal(ks[9], (H,), jnp.float32)      # rho Linear(H,1)
    rb2 = 0.1 * jax.random.normal(ks[10], (1,), jnp.float32)

    out = gnan_forward(x, dist, norm, w1, b1, w2, b2, rw1, rb1, rw2, rb2)
    out = jax.block_until_ready(out)

    ref = gnan_reference(x, dist, norm, w1, b1, w2, b2, rw1, rb1, rw2, rb2)
    assert out.shape == (N, C)
    assert jnp.allclose(out, ref, rtol=1e-4, atol=1e-4), "mismatch vs JAX reference"

    print("KERNEL_OK")
</pallas_src>

<mosaic_0001>
module attributes {stable_mosaic.version = 11 : i64} {
  func.func @gnan_kernel(%arg0: i32, %arg1: memref<128x8xf32, #tpu.memory_space<vmem>>, %arg2: memref<64x128xf32, #tpu.memory_space<vmem>>, %arg3: memref<64x128xf32, #tpu.memory_space<vmem>>, %arg4: memref<8x256xf32, #tpu.memory_space<vmem>>, %arg5: memref<1x256xf32, #tpu.memory_space<vmem>>, %arg6: memref<256x16xf32, #tpu.memory_space<vmem>>, %arg7: memref<1x16xf32, #tpu.memory_space<vmem>>, %arg8: memref<32xf32, #tpu.memory_space<smem>>, %arg9: memref<32xf32, #tpu.memory_space<smem>>, %arg10: memref<32xf32, #tpu.memory_space<smem>>, %arg11: memref<1xf32, #tpu.memory_space<smem>>, %arg12: memref<64x16xf32, #tpu.memory_space<vmem>>) attributes {dimension_semantics = [#tpu.dimension_semantics<parallel>], iteration_bounds = array<i64: 2>, scalar_prefetch = 0 : i64, scratch_operands = 0 : i64, tpu.core_type = #tpu.core_type<tc>, window_params = [{pipeline_mode = #tpu.pipeline_mode<synchronous>, transform_indices = @transform_0, window_bounds = array<i64: 128, 8>}, {transform_indices = @transform_1, window_bounds = array<i64: 64, 128>}, {transform_indices = @transform_2, window_bounds = array<i64: 64, 128>}, {pipeline_mode = #tpu.pipeline_mode<synchronous>, transform_indices = @transform_3, window_bounds = array<i64: 8, 256>}, {pipeline_mode = #tpu.pipeline_mode<synchronous>, transform_indices = @transform_4, window_bounds = array<i64: 1, 256>}, {pipeline_mode = #tpu.pipeline_mode<synchronous>, transform_indices = @transform_5, window_bounds = array<i64: 256, 16>}, {pipeline_mode = #tpu.pipeline_mode<synchronous>, transform_indices = @transform_6, window_bounds = array<i64: 1, 16>}, {transform_indices = @transform_7, window_bounds = array<i64: 32>}, {transform_indices = @transform_8, window_bounds = array<i64: 32>}, {transform_indices = @transform_9, window_bounds = array<i64: 32>}, {transform_indices = @transform_10, window_bounds = array<i64: 1>}, {transform_indices = @transform_11, window_bounds = array<i64: 64, 16>}]} {
    %c0 = arith.constant 0 : index
    %c0_0 = arith.constant 0 : index
    %0 = vector.load %arg1[%c0, %c0_0] : memref<128x8xf32, #tpu.memory_space<vmem>>, vector<128x8xf32>
    %c0_1 = arith.constant 0 : index
    %c0_2 = arith.constant 0 : index
    %1 = vector.load %arg4[%c0_1, %c0_2] : memref<8x256xf32, #tpu.memory_space<vmem>>, vector<8x256xf32>
    %cst = arith.constant dense<0.000000e+00> : vector<128x256xf32>
    %2 = tpu.matmul %0, %1, %cst {dimension_numbers = #tpu.dot_dimension_numbers<[1], [0], [0], [1], [0, 0, 1, 1], [], []>} : vector<128x8xf32>, vector<8x256xf32>, vector<128x256xf32> -> vector<128x256xf32>
    %c0_3 = arith.constant 0 : index
    %c0_4 = arith.constant 0 : index
    %3 = vector.load %arg5[%c0_3, %c0_4] : memref<1x256xf32, #tpu.memory_space<vmem>>, vector<1x256xf32>
    %4 = vector.broadcast %3 : vector<1x256xf32> to vector<128x256xf32>
    %5 = arith.addf %2, %4 : vector<128x256xf32>
    %cst_5 = arith.constant 0.000000e+00 : f32
    %6 = vector.broadcast %cst_5 : f32 to vector<128x256xf32>
    %7 = arith.maximumf %5, %6 : vector<128x256xf32>
    %c0_6 = arith.constant 0 : index
    %c0_7 = arith.constant 0 : index
    %8 = vector.load %arg6[%c0_6, %c0_7] : memref<256x16xf32, #tpu.memory_space<vmem>>, vector<256x16xf32>
    %cst_8 = arith.constant dense<0.000000e+00> : vector<128x16xf32>
    %9 = tpu.matmul %7, %8, %cst_8 {dimension_numbers = #tpu.dot_dimension_numbers<[1], [0], [0], [1], [0, 0, 1, 1], [], []>} : vector<128x256xf32>, vector<256x16xf32>, vector<128x16xf32> -> vector<128x16xf32>
    %c0_9 = arith.constant 0 : index
    %c0_10 = arith.constant 0 : index
    %10 = vector.load %arg7[%c0_9, %c0_10] : memref<1x16xf32, #tpu.memory_space<vmem>>, vector<1x16xf32>
    %11 = vector.broadcast %10 : vector<1x16xf32> to vector<128x16xf32>
    %12 = arith.addf %9, %11 : vector<128x16xf32>
    %c0_11 = arith.constant 0 : index
    %c0_12 = arith.constant 0 : index
    %13 = vector.load %arg2[%c0_11, %c0_12] : memref<64x128xf32, #tpu.memory_space<vmem>>, vector<64x128xf32>
    %c0_13 = arith.constant 0 : index
    %c0_14 = arith.constant 0 : index
    %14 = vector.load %arg3[%c0_13, %c0_14] : memref<64x128xf32, #tpu.memory_space<vmem>>, vector<64x128xf32>
    %15 = tpu.reciprocal %14 {approx = true} : vector<64x128xf32> -> vector<64x128xf32>
    %16 = arith.mulf %14, %15 : vector<64x128xf32>
    %cst_15 = arith.constant 2.000000e+00 : f32
    %17 = vector.broadcast %cst_15 : f32 to vector<64x128xf32>
    %18 = arith.subf %17, %16 : vector<64x128xf32>
    %19 = arith.mulf %15, %18 : vector<64x128xf32>
    %c0_16 = arith.constant 0 : index
    %20 = memref.load %arg11[%c0_16] : memref<1xf32, #tpu.memory_space<smem>>
    %21 = vector.broadcast %20 : f32 to vector<64x128xf32>
    %c0_i32 = arith.constant 0 : i32
    %22 = arith.index_cast %c0_i32 : i32 to index
    %23 = memref.load %arg8[%22] : memref<32xf32, #tpu.memory_space<smem>>
    %24 = arith.index_cast %c0_i32 : i32 to index
    %25 = memref.load %arg9[%24] : memref<32xf32, #tpu.memory_space<smem>>
    %26 = arith.index_cast %c0_i32 : i32 to index
    %27 = memref.load %arg10[%26] : memref<32xf32, #tpu.memory_space<smem>>
    %28 = vector.broadcast %23 : f32 to vector<64x128xf32>
    %29 = arith.mulf %13, %28 : vector<64x128xf32>
    %30 = vector.broadcast %25 : f32 to vector<64x128xf32>
    %31 = arith.addf %29, %30 : vector<64x128xf32>
    %cst_17 = arith.constant 0.000000e+00 : f32
    %32 = vector.broadcast %cst_17 : f32 to vector<64x128xf32>
    %33 = arith.maximumf %31, %32 : vector<64x128xf32>
    %34 = vector.broadcast %27 : f32 to vector<64x128xf32>
    %35 = arith.mulf %33, %34 : vector<64x128xf32>
    %36 = arith.addf %21, %35 : vector<64x128xf32>
    %c1_i32 = arith.constant 1 : i32
    %37 = arith.index_cast %c1_i32 : i32 to index
    %38 = memref.load %arg8[%37] : memref<32xf32, #tpu.memory_space<smem>>
    %39 = arith.index_cast %c1_i32 : i32 to index
    %40 = memref.load %arg9[%39] : memref<32xf32, #tpu.memory_space<smem>>
    %41 = arith.index_cast %c1_i32 : i32 to index
    %42 = memref.load %arg10[%41] : memref<32xf32, #tpu.memory_space<smem>>
    %43 = vector.broadcast %38 : f32 to vector<64x128xf32>
    %44 = arith.mulf %13, %43 : vector<64x128xf32>
    %45 = vector.broadcast %40 : f32 to vector<64x128xf32>
    %46 = arith.addf %44, %45 : vector<64x128xf32>
    %cst_18 = arith.constant 0.000000e+00 : f32
    %47 = vector.broadcast %cst_18 : f32 to vector<64x128xf32>
    %48 = arith.maximumf %46, %47 : vector<64x128xf32>
    %49 = vector.broadcast %42 : f32 to vector<64x128xf32>
    %50 = arith.mulf %48, %49 : vector<64x128xf32>
    %51 = arith.addf %36, %50 : vector<64x128xf32>
    %c2_i32 = arith.constant 2 : i32
    %52 = arith.index_cast %c2_i32 : i32 to index
    %53 = memref.load %arg8[%52] : memref<32xf32, #tpu.memory_space<smem>>
    %54 = arith.index_cast %c2_i32 : i32 to index
    %55 = memref.load %arg9[%54] : memref<32xf32, #tpu.memory_space<smem>>
    %56 = arith.index_cast %c2_i32 : i32 to index
    %57 = memref.load %arg10[%56] : memref<32xf32, #tpu.memory_space<smem>>
    %58 = vector.broadcast %53 : f32 to vector<64x128xf32>
    %59 = arith.mulf %13, %58 : vector<64x128xf32>
    %60 = vector.broadcast %55 : f32 to vector<64x128xf32>
    %61 = arith.addf %59, %60 : vector<64x128xf32>
    %cst_19 = arith.constant 0.000000e+00 : f32
    %62 = vector.broadcast %cst_19 : f32 to vector<64x128xf32>
    %63 = arith.maximumf %61, %62 : vector<64x128xf32>
    %64 = vector.broadcast %57 : f32 to vector<64x128xf32>
    %65 = arith.mulf %63, %64 : vector<64x128xf32>
    %66 = arith.addf %51, %65 : vector<64x128xf32>
    %c3_i32 = arith.constant 3 : i32
    %67 = arith.index_cast %c3_i32 : i32 to index
    %68 = memref.load %arg8[%67] : memref<32xf32, #tpu.memory_space<smem>>
    %69 = arith.index_cast %c3_i32 : i32 to index
    %70 = memref.load %arg9[%69] : memref<32xf32, #tpu.memory_space<smem>>
    %71 = arith.index_cast %c3_i32 : i32 to index
    %72 = memref.load %arg10[%71] : memref<32xf32, #tpu.memory_space<smem>>
    %73 = vector.broadcast %68 : f32 to vector<64x128xf32>
    %74 = arith.mulf %13, %73 : vector<64x128xf32>
    %75 = vector.broadcast %70 : f32 to vector<64x128xf32>
    %76 = arith.addf %74, %75 : vector<64x128xf32>
    %cst_20 = arith.constant 0.000000e+00 : f32
    %77 = vector.broadcast %cst_20 : f32 to vector<64x128xf32>
    %78 = arith.maximumf %76, %77 : vector<64x128xf32>
    %79 = vector.broadcast %72 : f32 to vector<64x128xf32>
    %80 = arith.mulf %78, %79 : vector<64x128xf32>
    %81 = arith.addf %66, %80 : vector<64x128xf32>
    %c4_i32 = arith.constant 4 : i32
    %82 = arith.index_cast %c4_i32 : i32 to index
    %83 = memref.load %arg8[%82] : memref<32xf32, #tpu.memory_space<smem>>
    %84 = arith.index_cast %c4_i32 : i32 to index
    %85 = memref.load %arg9[%84] : memref<32xf32, #tpu.memory_space<smem>>
    %86 = arith.index_cast %c4_i32 : i32 to index
    %87 = memref.load %arg10[%86] : memref<32xf32, #tpu.memory_space<smem>>
    %88 = vector.broadcast %83 : f32 to vector<64x128xf32>
    %89 = arith.mulf %13, %88 : vector<64x128xf32>
    %90 = vector.broadcast %85 : f32 to vector<64x128xf32>
    %91 = arith.addf %89, %90 : vector<64x128xf32>
    %cst_21 = arith.constant 0.000000e+00 : f32
    %92 = vector.broadcast %cst_21 : f32 to vector<64x128xf32>
    %93 = arith.maximumf %91, %92 : vector<64x128xf32>
    %94 = vector.broadcast %87 : f32 to vector<64x128xf32>
    %95 = arith.mulf %93, %94 : vector<64x128xf32>
    %96 = arith.addf %81, %95 : vector<64x128xf32>
    %c5_i32 = arith.constant 5 : i32
    %97 = arith.index_cast %c5_i32 : i32 to index
    %98 = memref.load %arg8[%97] : memref<32xf32, #tpu.memory_space<smem>>
    %99 = arith.index_cast %c5_i32 : i32 to index
    %100 = memref.load %arg9[%99] : memref<32xf32, #tpu.memory_space<smem>>
    %101 = arith.index_cast %c5_i32 : i32 to index
    %102 = memref.load %arg10[%101] : memref<32xf32, #tpu.memory_space<smem>>
    %103 = vector.broadcast %98 : f32 to vector<64x128xf32>
    %104 = arith.mulf %13, %103 : vector<64x128xf32>
    %105 = vector.broadcast %100 : f32 to vector<64x128xf32>
    %106 = arith.addf %104, %105 : vector<64x128xf32>
    %cst_22 = arith.constant 0.000000e+00 : f32
    %107 = vector.broadcast %cst_22 : f32 to vector<64x128xf32>
    %108 = arith.maximumf %106, %107 : vector<64x128xf32>
    %109 = vector.broadcast %102 : f32 to vector<64x128xf32>
    %110 = arith.mulf %108, %109 : vector<64x128xf32>
    %111 = arith.addf %96, %110 : vector<64x128xf32>
    %c6_i32 = arith.constant 6 : i32
    %112 = arith.index_cast %c6_i32 : i32 to index
    %113 = memref.load %arg8[%112] : memref<32xf32, #tpu.memory_space<smem>>
    %114 = arith.index_cast %c6_i32 : i32 to index
    %115 = memref.load %arg9[%114] : memref<32xf32, #tpu.memory_space<smem>>
    %116 = arith.index_cast %c6_i32 : i32 to index
    %117 = memref.load %arg10[%116] : memref<32xf32, #tpu.memory_space<smem>>
    %118 = vector.broadcast %113 : f32 to vector<64x128xf32>
    %119 = arith.mulf %13, %118 : vector<64x128xf32>
    %120 = vector.broadcast %115 : f32 to vector<64x128xf32>
    %121 = arith.addf %119, %120 : vector<64x128xf32>
    %cst_23 = arith.constant 0.000000e+00 : f32
    %122 = vector.broadcast %cst_23 : f32 to vector<64x128xf32>
    %123 = arith.maximumf %121, %122 : vector<64x128xf32>
    %124 = vector.broadcast %117 : f32 to vector<64x128xf32>
    %125 = arith.mulf %123, %124 : vector<64x128xf32>
    %126 = arith.addf %111, %125 : vector<64x128xf32>
    %c7_i32 = arith.constant 7 : i32
    %127 = arith.index_cast %c7_i32 : i32 to index
    %128 = memref.load %arg8[%127] : memref<32xf32, #tpu.memory_space<smem>>
    %129 = arith.index_cast %c7_i32 : i32 to index
    %130 = memref.load %arg9[%129] : memref<32xf32, #tpu.memory_space<smem>>
    %131 = arith.index_cast %c7_i32 : i32 to index
    %132 = memref.load %arg10[%131] : memref<32xf32, #tpu.memory_space<smem>>
    %133 = vector.broadcast %128 : f32 to vector<64x128xf32>
    %134 = arith.mulf %13, %133 : vector<64x128xf32>
    %135 = vector.broadcast %130 : f32 to vector<64x128xf32>
    %136 = arith.addf %134, %135 : vector<64x128xf32>
    %cst_24 = arith.constant 0.000000e+00 : f32
    %137 = vector.broadcast %cst_24 : f32 to vector<64x128xf32>
    %138 = arith.maximumf %136, %137 : vector<64x128xf32>
    %139 = vector.broadcast %132 : f32 to vector<64x128xf32>
    %140 = arith.mulf %138, %139 : vector<64x128xf32>
    %141 = arith.addf %126, %140 : vector<64x128xf32>
    %c8_i32 = arith.constant 8 : i32
    %142 = arith.index_cast %c8_i32 : i32 to index
    %143 = memref.load %arg8[%142] : memref<32xf32, #tpu.memory_space<smem>>
    %144 = arith.index_cast %c8_i32 : i32 to index
    %145 = memref.load %arg9[%144] : memref<32xf32, #tpu.memory_space<smem>>
    %146 = arith.index_cast %c8_i32 : i32 to index
    %147 = memref.load %arg10[%146] : memref<32xf32, #tpu.memory_space<smem>>
    %148 = vector.broadcast %143 : f32 to vector<64x128xf32>
    %149 = arith.mulf %13, %148 : vector<64x128xf32>
    %150 = vector.broadcast %145 : f32 to vector<64x128xf32>
    %151 = arith.addf %149, %150 : vector<64x128xf32>
    %cst_25 = arith.constant 0.000000e+00 : f32
    %152 = vector.broadcast %cst_25 : f32 to vector<64x128xf32>
    %153 = arith.maximumf %151, %152 : vector<64x128xf32>
    %154 = vector.broadcast %147 : f32 to vector<64x128xf32>
    %155 = arith.mulf %153, %154 : vector<64x128xf32>
    %156 = arith.addf %141, %155 : vector<64x128xf32>
    %c9_i32 = arith.constant 9 : i32
    %157 = arith.index_cast %c9_i32 : i32 to index
    %158 = memref.load %arg8[%157] : memref<32xf32, #tpu.memory_space<smem>>
    %159 = arith.index_cast %c9_i32 : i32 to index
    %160 = memref.load %arg9[%159] : memref<32xf32, #tpu.memory_space<smem>>
    %161 = arith.index_cast %c9_i32 : i32 to index
    %162 = memref.load %arg10[%161] : memref<32xf32, #tpu.memory_space<smem>>
    %163 = vector.broadcast %158 : f32 to vector<64x128xf32>
    %164 = arith.mulf %13, %163 : vector<64x128xf32>
    %165 = vector.broadcast %160 : f32 to vector<64x128xf32>
    %166 = arith.addf %164, %165 : vector<64x128xf32>
    %cst_26 = arith.constant 0.000000e+00 : f32
    %167 = vector.broadcast %cst_26 : f32 to vector<64x128xf32>
    %168 = arith.maximumf %166, %167 : vector<64x128xf32>
    %169 = vector.broadcast %162 : f32 to vector<64x128xf32>
    %170 = arith.mulf %168, %169 : vector<64x128xf32>
    %171 = arith.addf %156, %170 : vector<64x128xf32>
    %c10_i32 = arith.constant 10 : i32
    %172 = arith.index_cast %c10_i32 : i32 to index
    %173 = memref.load %arg8[%172] : memref<32xf32, #tpu.memory_space<smem>>
    %174 = arith.index_cast %c10_i32 : i32 to index
    %175 = memref.load %arg9[%174] : memref<32xf32, #tpu.memory_space<smem>>
    %176 = arith.index_cast %c10_i32 : i32 to index
    %177 = memref.load %arg10[%176] : memref<32xf32, #tpu.memory_space<smem>>
    %178 = vector.broadcast %173 : f32 to vector<64x128xf32>
    %179 = arith.mulf %13, %178 : vector<64x128xf32>
    %180 = vector.broadcast %175 : f32 to vector<64x128xf32>
    %181 = arith.addf %179, %180 : vector<64x128xf32>
    %cst_27 = arith.constant 0.000000e+00 : f32
    %182 = vector.broadcast %cst_27 : f32 to vector<64x128xf32>
    %183 = arith.maximumf %181, %182 : vector<64x128xf32>
    %184 = vector.broadcast %177 : f32 to vector<64x128xf32>
    %185 = arith.mulf %183, %184 : vector<64x128xf32>
    %186 = arith.addf %171, %185 : vector<64x128xf32>
    %c11_i32 = arith.constant 11 : i32
    %187 = arith.index_cast %c11_i32 : i32 to index
    %188 = memref.load %arg8[%187] : memref<32xf32, #tpu.memory_space<smem>>
    %189 = arith.index_cast %c11_i32 : i32 to index
    %190 = memref.load %arg9[%189] : memref<32xf32, #tpu.memory_space<smem>>
    %191 = arith.index_cast %c11_i32 : i32 to index
    %192 = memref.load %arg10[%191] : memref<32xf32, #tpu.memory_space<smem>>
    %193 = vector.broadcast %188 : f32 to vector<64x128xf32>
    %194 = arith.mulf %13, %193 : vector<64x128xf32>
    %195 = vector.broadcast %190 : f32 to vector<64x128xf32>
    %196 = arith.addf %194, %195 : vector<64x128xf32>
    %cst_28 = arith.constant 0.000000e+00 : f32
    %197 = vector.broadcast %cst_28 : f32 to vector<64x128xf32>
    %198 = arith.maximumf %196, %197 : vector<64x128xf32>
    %199 = vector.broadcast %192 : f32 to vector<64x128xf32>
    %200 = arith.mulf %198, %199 : vector<64x128xf32>
    %201 = arith.addf %186, %200 : vector<64x128xf32>
    %c12_i32 = arith.constant 12 : i32
    %202 = arith.index_cast %c12_i32 : i32 to index
    %203 = memref.load %arg8[%202] : memref<32xf32, #tpu.memory_space<smem>>
    %204 = arith.index_cast %c12_i32 : i32 to index
    %205 = memref.load %arg9[%204] : memref<32xf32, #tpu.memory_space<smem>>
    %206 = arith.index_cast %c12_i32 : i32 to index
    %207 = memref.load %arg10[%206] : memref<32xf32, #tpu.memory_space<smem>>
    %208 = vector.broadcast %203 : f32 to vector<64x128xf32>
    %209 = arith.mulf %13, %208 : vector<64x128xf32>
    %210 = vector.broadcast %205 : f32 to vector<64x128xf32>
    %211 = arith.addf %209, %210 : vector<64x128xf32>
    %cst_29 = arith.constant 0.000000e+00 : f32
    %212 = vector.broadcast %cst_29 : f32 to vector<64x128xf32>
    %213 = arith.maximumf %211, %212 : vector<64x128xf32>
    %214 = vector.broadcast %207 : f32 to vector<64x128xf32>
    %215 = arith.mulf %213, %214 : vector<64x128xf32>
    %216 = arith.addf %201, %215 : vector<64x128xf32>
    %c13_i32 = arith.constant 13 : i32
    %217 = arith.index_cast %c13_i32 : i32 to index
    %218 = memref.load %arg8[%217] : memref<32xf32, #tpu.memory_space<smem>>
    %219 = arith.index_cast %c13_i32 : i32 to index
    %220 = memref.load %arg9[%219] : memref<32xf32, #tpu.memory_space<smem>>
    %221 = arith.index_cast %c13_i32 : i32 to index
    %222 = memref.load %arg10[%221] : memref<32xf32, #tpu.memory_space<smem>>
    %223 = vector.broadcast %218 : f32 to vector<64x128xf32>
    %224 = arith.mulf %13, %223 : vector<64x128xf32>
    %225 = vector.broadcast %220 : f32 to vector<64x128xf32>
    %226 = arith.addf %224, %225 : vector<64x128xf32>
    %cst_30 = arith.constant 0.000000e+00 : f32
    %227 = vector.broadcast %cst_30 : f32 to vector<64x128xf32>
    %228 = arith.maximumf %226, %227 : vector<64x128xf32>
    %229 = vector.broadcast %222 : f32 to vector<64x128xf32>
    %230 = arith.mulf %228, %229 : vector<64x128xf32>
    %231 = arith.addf %216, %230 : vector<64x128xf32>
    %c14_i32 = arith.constant 14 : i32
    %232 = arith.index_cast %c14_i32 : i32 to index
    %233 = memref.load %arg8[%232] : memref<32xf32, #tpu.memory_space<smem>>
    %234 = arith.index_cast %c14_i32 : i32 to index
    %235 = memref.load %arg9[%234] : memref<32xf32, #tpu.memory_space<smem>>
    %236 = arith.index_cast %c14_i32 : i32 to index
    %237 = memref.load %arg10[%236] : memref<32xf32, #tpu.memory_space<smem>>
    %238 = vector.broadcast %233 : f32 to vector<64x128xf32>
    %239 = arith.mulf %13, %238 : vector<64x128xf32>
    %240 = vector.broadcast %235 : f32 to vector<64x128xf32>
    %241 = arith.addf %239, %240 : vector<64x128xf32>
    %cst_31 = arith.constant 0.000000e+00 : f32
    %242 = vector.broadcast %cst_31 : f32 to vector<64x128xf32>
    %243 = arith.maximumf %241, %242 : vector<64x128xf32>
    %244 = vector.broadcast %237 : f32 to vector<64x128xf32>
    %245 = arith.mulf %243, %244 : vector<64x128xf32>
    %246 = arith.addf %231, %245 : vector<64x128xf32>
    %c15_i32 = arith.constant 15 : i32
    %247 = arith.index_cast %c15_i32 : i32 to index
    %248 = memref.load %arg8[%247] : memref<32xf32, #tpu.memory_space<smem>>
    %249 = arith.index_cast %c15_i32 : i32 to index
    %250 = memref.load %arg9[%249] : memref<32xf32, #tpu.memory_space<smem>>
    %251 = arith.index_cast %c15_i32 : i32 to index
    %252 = memref.load %arg10[%251] : memref<32xf32, #tpu.memory_space<smem>>
    %253 = vector.broadcast %248 : f32 to vector<64x128xf32>
    %254 = arith.mulf %13, %253 : vector<64x128xf32>
    %255 = vector.broadcast %250 : f32 to vector<64x128xf32>
    %256 = arith.addf %254, %255 : vector<64x128xf32>
    %cst_32 = arith.constant 0.000000e+00 : f32
    %257 = vector.broadcast %cst_32 : f32 to vector<64x128xf32>
    %258 = arith.maximumf %256, %257 : vector<64x128xf32>
    %259 = vector.broadcast %252 : f32 to vector<64x128xf32>
    %260 = arith.mulf %258, %259 : vector<64x128xf32>
    %261 = arith.addf %246, %260 : vector<64x128xf32>
    %c16_i32 = arith.constant 16 : i32
    %262 = arith.index_cast %c16_i32 : i32 to index
    %263 = memref.load %arg8[%262] : memref<32xf32, #tpu.memory_space<smem>>
    %264 = arith.index_cast %c16_i32 : i32 to index
    %265 = memref.load %arg9[%264] : memref<32xf32, #tpu.memory_space<smem>>
    %266 = arith.index_cast %c16_i32 : i32 to index
    %267 = memref.load %arg10[%266] : memref<32xf32, #tpu.memory_space<smem>>
    %268 = vector.broadcast %263 : f32 to vector<64x128xf32>
    %269 = arith.mulf %13, %268 : vector<64x128xf32>
    %270 = vector.broadcast %265 : f32 to vector<64x128xf32>
    %271 = arith.addf %269, %270 : vector<64x128xf32>
    %cst_33 = arith.constant 0.000000e+00 : f32
    %272 = vector.broadcast %cst_33 : f32 to vector<64x128xf32>
    %273 = arith.maximumf %271, %272 : vector<64x128xf32>
    %274 = vector.broadcast %267 : f32 to vector<64x128xf32>
    %275 = arith.mulf %273, %274 : vector<64x128xf32>
    %276 = arith.addf %261, %275 : vector<64x128xf32>
    %c17_i32 = arith.constant 17 : i32
    %277 = arith.index_cast %c17_i32 : i32 to index
    %278 = memref.load %arg8[%277] : memref<32xf32, #tpu.memory_space<smem>>
    %279 = arith.index_cast %c17_i32 : i32 to index
    %280 = memref.load %arg9[%279] : memref<32xf32, #tpu.memory_space<smem>>
    %281 = arith.index_cast %c17_i32 : i32 to index
    %282 = memref.load %arg10[%281] : memref<32xf32, #tpu.memory_space<smem>>
    %283 = vector.broadcast %278 : f32 to vector<64x128xf32>
    %284 = arith.mulf %13, %283 : vector<64x128xf32>
    %285 = vector.broadcast %280 : f32 to vector<64x128xf32>
    %286 = arith.addf %284, %285 : vector<64x128xf32>
    %cst_34 = arith.constant 0.000000e+00 : f32
    %287 = vector.broadcast %cst_34 : f32 to vector<64x128xf32>
    %288 = arith.maximumf %286, %287 : vector<64x128xf32>
    %289 = vector.broadcast %282 : f32 to vector<64x128xf32>
    %290 = arith.mulf %288, %289 : vector<64x128xf32>
    %291 = arith.addf %276, %290 : vector<64x128xf32>
    %c18_i32 = arith.constant 18 : i32
    %292 = arith.index_cast %c18_i32 : i32 to index
    %293 = memref.load %arg8[%292] : memref<32xf32, #tpu.memory_space<smem>>
    %294 = arith.index_cast %c18_i32 : i32 to index
    %295 = memref.load %arg9[%294] : memref<32xf32, #tpu.memory_space<smem>>
    %296 = arith.index_cast %c18_i32 : i32 to index
    %297 = memref.load %arg10[%296] : memref<32xf32, #tpu.memory_space<smem>>
    %298 = vector.broadcast %293 : f32 to vector<64x128xf32>
    %299 = arith.mulf %13, %298 : vector<64x128xf32>
    %300 = vector.broadcast %295 : f32 to vector<64x128xf32>
    %301 = arith.addf %299, %300 : vector<64x128xf32>
    %cst_35 = arith.constant 0.000000e+00 : f32
    %302 = vector.broadcast %cst_35 : f32 to vector<64x128xf32>
    %303 = arith.maximumf %301, %302 : vector<64x128xf32>
    %304 = vector.broadcast %297 : f32 to vector<64x128xf32>
    %305 = arith.mulf %303, %304 : vector<64x128xf32>
    %306 = arith.addf %291, %305 : vector<64x128xf32>
    %c19_i32 = arith.constant 19 : i32
    %307 = arith.index_cast %c19_i32 : i32 to index
    %308 = memref.load %arg8[%307] : memref<32xf32, #tpu.memory_space<smem>>
    %309 = arith.index_cast %c19_i32 : i32 to index
    %310 = memref.load %arg9[%309] : memref<32xf32, #tpu.memory_space<smem>>
    %311 = arith.index_cast %c19_i32 : i32 to index
    %312 = memref.load %arg10[%311] : memref<32xf32, #tpu.memory_space<smem>>
    %313 = vector.broadcast %308 : f32 to vector<64x128xf32>
    %314 = arith.mulf %13, %313 : vector<64x128xf32>
    %315 = vector.broadcast %310 : f32 to vector<64x128xf32>
    %316 = arith.addf %314, %315 : vector<64x128xf32>
    %cst_36 = arith.constant 0.000000e+00 : f32
    %317 = vector.broadcast %cst_36 : f32 to vector<64x128xf32>
    %318 = arith.maximumf %316, %317 : vector<64x128xf32>
    %319 = vector.broadcast %312 : f32 to vector<64x128xf32>
    %320 = arith.mulf %318, %319 : vector<64x128xf32>
    %321 = arith.addf %306, %320 : vector<64x128xf32>
    %c20_i32 = arith.constant 20 : i32
    %322 = arith.index_cast %c20_i32 : i32 to index
    %323 = memref.load %arg8[%322] : memref<32xf32, #tpu.memory_space<smem>>
    %324 = arith.index_cast %c20_i32 : i32 to index
    %325 = memref.load %arg9[%324] : memref<32xf32, #tpu.memory_space<smem>>
    %326 = arith.index_cast %c20_i32 : i32 to index
    %327 = memref.load %arg10[%326] : memref<32xf32, #tpu.memory_space<smem>>
    %328 = vector.broadcast %323 : f32 to vector<64x128xf32>
    %329 = arith.mulf %13, %328 : vector<64x128xf32>
    %330 = vector.broadcast %325 : f32 to vector<64x128xf32>
    %331 = arith.addf %329, %330 : vector<64x128xf32>
    %cst_37 = arith.constant 0.000000e+00 : f32
    %332 = vector.broadcast %cst_37 : f32 to vector<64x128xf32>
    %333 = arith.maximumf %331, %332 : vector<64x128xf32>
    %334 = vector.broadcast %327 : f32 to vector<64x128xf32>
    %335 = arith.mulf %333, %334 : vector<64x128xf32>
    %336 = arith.addf %321, %335 : vector<64x128xf32>
    %c21_i32 = arith.constant 21 : i32
    %337 = arith.index_cast %c21_i32 : i32 to index
    %338 = memref.load %arg8[%337] : memref<32xf32, #tpu.memory_space<smem>>
    %339 = arith.index_cast %c21_i32 : i32 to index
    %340 = memref.load %arg9[%339] : memref<32xf32, #tpu.memory_space<smem>>
    %341 = arith.index_cast %c21_i32 : i32 to index
    %342 = memref.load %arg10[%341] : memref<32xf32, #tpu.memory_space<smem>>
    %343 = vector.broadcast %338 : f32 to vector<64x128xf32>
    %344 = arith.mulf %13, %343 : vector<64x128xf32>
    %345 = vector.broadcast %340 : f32 to vector<64x128xf32>
    %346 = arith.addf %344, %345 : vector<64x128xf32>
    %cst_38 = arith.constant 0.000000e+00 : f32
    %347 = vector.broadcast %cst_38 : f32 to vector<64x128xf32>
    %348 = arith.maximumf %346, %347 : vector<64x128xf32>
    %349 = vector.broadcast %342 : f32 to vector<64x128xf32>
    %350 = arith.mulf %348, %349 : vector<64x128xf32>
    %351 = arith.addf %336, %350 : vector<64x128xf32>
    %c22_i32 = arith.constant 22 : i32
    %352 = arith.index_cast %c22_i32 : i32 to index
    %353 = memref.load %arg8[%352] : memref<32xf32, #tpu.memory_space<smem>>
    %354 = arith.index_cast %c22_i32 : i32 to index
    %355 = memref.load %arg9[%354] : memref<32xf32, #tpu.memory_space<smem>>
    %356 = arith.index_cast %c22_i32 : i32 to index
    %357 = memref.load %arg10[%356] : memref<32xf32, #tpu.memory_space<smem>>
    %358 = vector.broadcast %353 : f32 to vector<64x128xf32>
    %359 = arith.mulf %13, %358 : vector<64x128xf32>
    %360 = vector.broadcast %355 : f32 to vector<64x128xf32>
    %361 = arith.addf %359, %360 : vector<64x128xf32>
    %cst_39 = arith.constant 0.000000e+00 : f32
    %362 = vector.broadcast %cst_39 : f32 to vector<64x128xf32>
    %363 = arith.maximumf %361, %362 : vector<64x128xf32>
    %364 = vector.broadcast %357 : f32 to vector<64x128xf32>
    %365 = arith.mulf %363, %364 : vector<64x128xf32>
    %366 = arith.addf %351, %365 : vector<64x128xf32>
    %c23_i32 = arith.constant 23 : i32
    %367 = arith.index_cast %c23_i32 : i32 to index
    %368 = memref.load %arg8[%367] : memref<32xf32, #tpu.memory_space<smem>>
    %369 = arith.index_cast %c23_i32 : i32 to index
    %370 = memref.load %arg9[%369] : memref<32xf32, #tpu.memory_space<smem>>
    %371 = arith.index_cast %c23_i32 : i32 to index
    %372 = memref.load %arg10[%371] : memref<32xf32, #tpu.memory_space<smem>>
    %373 = vector.broadcast %368 : f32 to vector<64x128xf32>
    %374 = arith.mulf %13, %373 : vector<64x128xf32>
    %375 = vector.broadcast %370 : f32 to vector<64x128xf32>
    %376 = arith.addf %374, %375 : vector<64x128xf32>
    %cst_40 = arith.constant 0.000000e+00 : f32
    %377 = vector.broadcast %cst_40 : f32 to vector<64x128xf32>
    %378 = arith.maximumf %376, %377 : vector<64x128xf32>
    %379 = vector.broadcast %372 : f32 to vector<64x128xf32>
    %380 = arith.mulf %378, %379 : vector<64x128xf32>
    %381 = arith.addf %366, %380 : vector<64x128xf32>
    %c24_i32 = arith.constant 24 : i32
    %382 = arith.index_cast %c24_i32 : i32 to index
    %383 = memref.load %arg8[%382] : memref<32xf32, #tpu.memory_space<smem>>
    %384 = arith.index_cast %c24_i32 : i32 to index
    %385 = memref.load %arg9[%384] : memref<32xf32, #tpu.memory_space<smem>>
    %386 = arith.index_cast %c24_i32 : i32 to index
    %387 = memref.load %arg10[%386] : memref<32xf32, #tpu.memory_space<smem>>
    %388 = vector.broadcast %383 : f32 to vector<64x128xf32>
    %389 = arith.mulf %13, %388 : vector<64x128xf32>
    %390 = vector.broadcast %385 : f32 to vector<64x128xf32>
    %391 = arith.addf %389, %390 : vector<64x128xf32>
    %cst_41 = arith.constant 0.000000e+00 : f32
    %392 = vector.broadcast %cst_41 : f32 to vector<64x128xf32>
    %393 = arith.maximumf %391, %392 : vector<64x128xf32>
    %394 = vector.broadcast %387 : f32 to vector<64x128xf32>
    %395 = arith.mulf %393, %394 : vector<64x128xf32>
    %396 = arith.addf %381, %395 : vector<64x128xf32>
    %c25_i32 = arith.constant 25 : i32
    %397 = arith.index_cast %c25_i32 : i32 to index
    %398 = memref.load %arg8[%397] : memref<32xf32, #tpu.memory_space<smem>>
    %399 = arith.index_cast %c25_i32 : i32 to index
    %400 = memref.load %arg9[%399] : memref<32xf32, #tpu.memory_space<smem>>
    %401 = arith.index_cast %c25_i32 : i32 to index
    %402 = memref.load %arg10[%401] : memref<32xf32, #tpu.memory_space<smem>>
    %403 = vector.broadcast %398 : f32 to vector<64x128xf32>
    %404 = arith.mulf %13, %403 : vector<64x128xf32>
    %405 = vector.broadcast %400 : f32 to vector<64x128xf32>
    %406 = arith.addf %404, %405 : vector<64x128xf32>
    %cst_42 = arith.constant 0.000000e+00 : f32
    %407 = vector.broadcast %cst_42 : f32 to vector<64x128xf32>
    %408 = arith.maximumf %406, %407 : vector<64x128xf32>
    %409 = vector.broadcast %402 : f32 to vector<64x128xf32>
    %410 = arith.mulf %408, %409 : vector<64x128xf32>
    %411 = arith.addf %396, %410 : vector<64x128xf32>
    %c26_i32 = arith.constant 26 : i32
    %412 = arith.index_cast %c26_i32 : i32 to index
    %413 = memref.load %arg8[%412] : memref<32xf32, #tpu.memory_space<smem>>
    %414 = arith.index_cast %c26_i32 : i32 to index
    %415 = memref.load %arg9[%414] : memref<32xf32, #tpu.memory_space<smem>>
    %416 = arith.index_cast %c26_i32 : i32 to index
    %417 = memref.load %arg10[%416] : memref<32xf32, #tpu.memory_space<smem>>
    %418 = vector.broadcast %413 : f32 to vector<64x128xf32>
    %419 = arith.mulf %13, %418 : vector<64x128xf32>
    %420 = vector.broadcast %415 : f32 to vector<64x128xf32>
    %421 = arith.addf %419, %420 : vector<64x128xf32>
    %cst_43 = arith.constant 0.000000e+00 : f32
    %422 = vector.broadcast %cst_43 : f32 to vector<64x128xf32>
    %423 = arith.maximumf %421, %422 : vector<64x128xf32>
    %424 = vector.broadcast %417 : f32 to vector<64x128xf32>
    %425 = arith.mulf %423, %424 : vector<64x128xf32>
    %426 = arith.addf %411, %425 : vector<64x128xf32>
    %c27_i32 = arith.constant 27 : i32
    %427 = arith.index_cast %c27_i32 : i32 to index
    %428 = memref.load %arg8[%427] : memref<32xf32, #tpu.memory_space<smem>>
    %429 = arith.index_cast %c27_i32 : i32 to index
    %430 = memref.load %arg9[%429] : memref<32xf32, #tpu.memory_space<smem>>
    %431 = arith.index_cast %c27_i32 : i32 to index
    %432 = memref.load %arg10[%431] : memref<32xf32, #tpu.memory_space<smem>>
    %433 = vector.broadcast %428 : f32 to vector<64x128xf32>
    %434 = arith.mulf %13, %433 : vector<64x128xf32>
    %435 = vector.broadcast %430 : f32 to vector<64x128xf32>
    %436 = arith.addf %434, %435 : vector<64x128xf32>
    %cst_44 = arith.constant 0.000000e+00 : f32
    %437 = vector.broadcast %cst_44 : f32 to vector<64x128xf32>
    %438 = arith.maximumf %436, %437 : vector<64x128xf32>
    %439 = vector.broadcast %432 : f32 to vector<64x128xf32>
    %440 = arith.mulf %438, %439 : vector<64x128xf32>
    %441 = arith.addf %426, %440 : vector<64x128xf32>
    %c28_i32 = arith.constant 28 : i32
    %442 = arith.index_cast %c28_i32 : i32 to index
    %443 = memref.load %arg8[%442] : memref<32xf32, #tpu.memory_space<smem>>
    %444 = arith.index_cast %c28_i32 : i32 to index
    %445 = memref.load %arg9[%444] : memref<32xf32, #tpu.memory_space<smem>>
    %446 = arith.index_cast %c28_i32 : i32 to index
    %447 = memref.load %arg10[%446] : memref<32xf32, #tpu.memory_space<smem>>
    %448 = vector.broadcast %443 : f32 to vector<64x128xf32>
    %449 = arith.mulf %13, %448 : vector<64x128xf32>
    %450 = vector.broadcast %445 : f32 to vector<64x128xf32>
    %451 = arith.addf %449, %450 : vector<64x128xf32>
    %cst_45 = arith.constant 0.000000e+00 : f32
    %452 = vector.broadcast %cst_45 : f32 to vector<64x128xf32>
    %453 = arith.maximumf %451, %452 : vector<64x128xf32>
    %454 = vector.broadcast %447 : f32 to vector<64x128xf32>
    %455 = arith.mulf %453, %454 : vector<64x128xf32>
    %456 = arith.addf %441, %455 : vector<64x128xf32>
    %c29_i32 = arith.constant 29 : i32
    %457 = arith.index_cast %c29_i32 : i32 to index
    %458 = memref.load %arg8[%457] : memref<32xf32, #tpu.memory_space<smem>>
    %459 = arith.index_cast %c29_i32 : i32 to index
    %460 = memref.load %arg9[%459] : memref<32xf32, #tpu.memory_space<smem>>
    %461 = arith.index_cast %c29_i32 : i32 to index
    %462 = memref.load %arg10[%461] : memref<32xf32, #tpu.memory_space<smem>>
    %463 = vector.broadcast %458 : f32 to vector<64x128xf32>
    %464 = arith.mulf %13, %463 : vector<64x128xf32>
    %465 = vector.broadcast %460 : f32 to vector<64x128xf32>
    %466 = arith.addf %464, %465 : vector<64x128xf32>
    %cst_46 = arith.constant 0.000000e+00 : f32
    %467 = vector.broadcast %cst_46 : f32 to vector<64x128xf32>
    %468 = arith.maximumf %466, %467 : vector<64x128xf32>
    %469 = vector.broadcast %462 : f32 to vector<64x128xf32>
    %470 = arith.mulf %468, %469 : vector<64x128xf32>
    %471 = arith.addf %456, %470 : vector<64x128xf32>
    %c30_i32 = arith.constant 30 : i32
    %472 = arith.index_cast %c30_i32 : i32 to index
    %473 = memref.load %arg8[%472] : memref<32xf32, #tpu.memory_space<smem>>
    %474 = arith.index_cast %c30_i32 : i32 to index
    %475 = memref.load %arg9[%474] : memref<32xf32, #tpu.memory_space<smem>>
    %476 = arith.index_cast %c30_i32 : i32 to index
    %477 = memref.load %arg10[%476] : memref<32xf32, #tpu.memory_space<smem>>
    %478 = vector.broadcast %473 : f32 to vector<64x128xf32>
    %479 = arith.mulf %13, %478 : vector<64x128xf32>
    %480 = vector.broadcast %475 : f32 to vector<64x128xf32>
    %481 = arith.addf %479, %480 : vector<64x128xf32>
    %cst_47 = arith.constant 0.000000e+00 : f32
    %482 = vector.broadcast %cst_47 : f32 to vector<64x128xf32>
    %483 = arith.maximumf %481, %482 : vector<64x128xf32>
    %484 = vector.broadcast %477 : f32 to vector<64x128xf32>
    %485 = arith.mulf %483, %484 : vector<64x128xf32>
    %486 = arith.addf %471, %485 : vector<64x128xf32>
    %c31_i32 = arith.constant 31 : i32
    %487 = arith.index_cast %c31_i32 : i32 to index
    %488 = memref.load %arg8[%487] : memref<32xf32, #tpu.memory_space<smem>>
    %489 = arith.index_cast %c31_i32 : i32 to index
    %490 = memref.load %arg9[%489] : memref<32xf32, #tpu.memory_space<smem>>
    %491 = arith.index_cast %c31_i32 : i32 to index
    %492 = memref.load %arg10[%491] : memref<32xf32, #tpu.memory_space<smem>>
    %493 = vector.broadcast %488 : f32 to vector<64x128xf32>
    %494 = arith.mulf %13, %493 : vector<64x128xf32>
    %495 = vector.broadcast %490 : f32 to vector<64x128xf32>
    %496 = arith.addf %494, %495 : vector<64x128xf32>
    %cst_48 = arith.constant 0.000000e+00 : f32
    %497 = vector.broadcast %cst_48 : f32 to vector<64x128xf32>
    %498 = arith.maximumf %496, %497 : vector<64x128xf32>
    %499 = vector.broadcast %492 : f32 to vector<64x128xf32>
    %500 = arith.mulf %498, %499 : vector<64x128xf32>
    %501 = arith.addf %486, %500 : vector<64x128xf32>
    %c32_i32 = arith.constant 32 : i32
    %502 = arith.mulf %501, %19 : vector<64x128xf32>
    %cst_49 = arith.constant dense<0.000000e+00> : vector<64x16xf32>
    %503 = tpu.matmul %502, %12, %cst_49 {dimension_numbers = #tpu.dot_dimension_numbers<[1], [0], [0], [1], [0, 0, 1, 1], [], []>} : vector<64x128xf32>, vector<128x16xf32>, vector<64x16xf32> -> vector<64x16xf32>
    %c0_50 = arith.constant 0 : index
    %c0_51 = arith.constant 0 : index
    %504 = vector.load %arg12[%c0_50, %c0_51] : memref<64x16xf32, #tpu.memory_space<vmem>>, vector<64x16xf32>
    tpu.vector_store %arg12[%c0_50, %c0_51], %503 {strides = array<i32>} : memref<64x16xf32, #tpu.memory_space<vmem>>, vector<64x16xf32>,
    return
  }
  func.func @transform_0(%arg0: i32) -> (i32, i32) {
    %c0_i32 = arith.constant 0 : i32
    %c0_i32_0 = arith.constant 0 : i32
    %c0_i32_1 = arith.constant 0 : i32
    return %c0_i32, %c0_i32_0 : i32, i32
  }
  func.func @transform_1(%arg0: i32) -> (i32, i32) {
    %c0_i32 = arith.constant 0 : i32
    %c0_i32_0 = arith.constant 0 : i32
    return %arg0, %c0_i32 : i32, i32
  }
  func.func @transform_2(%arg0: i32) -> (i32, i32) {
    %c0_i32 = arith.constant 0 : i32
    %c0_i32_0 = arith.constant 0 : i32
    return %arg0, %c0_i32 : i32, i32
  }
  func.func @transform_3(%arg0: i32) -> (i32, i32) {
    %c0_i32 = arith.constant 0 : i32
    %c0_i32_0 = arith.constant 0 : i32
    %c0_i32_1 = arith.constant 0 : i32
    return %c0_i32, %c0_i32_0 : i32, i32
  }
  func.func @transform_4(%arg0: i32) -> (i32, i32) {
    %c0_i32 = arith.constant 0 : i32
    %c0_i32_0 = arith.constant 0 : i32
    %c0_i32_1 = arith.constant 0 : i32
    return %c0_i32, %c0_i32_0 : i32, i32
  }
  func.func @transform_5(%arg0: i32) -> (i32, i32) {
    %c0_i32 = arith.constant 0 : i32
    %c0_i32_0 = arith.constant 0 : i32
    %c0_i32_1 = arith.constant 0 : i32
    return %c0_i32, %c0_i32_0 : i32, i32
  }
  func.func @transform_6(%arg0: i32) -> (i32, i32) {
    %c0_i32 = arith.constant 0 : i32
    %c0_i32_0 = arith.constant 0 : i32
    %c0_i32_1 = arith.constant 0 : i32
    return %c0_i32, %c0_i32_0 : i32, i32
  }
  func.func @transform_7(%arg0: i32) -> i32 {
    %c0_i32 = arith.constant 0 : i32
    %c0_i32_0 = arith.constant 0 : i32
    return %c0_i32 : i32
  }
  func.func @transform_8(%arg0: i32) -> i32 {
    %c0_i32 = arith.constant 0 : i32
    %c0_i32_0 = arith.constant 0 : i32
    return %c0_i32 : i32
  }
  func.func @transform_9(%arg0: i32) -> i32 {
    %c0_i32 = arith.constant 0 : i32
    %c0_i32_0 = arith.constant 0 : i32
    return %c0_i32 : i32
  }
  func.func @transform_10(%arg0: i32) -> i32 {
    %c0_i32 = arith.constant 0 : i32
    %c0_i32_0 = arith.constant 0 : i32
    return %c0_i32 : i32
  }
  func.func @transform_11(%arg0: i32) -> (i32, i32) {
    %c0_i32 = arith.constant 0 : i32
    %c0_i32_0 = arith.constant 0 : i32
    return %arg0, %c0_i32 : i32, i32
  }
}

</mosaic_0001>

<llo_original>
// kernel: tpu_custom_call.1
$region0: #{tpu_custom_call.1}
  #allocation0 [shape = 'u32[]', space=smem, size = 0x4, offset = 0x4, fixed_abs, tag = 'smem constant byte address 0x4 - core index']
  #allocation1 [shape = 'u32[144,128]{1,0:T(1,128)}', space=vmem, size = 0x12000, scoped, tag = 'internal scratch']
  #allocation2 [shape = 'f32[1]{0:T(128)S(6)}', space=smem, size = 0x200, scoped, tag = 'scoped memory for tpu_custom_call.1']
  %s0 = inlined_call_operand.vmem [shape: f32[128,8], index: 0, kind: input, shape index: {}]
  %s1 = inlined_call_operand.vmem [shape: f32[128,128], index: 1, kind: input, shape index: {}]
  %s2 = inlined_call_operand.vmem [shape: f32[128,128], index: 2, kind: input, shape index: {}]
  %s3 = inlined_call_operand.vmem [shape: f32[8,256], index: 3, kind: input, shape index: {}]
  %s4 = inlined_call_operand.vmem [shape: f32[1,256], index: 4, kind: input, shape index: {}]
  %s5 = inlined_call_operand.vmem [shape: f32[256,16], index: 5, kind: input, shape index: {}]
  %s6 = inlined_call_operand.vmem [shape: f32[1,16], index: 6, kind: input, shape index: {}]
  %s7 = inlined_call_operand.vmem [shape: f32[32], index: 7, kind: input, shape index: {}]
  %s8 = inlined_call_operand.vmem [shape: f32[32], index: 8, kind: input, shape index: {}]
  %s9 = inlined_call_operand.vmem [shape: f32[32], index: 9, kind: input, shape index: {}]
  %s10 = inlined_call_operand.<no memory space> [shape: f32[1], index: 10, kind: input, shape index: {}]
  %s11 = inlined_call_operand.vmem [shape: f32[128,16], index: 11, kind: output, shape index: {}]
  %s12 = sld [smem:[#allocation0]]
  $region89: #{tpu_custom_call.1} parent=0
    _
  %s14 = ssub.s32 1, %s12
  %s15 = scalar_select 0, %s14, %s12
  %16 = sst [smem:[#allocation2]] %s10
  $region1: #{tpu_custom_call.1} parent=0
    #allocation3 [shape = 'u8[512]{0}', space=smem, size = 0x200, scoped, tag = 'input window, operand 7, single buffered']
    #allocation4 [shape = 's32[2]{0}', space=sflag, size = 0x8, scoped, tag = 'scoped memory for tpu_custom_call.1']
    #allocation5 [shape = 'u8[512]{0}', space=smem, size = 0x200, scoped, tag = 'input window, operand 8, single buffered']
    #allocation6 [shape = 's32[1]{0}', space=sflag, size = 0x4, scoped, tag = 'scoped memory for tpu_custom_call.1']
    #allocation7 [shape = 'u8[512]{0}', space=smem, size = 0x200, scoped, tag = 'input window, operand 9, single buffered']
    %17 = vsyncpa [#allocation4], 0
    %18 = vsyncpa [#allocation6], 0
    loop: start=0, step=1, limit=4
    $region2: #{tpu_custom_call.1} parent=1 // loop_pre_header
      _
    $region3: #{tpu_custom_call.1} parent=1 // loop_header
      %s20 = sphi 0, %s24
      %p21 = scmp.ge.s32.totalorder %s20, 4
      %s28 = sphi 0, %s28
      %s30 = sphi 0, %s28
      %s31 = sphi 0, %s30
      %s45 = sphi 0, %s31
      %s51 = sphi 0, %s53
      %s54 = sphi 0, %s51
      %s55 = sphi 0, %s54
      %s71 = sphi 0, %s55
      %s77 = sphi 0, %s79
      %s80 = sphi 0, %s77
      %s81 = sphi 0, %s80
      %s97 = sphi 0, %s81
      %s101 = sphi 0, %s101
      %s103 = sphi 0, %s101
      %s104 = sphi 0, %s103
      %s118 = sphi 0, %s104
      %s122 = sphi 0, %s122
      %s124 = sphi 0, %s122
      %s125 = sphi 0, %s124
      %s139 = sphi 0, %s125
      %s143 = sphi 0, %s143
      %s145 = sphi 0, %s143
      %s146 = sphi 0, %s145
      %s160 = sphi 0, %s146
      %s164 = sphi 0, %s164
      %s166 = sphi 0, %s164
      %s167 = sphi 0, %s166
      %s181 = sphi 0, %s167
      %s185 = sphi 0, %s185
      %s187 = sphi 0, %s185
      %s188 = sphi 0, %s187
      %s202 = sphi 0, %s188
      %s206 = sphi 0, %s206
      %s208 = sphi 0, %s206
      %s209 = sphi 0, %s208
      %s223 = sphi 0, %s209
      %s227 = sphi 0, %s227
      %s229 = sphi 0, %s227
      %s230 = sphi 0, %s229
      %s244 = sphi 0, %s230
      %s248 = sphi 0, %s248
      %s250 = sphi 0, %s248
      %s251 = sphi 0, %s250
      %s265 = sphi 0, %s251
      %s271 = sphi 0, %s273
      %s274 = sphi 0, %s271
      %s275 = sphi 0, %s274
      %s291 = sphi 0, %s275
    $region4: #{tpu_custom_call.1} parent=1 // loop_header_branch
      %23 = sbr.rel (%p21) target = $region8
    $region5: #{tpu_custom_call.1} parent=1 // loop_body
      %s25 = ssub.s32 %s20, 1
      %s26 = ssub.s32 %s20, 2
      %s27 = sadd.s32 %s20, 1
      %s29 = sadd.s32 %s28, 1
      %p32 = scmp.eq.s32.totalorder %s20, 1
      %p33 = scmp.ne.s32.totalorder %s28, %s30
      %p34 = scmp.eq.s32.totalorder %s20, 0
      %p35 = por %p33, %p34
      %p36 = scmp.ne.s32.totalorder %s28, %s30
      %p37 = scmp.eq.s32.totalorder %s25, 1
      %p38 = por %p36, %p37
      %p39 = scmp.ne.s32.totalorder %s30, %s31
      %p40 = scmp.eq.s32.totalorder %s25, 0
      %p41 = por %p39, %p40
      %p42 = scmp.ne.s32.totalorder %s30, %s31
      %p43 = scmp.eq.s32.totalorder %s26, 1
      %p44 = por %p42, %p43
      %p46 = scmp.ne.s32.totalorder %s31, %s45
      %p47 = scmp.eq.s32.totalorder %s26, 0
      %p48 = por %p46, %p47
      %s49 = ssub.s32 %s20, %s27
      %p50 = scmp.eq.s32.totalorder %s49, 0
      %s52 = sadd.s32 %s51, 1
      %s53 = scalar_select %p50, %s51, %s52
      %p56 = pneg %p50
      %p57 = scmp.eq.s32.totalorder %s20, 1
      %p58 = por %p56, %p57
      %p59 = scmp.ne.s32.totalorder %s51, %s54
      %p60 = scmp.eq.s32.totalorder %s20, 0
      %p61 = por %p59, %p60
      %p62 = scmp.ne.s32.totalorder %s51, %s54
      %p63 = scmp.eq.s32.totalorder %s25, 1
      %p64 = por %p62, %p63
      %p65 = scmp.ne.s32.totalorder %s54, %s55
      %p66 = scmp.eq.s32.totalorder %s25, 0
      %p67 = por %p65, %p66
      %p68 = scmp.ne.s32.totalorder %s54, %s55
      %p69 = scmp.eq.s32.totalorder %s26, 1
      %p70 = por %p68, %p69
      %p72 = scmp.ne.s32.totalorder %s55, %s71
      %p73 = scmp.eq.s32.totalorder %s26, 0
      %p74 = por %p72, %p73
      %s75 = ssub.s32 %s20, %s27
      %p76 = scmp.eq.s32.totalorder %s75, 0
      %s78 = sadd.s32 %s77, 1
      %s79 = scalar_select %p76, %s77, %s78
      %p82 = pneg %p76
      %p83 = scmp.eq.s32.totalorder %s20, 1
      %p84 = por %p82, %p83
      %p85 = scmp.ne.s32.totalorder %s77, %s80
      %p86 = scmp.eq.s32.totalorder %s20, 0
      %p87 = por %p85, %p86
      %p88 = scmp.ne.s32.totalorder %s77, %s80
      %p89 = scmp.eq.s32.totalorder %s25, 1
      %p90 = por %p88, %p89
      %p91 = scmp.ne.s32.totalorder %s80, %s81
      %p92 = scmp.eq.s32.totalorder %s25, 0
      %p93 = por %p91, %p92
      %p94 = scmp.ne.s32.totalorder %s80, %s81
      %p95 = scmp.eq.s32.totalorder %s26, 1
      %p96 = por %p94, %p95
      %p98 = scmp.ne.s32.totalorder %s81, %s97
      %p99 = scmp.eq.s32.totalorder %s26, 0
      %p100 = por %p98, %p99
      %s102 = sadd.s32 %s101, 1
      %p105 = scmp.eq.s32.totalorder %s20, 1
      %p106 = scmp.ne.s32.totalorder %s101, %s103
      %p107 = scmp.eq.s32.totalorder %s20, 0
      %p108 = por %p106, %p107
      %p109 = scmp.ne.s32.totalorder %s101, %s103
      %p110 = scmp.eq.s32.totalorder %s25, 1
      %p111 = por %p109, %p110
      %p112 = scmp.ne.s32.totalorder %s103, %s104
      %p113 = scmp.eq.s32.totalorder %s25, 0
      %p114 = por %p112, %p113
      %p115 = scmp.ne.s32.totalorder %s103, %s104
      %p116 = scmp.eq.s32.totalorder %s26, 1
      %p117 = por %p115, %p116
      %p119 = scmp.ne.s32.totalorder %s104, %s118
      %p120 = scmp.eq.s32.totalorder %s26, 0
      %p121 = por %p119, %p120
      %s123 = sadd.s32 %s122, 1
      %p126 = scmp.eq.s32.totalorder %s20, 1
      %p127 = scmp.ne.s32.totalorder %s122, %s124
      %p128 = scmp.eq.s32.totalorder %s20, 0
      %p129 = por %p127, %p128
      %p130 = scmp.ne.s32.totalorder %s122, %s124
      %p131 = scmp.eq.s32.totalorder %s25, 1
      %p132 = por %p130, %p131
      %p133 = scmp.ne.s32.totalorder %s124, %s125
      %p134 = scmp.eq.s32.totalorder %s25, 0
      %p135 = por %p133, %p134
      %p136 = scmp.ne.s32.totalorder %s124, %s125
      %p137 = scmp.eq.s32.totalorder %s26, 1
      %p138 = por %p136, %p137
      %p140 = scmp.ne.s32.totalorder %s125, %s139
      %p141 = scmp.eq.s32.totalorder %s26, 0
      %p142 = por %p140, %p141
      %s144 = sadd.s32 %s143, 1
      %p147 = scmp.eq.s32.totalorder %s20, 1
      %p148 = scmp.ne.s32.totalorder %s143, %s145
      %p149 = scmp.eq.s32.totalorder %s20, 0
      %p150 = por %p148, %p149
      %p151 = scmp.ne.s32.totalorder %s143, %s145
      %p152 = scmp.eq.s32.totalorder %s25, 1
      %p153 = por %p151, %p152
      %p154 = scmp.ne.s32.totalorder %s145, %s146
      %p155 = scmp.eq.s32.totalorder %s25, 0
      %p156 = por %p154, %p155
      %p157 = scmp.ne.s32.totalorder %s145, %s146
      %p158 = scmp.eq.s32.totalorder %s26, 1
      %p159 = por %p157, %p158
      %p161 = scmp.ne.s32.totalorder %s146, %s160
      %p162 = scmp.eq.s32.totalorder %s26, 0
      %p163 = por %p161, %p162
      %s165 = sadd.s32 %s164, 1
      %p168 = scmp.eq.s32.totalorder %s20, 1
      %p169 = scmp.ne.s32.totalorder %s164, %s166
      %p170 = scmp.eq.s32.totalorder %s20, 0
      %p171 = por %p169, %p170
      %p172 = scmp.ne.s32.totalorder %s164, %s166
      %p173 = scmp.eq.s32.totalorder %s25, 1
      %p174 = por %p172, %p173
      %p175 = scmp.ne.s32.totalorder %s166, %s167
      %p176 = scmp.eq.s32.totalorder %s25, 0
      %p177 = por %p175, %p176
      %p178 = scmp.ne.s32.totalorder %s166, %s167
      %p179 = scmp.eq.s32.totalorder %s26, 1
      %p180 = por %p178, %p179
      %p182 = scmp.ne.s32.totalorder %s167, %s181
      %p183 = scmp.eq.s32.totalorder %s26, 0
      %p184 = por %p182, %p183
      %s186 = sadd.s32 %s185, 1
      %p189 = scmp.eq.s32.totalorder %s20, 1
      %p190 = scmp.ne.s32.totalorder %s185, %s187
      %p191 = scmp.eq.s32.totalorder %s20, 0
      %p192 = por %p190, %p191
      %p193 = scmp.ne.s32.totalorder %s185, %s187
      %p194 = scmp.eq.s32.totalorder %s25, 1
      %p195 = por %p193, %p194
      %p196 = scmp.ne.s32.totalorder %s187, %s188
      %p197 = scmp.eq.s32.totalorder %s25, 0
      %p198 = por %p196, %p197
      %p199 = scmp.ne.s32.totalorder %s187, %s188
      %p200 = scmp.eq.s32.totalorder %s26, 1
      %p201 = por %p199, %p200
      %p203 = scmp.ne.s32.totalorder %s188, %s202
      %p204 = scmp.eq.s32.totalorder %s26, 0
      %p205 = por %p203, %p204
      %s207 = sadd.s32 %s206, 1
      %p210 = scmp.eq.s32.totalorder %s20, 1
      %p211 = scmp.ne.s32.totalorder %s206, %s208
      %p212 = scmp.eq.s32.totalorder %s20, 0
      %p213 = por %p211, %p212
      %p214 = scmp.ne.s32.totalorder %s206, %s208
      %p215 = scmp.eq.s32.totalorder %s25, 1
      %p216 = por %p214, %p215
      %p217 = scmp.ne.s32.totalorder %s208, %s209
      %p218 = scmp.eq.s32.totalorder %s25, 0
      %p219 = por %p217, %p218
      %p220 = scmp.ne.s32.totalorder %s208, %s209
      %p221 = scmp.eq.s32.totalorder %s26, 1
      %p222 = por %p220, %p221
      %p224 = scmp.ne.s32.totalorder %s209, %s223
      %p225 = scmp.eq.s32.totalorder %s26, 0
      %p226 = por %p224, %p225
      %s228 = sadd.s32 %s227, 1
      %p231 = scmp.eq.s32.totalorder %s20, 1
      %p232 = scmp.ne.s32.totalorder %s227, %s229
      %p233 = scmp.eq.s32.totalorder %s20, 0
      %p234 = por %p232, %p233
      %p235 = scmp.ne.s32.totalorder %s227, %s229
      %p236 = scmp.eq.s32.totalorder %s25, 1
      %p237 = por %p235, %p236
      %p238 = scmp.ne.s32.totalorder %s229, %s230
      %p239 = scmp.eq.s32.totalorder %s25, 0
      %p240 = por %p238, %p239
      %p241 = scmp.ne.s32.totalorder %s229, %s230
      %p242 = scmp.eq.s32.totalorder %s26, 1
      %p243 = por %p241, %p242
      %p245 = scmp.ne.s32.totalorder %s230, %s244
      %p246 = scmp.eq.s32.totalorder %s26, 0
      %p247 = por %p245, %p246
      %s249 = sadd.s32 %s248, 1
      %p252 = scmp.eq.s32.totalorder %s20, 1
      %p253 = scmp.ne.s32.totalorder %s248, %s250
      %p254 = scmp.eq.s32.totalorder %s20, 0
      %p255 = por %p253, %p254
      %p256 = scmp.ne.s32.totalorder %s248, %s250
      %p257 = scmp.eq.s32.totalorder %s25, 1
      %p258 = por %p256, %p257
      %p259 = scmp.ne.s32.totalorder %s250, %s251
      %p260 = scmp.eq.s32.totalorder %s25, 0
      %p261 = por %p259, %p260
      %p262 = scmp.ne.s32.totalorder %s250, %s251
      %p263 = scmp.eq.s32.totalorder %s26, 1
      %p264 = por %p262, %p263
      %p266 = scmp.ne.s32.totalorder %s251, %s265
      %p267 = scmp.eq.s32.totalorder %s26, 0
      %p268 = por %p266, %p267
      %s269 = ssub.s32 %s20, %s27
      %p270 = scmp.eq.s32.totalorder %s269, 0
      %s272 = sadd.s32 %s271, 1
      %s273 = scalar_select %p270, %s271, %s272
      %p276 = pneg %p270
      %p277 = scmp.eq.s32.totalorder %s20, 1
      %p278 = por %p276, %p277
      %p279 = scmp.ne.s32.totalorder %s271, %s274
      %p280 = scmp.eq.s32.totalorder %s20, 0
      %p281 = por %p279, %p280
      %p282 = scmp.ne.s32.totalorder %s271, %s274
      %p283 = scmp.eq.s32.totalorder %s25, 1
      %p284 = por %p282, %p283
      %p285 = scmp.ne.s32.totalorder %s274, %s275
      %p286 = scmp.eq.s32.totalorder %s25, 0
      %p287 = por %p285, %p286
      %p288 = scmp.ne.s32.totalorder %s274, %s275
      %p289 = scmp.eq.s32.totalorder %s26, 1
      %p290 = por %p288, %p289
      %p292 = scmp.ne.s32.totalorder %s275, %s291
      %p293 = scmp.eq.s32.totalorder %s26, 0
      %p294 = por %p292, %p293
      %p295 = scmp.le.s32.totalorder 1, %s20
      %p296 = scmp.lt.s32.totalorder %s20, 3
      %p297 = pnand %p295, %p296
      %p298 = pneg %p297
      // Predicated region
      $region9: #{tpu_custom_call.1} parent=5 // pred_check
        _
      $region10: #{tpu_custom_call.1} parent=5 // pred_check_branch
        %300 = sbr.rel (%p297) target = $region12
      $region11: #{tpu_custom_call.1} parent=5 // pred_region
        %s301 = ssub.s32 %s20, 1
        // Predicated region
        $region13: #{tpu_custom_call.1} parent=11 // pred_check
          %p302 = pneg %p41
        $region14: #{tpu_custom_call.1} parent=11 // pred_check_branch
          %304 = sbr.rel (%p302) target = $region16
        $region15: #{tpu_custom_call.1} parent=11 // pred_region
          _
        $region16: #{tpu_custom_call.1} parent=11 // pred_fallthru
          _
        // Predicated region
        $region17: #{tpu_custom_call.1} parent=11 // pred_check
          %p305 = pneg %p114
        $region18: #{tpu_custom_call.1} parent=11 // pred_check_branch
          %307 = sbr.rel (%p305) target = $region20
        $region19: #{tpu_custom_call.1} parent=11 // pred_region
          _
        $region20: #{tpu_custom_call.1} parent=11 // pred_fallthru
          _
        // Predicated region
        $region21: #{tpu_custom_call.1} parent=11 // pred_check
          %p308 = pneg %p135
        $region22: #{tpu_custom_call.1} parent=11 // pred_check_branch
          %310 = sbr.rel (%p308) target = $region24
        $region23: #{tpu_custom_call.1} parent=11 // pred_region
          _
        $region24: #{tpu_custom_call.1} parent=11 // pred_fallthru
          _
        // Predicated region
        $region25: #{tpu_custom_call.1} parent=11 // pred_check
          %p311 = pneg %p156
        $region26: #{tpu_custom_call.1} parent=11 // pred_check_branch
          %313 = sbr.rel (%p311) target = $region28
        $region27: #{tpu_custom_call.1} parent=11 // pred_region
          _
        $region28: #{tpu_custom_call.1} parent=11 // pred_fallthru
          _
        // Predicated region
        $region29: #{tpu_custom_call.1} parent=11 // pred_check
          %p314 = pneg %p177
        $region30: #{tpu_custom_call.1} parent=11 // pred_check_branch
          %316 = sbr.rel (%p314) target = $region32
        $region31: #{tpu_custom_call.1} parent=11 // pred_region
          _
        $region32: #{tpu_custom_call.1} parent=11 // pred_fallthru
          _
        // Predicated region
        $region33: #{tpu_custom_call.1} parent=11 // pred_check
          %p317 = pneg %p198
        $region34: #{tpu_custom_call.1} parent=11 // pred_check_branch
          %319 = sbr.rel (%p317) target = $region36
        $region35: #{tpu_custom_call.1} parent=11 // pred_region
          %s321 = ssub.s32 16, 16
          %322 = vsyncadd [#allocation4], %s321
          %s324 = sshll.u32 %s7, 4
          %s325 = int_to_ptr.vmem [resolvable:$true] %s324
          %327 = dma.vmem_to_smem %s325, 16, [#allocation3], [#allocation4]
        $region36: #{tpu_custom_call.1} parent=11 // pred_fallthru
          _
        // Predicated region
        $region37: #{tpu_custom_call.1} parent=11 // pred_check
          %p328 = pneg %p219
        $region38: #{tpu_custom_call.1} parent=11 // pred_check_branch
          %330 = sbr.rel (%p328) target = $region40
        $region39: #{tpu_custom_call.1} parent=11 // pred_region
          %s332 = ssub.s32 16, 16
          %333 = vsyncadd [#allocation6], %s332
          %s335 = sshll.u32 %s8, 4
          %s336 = int_to_ptr.vmem [resolvable:$true] %s335
          %338 = dma.vmem_to_smem %s336, 16, [#allocation5], [#allocation6]
        $region40: #{tpu_custom_call.1} parent=11 // pred_fallthru
          _
        // Predicated region
        $region41: #{tpu_custom_call.1} parent=11 // pred_check
          %p339 = pneg %p240
        $region42: #{tpu_custom_call.1} parent=11 // pred_check_branch
          %341 = sbr.rel (%p339) target = $region44
        $region43: #{tpu_custom_call.1} parent=11 // pred_region
          %s343 = ssub.s32 16, 16
          %344 = vsyncadd [#allocation6], %s343
          %s346 = sshll.u32 %s9, 4
          %s347 = int_to_ptr.vmem [resolvable:$true] %s346
          %349 = dma.vmem_to_smem %s347, 16, [#allocation7], [#allocation6]
        $region44: #{tpu_custom_call.1} parent=11 // pred_fallthru
          _
        // Predicated region
        $region45: #{tpu_custom_call.1} parent=11 // pred_check
          %p350 = pneg %p261
        $region46: #{tpu_custom_call.1} parent=11 // pred_check_branch
          %352 = sbr.rel (%p350) target = $region48
        $region47: #{tpu_custom_call.1} parent=11 // pred_region
          _
        $region48: #{tpu_custom_call.1} parent=11 // pred_fallthru
          _
      $region12: #{tpu_custom_call.1} parent=5 // pred_fallthru
        _
      %p353 = scmp.lt.s32.totalorder %s20, 2
      // Predicated region
      $region49: #{tpu_custom_call.1} parent=5 // pred_check
        %p354 = pneg %p353
      $region50: #{tpu_custom_call.1} parent=5 // pred_check_branch
        %356 = sbr.rel (%p354) target = $region52
      $region51: #{tpu_custom_call.1} parent=5 // pred_region
        // Predicated region
        $region53: #{tpu_custom_call.1} parent=51 // pred_check
          %p357 = pneg %p61
        $region54: #{tpu_custom_call.1} parent=51 // pred_check_branch
          %359 = sbr.rel (%p357) target = $region56
        $region55: #{tpu_custom_call.1} parent=51 // pred_region
          %s360 = smul.u32 8, %s20
          %p361 = scmp.lt.s32.totalorder %s360, 15
          %s362 = scalar_select %p361, %s360, 15
          %s363 = smul.addr %s362, 8
          %s364 = scalar_lea.vmem %s1, %s363
          %s365 = smul.u32 8, %s20
        $region56: #{tpu_custom_call.1} parent=51 // pred_fallthru
          _
        // Predicated region
        $region57: #{tpu_custom_call.1} parent=51 // pred_check
          %p366 = pneg %p87
        $region58: #{tpu_custom_call.1} parent=51 // pred_check_branch
          %368 = sbr.rel (%p366) target = $region60
        $region59: #{tpu_custom_call.1} parent=51 // pred_region
          %s369 = smul.u32 8, %s20
          %p370 = scmp.lt.s32.totalorder %s369, 15
          %s371 = scalar_select %p370, %s369, 15
          %s372 = smul.addr %s371, 8
          %s373 = scalar_lea.vmem %s2, %s372
          %s374 = smul.u32 8, %s20
        $region60: #{tpu_custom_call.1} parent=51 // pred_fallthru
          _
      $region52: #{tpu_custom_call.1} parent=5 // pred_fallthru
        _
      %p375 = scmp.le.s32.totalorder 1, %s20
      %p376 = scmp.lt.s32.totalorder %s20, 3
      %p377 = pnand %p375, %p376
      %p378 = pneg %p377
      // Predicated region
      $region61: #{tpu_custom_call.1} parent=5 // pred_check
        _
      $region62: #{tpu_custom_call.1} parent=5 // pred_check_branch
        %380 = sbr.rel (%p377) target = $region64
      $region63: #{tpu_custom_call.1} parent=5 // pred_region
        %s381 = ssub.s32 %s20, 1
        // Predicated region
        $region65: #{tpu_custom_call.1} parent=63 // pred_check
          %p382 = pneg %p198
        $region66: #{tpu_custom_call.1} parent=63 // pred_check_branch
          %384 = sbr.rel (%p382) target = $region68
        $region67: #{tpu_custom_call.1} parent=63 // pred_region
          %385 = dma.done [#allocation4], 16
        $region68: #{tpu_custom_call.1} parent=63 // pred_fallthru
          _
        // Predicated region
        $region69: #{tpu_custom_call.1} parent=63 // pred_check
          %p386 = pneg %p219
        $region70: #{tpu_custom_call.1} parent=63 // pred_check_branch
          %388 = sbr.rel (%p386) target = $region72
        $region71: #{tpu_custom_call.1} parent=63 // pred_region
          %389 = dma.done [#allocation6], 16
        $region72: #{tpu_custom_call.1} parent=63 // pred_fallthru
          _
        // Predicated region
        $region73: #{tpu_custom_call.1} parent=63 // pred_check
          %p390 = pneg %p240
        $region74: #{tpu_custom_call.1} parent=63 // pred_check_branch
          %392 = sbr.rel (%p390) target = $region76
        $region75: #{tpu_custom_call.1} parent=63 // pred_region
          %393 = dma.done [#allocation6], 16
        $region76: #{tpu_custom_call.1} parent=63 // pred_fallthru
          _
        %394 = sfence
        %p395 = pneg %p41
        %p396 = pneg %p38
        %s397 = smul.u32 8, %s25
        %p398 = scmp.lt.s32.totalorder %s397, 15
        %s399 = scalar_select %p398, %s397, 15
        %s400 = smul.addr %s399, 8
        %s401 = scalar_lea.vmem %s1, %s400
        %p402 = pneg %p67
        %p403 = pneg %p64
        %s404 = smul.u32 8, %s25
        %p405 = scmp.lt.s32.totalorder %s404, 15
        %s406 = scalar_select %p405, %s404, 15
        %s407 = smul.addr %s406, 8
        %s408 = scalar_lea.vmem %s2, %s407
        %p409 = pneg %p93
        %p410 = pneg %p90
        %p411 = pneg %p114
        %p412 = pneg %p111
        %p413 = pneg %p135
        %p414 = pneg %p132
        %p415 = pneg %p156
        %p416 = pneg %p153
        %p417 = pneg %p177
        %p418 = pneg %p174
        %p419 = pneg %p198
        %p420 = pneg %p195
        %p421 = pneg %p219
        %p422 = pneg %p216
        %p423 = pneg %p240
        %p424 = pneg %p237
        %p425 = pneg %p261
        %p426 = pneg %p258
        %p427 = pneg %p287
        %p428 = pneg %p284
        %s429 = smul.u32 8, %s25
        %p430 = scmp.lt.s32.totalorder %s429, 15
        %s431 = scalar_select %p430, %s429, 15
        %s432 = smul.addr %s431, 8
        %s433 = scalar_lea.vmem %s11, %s432
        %s434 = smul.u32 8, %s25
        %p435 = scmp.lt.s32.totalorder %s434, 15
        %s436 = scalar_select %p435, %s434, 15
        %s437 = smul.addr %s436, 8
        %s438 = scalar_lea.vmem %s1, %s437
        %s439 = smul.u32 8, %s25
        %s440 = smul.u32 8, %s25
        %p441 = scmp.lt.s32.totalorder %s440, 15
        %s442 = scalar_select %p441, %s440, 15
        %s443 = smul.addr %s442, 8
        %s444 = scalar_lea.vmem %s2, %s443
        %s445 = smul.u32 8, %s25
        %s446 = smul.u32 8, %s25
        %p447 = scmp.lt.s32.totalorder %s446, 15
        %s448 = scalar_select %p447, %s446, 15
        %s449 = smul.addr %s448, 8
        %s450 = scalar_lea.vmem %s11, %s449
        %s451 = smul.u32 8, %s25
        %v452 = vld [vmem:[%s0] sm:$0xff]
        %v453 = vld [vmem:[%s0 + $0x8] sm:$0xff]
        %v454 = vld [vmem:[%s0 + $0x10] sm:$0xff]
        %v455 = vld [vmem:[%s0 + $0x18] sm:$0xff]
        %v456 = vld [vmem:[%s0 + $0x20] sm:$0xff]
        %v457 = vld [vmem:[%s0 + $0x28] sm:$0xff]
        %v458 = vld [vmem:[%s0 + $0x30] sm:$0xff]
        %v459 = vld [vmem:[%s0 + $0x38] sm:$0xff]
        %v460 = vld [vmem:[%s0 + $0x40] sm:$0xff]
        %v461 = vld [vmem:[%s0 + $0x48] sm:$0xff]
        %v462 = vld [vmem:[%s0 + $0x50] sm:$0xff]
        %v463 = vld [vmem:[%s0 + $0x58] sm:$0xff]
        %v464 = vld [vmem:[%s0 + $0x60] sm:$0xff]
        %v465 = vld [vmem:[%s0 + $0x68] sm:$0xff]
        %v466 = vld [vmem:[%s0 + $0x70] sm:$0xff]
        %v467 = vld [vmem:[%s0 + $0x78] sm:$0xff]
        %v468 = vld [vmem:[%s3] sm:$0xff]
        %v469 = vld [vmem:[%s3 + $0x8] sm:$0xff]
        %v470 = vld [vmem:[%s4] sm:$0x3]
        %v472 = vlaneseq
        %v473 = vshrl.u32 %v472, 7
        %v474 = vsub.s32 0, %v473
        %v475 = vrot.slane %v470, %v474
        %v476 = vlaneseq
        %v477 = vshrl.u32 %v476, 7
        %v478 = vsub.s32 1, %v477
        %v479 = vrot.slane %v470, %v478
        %vm482 = vcmask 64512
        %v484 = vsel %vm482, %v452, 0
        %v487 = vsel %vm482, %v453, 0
        %v490 = vsel %vm482, %v454, 0
        %v493 = vsel %vm482, %v455, 0
        %v496 = vsel %vm482, %v456, 0
        %v499 = vsel %vm482, %v457, 0
        %v502 = vsel %vm482, %v458, 0
        %v505 = vsel %vm482, %v459, 0
        %v508 = vsel %vm482, %v460, 0
        %v511 = vsel %vm482, %v461, 0
        %v514 = vsel %vm482, %v462, 0
        %v517 = vsel %vm482, %v463, 0
        %v520 = vsel %vm482, %v464, 0
        %v523 = vsel %vm482, %v465, 0
        %v526 = vsel %vm482, %v466, 0
        %v529 = vsel %vm482, %v467, 0
        %531 = vmatprep.subr.mxu0 %v469
        %532 = vmatpush1.msra.mxu0 %v468
        %533 = vmatprep.subr.mxu0 0.0
        %534 = vmatpush1.msra.mxu0 0.0
        %535 = vmatprep.subr.mxu0 0.0
        %536 = vmatpush1.msra.mxu0 0.0
        %537 = vmatprep.subr.mxu0 0.0
        %538 = vmatpush1.msra.mxu0 0.0
        %539 = vmatprep.subr.mxu0 0.0
        %540 = vmatpush1.msra.mxu0 0.0
        %541 = vmatprep.subr.mxu0 0.0
        %542 = vmatpush1.msra.mxu0 0.0
        %543 = vmatprep.subr.mxu0 0.0
        %544 = vmatpush1.msra.mxu0 0.0
        %545 = vmatprep.subr.mxu0 0.0
        %546 = vmatpush1.msra.mxu0 0.0
        %547 = vmatprep.subr.mxu0 0.0
        %548 = vmatpush1.msra.mxu0 0.0
        %549 = vmatprep.subr.mxu0 0.0
        %550 = vmatpush1.msra.mxu0 0.0
        %551 = vmatprep.subr.mxu0 0.0
        %552 = vmatpush1.msra.mxu0 0.0
        %553 = vmatprep.subr.mxu0 0.0
        %554 = vmatpush1.msra.mxu0 0.0
        %555 = vmatprep.subr.mxu0 0.0
        %556 = vmatpush1.msra.mxu0 0.0
        %557 = vmatprep.subr.mxu0 0.0
        %558 = vmatpush1.msra.mxu0 0.0
        %559 = vmatprep.subr.mxu0 0.0
        %560 = vmatpush1.msra.mxu0 0.0
        %561 = vmatprep.subr.mxu0 0.0
        %562 = vmatpush1.msra.mxu0 0.0
        %563 = vmatprep.subr.mxu0 0.0
        %564 = vmatpush1.msra.mxu0 0.0
        %565 = vmatprep.subr.mxu0 0.0
        %566 = vmatpush1.msra.mxu0 0.0
        %567 = vmatprep.subr.mxu0 0.0
        %568 = vmatpush1.msra.mxu0 0.0
        %569 = vmatprep.subr.mxu0 0.0
        %570 = vmatpush1.msra.mxu0 0.0
        %571 = vmatprep.subr.mxu0 0.0
        %572 = vmatpush1.msra.mxu0 0.0
        %573 = vmatprep.subr.mxu0 0.0
        %574 = vmatpush1.msra.mxu0 0.0
        %575 = vmatprep.subr.mxu0 0.0
        %576 = vmatpush1.msra.mxu0 0.0
        %577 = vmatprep.subr.mxu0 0.0
        %578 = vmatpush1.msra.mxu0 0.0
        %579 = vmatprep.subr.mxu0 0.0
        %580 = vmatpush1.msra.mxu0 0.0
        %581 = vmatprep.subr.mxu0 0.0
        %582 = vmatpush1.msra.mxu0 0.0
        %583 = vmatprep.subr.mxu0 0.0
        %584 = vmatpush1.msra.mxu0 0.0
        %585 = vmatprep.subr.mxu0 0.0
        %586 = vmatpush1.msra.mxu0 0.0
        %587 = vmatprep.subr.mxu0 0.0
        %588 = vmatpush1.msra.mxu0 0.0
        %589 = vmatprep.subr.mxu0 0.0
        %590 = vmatpush1.msra.mxu0 0.0
        %591 = vmatprep.subr.mxu0 0.0
        %592 = vmatpush1.msra.mxu0 0.0
        %593 = vmatprep.subr.mxu0 0.0
        %594 = vmatpush1.msra.mxu0 0.0
        %595 = vmatprep.mubr.f32.mxu0 0.0
        %596 = vmatmul.mubr.f32.gmra.mrb[0].mxu0 %v484
        %v597 = vpop.f32.mrb[0].mxu0
        %v598 = vadd.f32 %v475, %v597
        %v599 = vpop.f32.mrb[0].mxu0
        %v600 = vadd.f32 %v479, %v599
        %601 = vmatprep.mubr.f32.mxu0 0.0
        %602 = vmatmul.mubr.f32.gmra.mrb[0].mxu0 %v487
        %v603 = vpop.f32.mrb[0].mxu0
        %v604 = vadd.f32 %v475, %v603
        %v605 = vpop.f32.mrb[0].mxu0
        %v606 = vadd.f32 %v479, %v605
        %607 = vmatprep.mubr.f32.mxu0 0.0
        %608 = vmatmul.mubr.f32.gmra.mrb[0].mxu0 %v490
        %v609 = vpop.f32.mrb[0].mxu0
        %v610 = vadd.f32 %v475, %v609
        %v611 = vpop.f32.mrb[0].mxu0
        %v612 = vadd.f32 %v479, %v611
        %613 = vmatprep.mubr.f32.mxu0 0.0
        %614 = vmatmul.mubr.f32.gmra.mrb[0].mxu0 %v493
        %v615 = vpop.f32.mrb[0].mxu0
        %v616 = vadd.f32 %v475, %v615
        %v617 = vpop.f32.mrb[0].mxu0
        %v618 = vadd.f32 %v479, %v617
        %619 = vmatprep.mubr.f32.mxu0 0.0
        %620 = vmatmul.mubr.f32.gmra.mrb[0].mxu0 %v496
        %v621 = vpop.f32.mrb[0].mxu0
        %v622 = vadd.f32 %v475, %v621
        %v623 = vpop.f32.mrb[0].mxu0
        %v624 = vadd.f32 %v479, %v623
        %625 = vmatprep.mubr.f32.mxu0 0.0
        %626 = vmatmul.mubr.f32.gmra.mrb[0].mxu0 %v499
        %v627 = vpop.f32.mrb[0].mxu0
        %v628 = vadd.f32 %v475, %v627
        %v629 = vpop.f32.mrb[0].mxu0
        %v630 = vadd.f32 %v479, %v629
        %631 = vmatprep.mubr.f32.mxu0 0.0
        %632 = vmatmul.mubr.f32.gmra.mrb[0].mxu0 %v502
        %v633 = vpop.f32.mrb[0].mxu0
        %v634 = vadd.f32 %v475, %v633
        %v635 = vpop.f32.mrb[0].mxu0
        %v636 = vadd.f32 %v479, %v635
        %637 = vmatprep.mubr.f32.mxu0 0.0
        %638 = vmatmul.mubr.f32.gmra.mrb[0].mxu0 %v505
        %v639 = vpop.f32.mrb[0].mxu0
        %v640 = vadd.f32 %v475, %v639
        %v641 = vpop.f32.mrb[0].mxu0
        %v642 = vadd.f32 %v479, %v641
        %643 = vmatprep.mubr.f32.mxu0 0.0
        %644 = vmatmul.mubr.f32.gmra.mrb[0].mxu0 %v508
        %v645 = vpop.f32.mrb[0].mxu0
        %v646 = vadd.f32 %v475, %v645
        %v647 = vpop.f32.mrb[0].mxu0
        %v648 = vadd.f32 %v479, %v647
        %649 = vmatprep.mubr.f32.mxu0 0.0
        %650 = vmatmul.mubr.f32.gmra.mrb[0].mxu0 %v511
        %v651 = vpop.f32.mrb[0].mxu0
        %v652 = vadd.f32 %v475, %v651
        %v653 = vpop.f32.mrb[0].mxu0
        %v654 = vadd.f32 %v479, %v653
        %655 = vmatprep.mubr.f32.mxu0 0.0
        %656 = vmatmul.mubr.f32.gmra.mrb[0].mxu0 %v514
        %v657 = vpop.f32.mrb[0].mxu0
        %v658 = vadd.f32 %v475, %v657
        %v659 = vpop.f32.mrb[0].mxu0
        %v660 = vadd.f32 %v479, %v659
        %661 = vmatprep.mubr.f32.mxu0 0.0
        %662 = vmatmul.mubr.f32.gmra.mrb[0].mxu0 %v517
        %v663 = vpop.f32.mrb[0].mxu0
        %v664 = vadd.f32 %v475, %v663
        %v665 = vpop.f32.mrb[0].mxu0
        %v666 = vadd.f32 %v479, %v665
        %667 = vmatprep.mubr.f32.mxu0 0.0
        %668 = vmatmul.mubr.f32.gmra.mrb[0].mxu0 %v520
        %v669 = vpop.f32.mrb[0].mxu0
        %v670 = vadd.f32 %v475, %v669
        %v671 = vpop.f32.mrb[0].mxu0
        %v672 = vadd.f32 %v479, %v671
        %673 = vmatprep.mubr.f32.mxu0 0.0
        %674 = vmatmul.mubr.f32.gmra.mrb[0].mxu0 %v523
        %v675 = vpop.f32.mrb[0].mxu0
        %v676 = vadd.f32 %v475, %v675
        %v677 = vpop.f32.mrb[0].mxu0
        %v678 = vadd.f32 %v479, %v677
        %679 = vmatprep.mubr.f32.mxu0 0.0
        %680 = vmatmul.mubr.f32.gmra.mrb[0].mxu0 %v526
        %v681 = vpop.f32.mrb[0].mxu0
        %v682 = vadd.f32 %v475, %v681
        %v683 = vpop.f32.mrb[0].mxu0
        %v684 = vadd.f32 %v479, %v683
        %685 = vmatprep.mubr.f32.mxu0 0.0
        %686 = vmatmul.mubr.f32.gmra.mrb[0].mxu0 %v529
        %v687 = vpop.f32.mrb[0].mxu0
        %v688 = vadd.f32 %v475, %v687
        %v689 = vpop.f32.mrb[0].mxu0
        %v690 = vadd.f32 %v479, %v689
        %691 = vdwg.mxu0
        %v692 = vmax.f32 %v598, 0.0
        %v693 = vmax.f32 %v600, 0.0
        %v694 = vmax.f32 %v604, 0.0
        %v695 = vmax.f32 %v606, 0.0
        %v696 = vmax.f32 %v610, 0.0
        %v697 = vmax.f32 %v612, 0.0
        %v698 = vmax.f32 %v616, 0.0
        %v699 = vmax.f32 %v618, 0.0
        %v700 = vmax.f32 %v622, 0.0
        %v701 = vmax.f32 %v624, 0.0
        %v702 = vmax.f32 %v628, 0.0
        %v703 = vmax.f32 %v630, 0.0
        %v704 = vmax.f32 %v634, 0.0
        %v705 = vmax.f32 %v636, 0.0
        %v706 = vmax.f32 %v640, 0.0
        %v707 = vmax.f32 %v642, 0.0
        %v708 = vmax.f32 %v646, 0.0
        %v709 = vmax.f32 %v648, 0.0
        %v710 = vmax.f32 %v652, 0.0
        %v711 = vmax.f32 %v654, 0.0
        %v712 = vmax.f32 %v658, 0.0
        %v713 = vmax.f32 %v660, 0.0
        %v714 = vmax.f32 %v664, 0.0
        %v715 = vmax.f32 %v666, 0.0
        %v716 = vmax.f32 %v670, 0.0
        %v717 = vmax.f32 %v672, 0.0
        %v718 = vmax.f32 %v676, 0.0
        %v719 = vmax.f32 %v678, 0.0
        %v720 = vmax.f32 %v682, 0.0
        %v721 = vmax.f32 %v684, 0.0
        %v722 = vmax.f32 %v688, 0.0
        %v723 = vmax.f32 %v690, 0.0
        %v724 = vld [vmem:[%s5] sm:$0xff]
        %v725 = vld [vmem:[%s5 + $0x8] sm:$0xff]
        %v726 = vld [vmem:[%s5 + $0x10] sm:$0xff]
        %v727 = vld [vmem:[%s5 + $0x18] sm:$0xff]
        %v728 = vld [vmem:[%s5 + $0x20] sm:$0xff]
        %v729 = vld [vmem:[%s5 + $0x28] sm:$0xff]
        %v730 = vld [vmem:[%s5 + $0x30] sm:$0xff]
        %v731 = vld [vmem:[%s5 + $0x38] sm:$0xff]
        %v732 = vld [vmem:[%s5 + $0x40] sm:$0xff]
        %v733 = vld [vmem:[%s5 + $0x48] sm:$0xff]
        %v734 = vld [vmem:[%s5 + $0x50] sm:$0xff]
        %v735 = vld [vmem:[%s5 + $0x58] sm:$0xff]
        %v736 = vld [vmem:[%s5 + $0x60] sm:$0xff]
        %v737 = vld [vmem:[%s5 + $0x68] sm:$0xff]
        %v738 = vld [vmem:[%s5 + $0x70] sm:$0xff]
        %v739 = vld [vmem:[%s5 + $0x78] sm:$0xff]
        %v740 = vld [vmem:[%s5 + $0x80] sm:$0xff]
        %v741 = vld [vmem:[%s5 + $0x88] sm:$0xff]
        %v742 = vld [vmem:[%s5 + $0x90] sm:$0xff]
        %v743 = vld [vmem:[%s5 + $0x98] sm:$0xff]
        %v744 = vld [vmem:[%s5 + $0xa0] sm:$0xff]
        %v745 = vld [vmem:[%s5 + $0xa8] sm:$0xff]
        %v746 = vld [vmem:[%s5 + $0xb0] sm:$0xff]
        %v747 = vld [vmem:[%s5 + $0xb8] sm:$0xff]
        %v748 = vld [vmem:[%s5 + $0xc0] sm:$0xff]
        %v749 = vld [vmem:[%s5 + $0xc8] sm:$0xff]
        %v750 = vld [vmem:[%s5 + $0xd0] sm:$0xff]
        %v751 = vld [vmem:[%s5 + $0xd8] sm:$0xff]
        %v752 = vld [vmem:[%s5 + $0xe0] sm:$0xff]
        %v753 = vld [vmem:[%s5 + $0xe8] sm:$0xff]
        %v754 = vld [vmem:[%s5 + $0xf0] sm:$0xff]
        %v755 = vld [vmem:[%s5 + $0xf8] sm:$0xff]
        %v756 = vld [vmem:[%s6] sm:$0x1]
        %v758 = vlaneseq
        %v759 = vshrl.u32 %v758, 7
        %v760 = vsub.s32 0, %v759
        %v761 = vrot.slane %v756, %v760
        %763 = vmatprep.subr.mxu0 0.0
        %764 = vmatpush1.msra.mxu0 %v724
        %765 = vmatprep.subr.mxu0 0.0
        %766 = vmatpush1.msra.mxu0 %v725
        %767 = vmatprep.subr.mxu0 0.0
        %768 = vmatpush1.msra.mxu0 %v726
        %769 = vmatprep.subr.mxu0 0.0
        %770 = vmatpush1.msra.mxu0 %v727
        %771 = vmatprep.subr.mxu0 0.0
        %772 = vmatpush1.msra.mxu0 %v728
        %773 = vmatprep.subr.mxu0 0.0
        %774 = vmatpush1.msra.mxu0 %v729
        %775 = vmatprep.subr.mxu0 0.0
        %776 = vmatpush1.msra.mxu0 %v730
        %777 = vmatprep.subr.mxu0 0.0
        %778 = vmatpush1.msra.mxu0 %v731
        %779 = vmatprep.subr.mxu0 0.0
        %780 = vmatpush1.msra.mxu0 %v732
        %781 = vmatprep.subr.mxu0 0.0
        %782 = vmatpush1.msra.mxu0 %v733
        %783 = vmatprep.subr.mxu0 0.0
        %784 = vmatpush1.msra.mxu0 %v734
        %785 = vmatprep.subr.mxu0 0.0
        %786 = vmatpush1.msra.mxu0 %v735
        %787 = vmatprep.subr.mxu0 0.0
        %788 = vmatpush1.msra.mxu0 %v736
        %789 = vmatprep.subr.mxu0 0.0
        %790 = vmatpush1.msra.mxu0 %v737
        %791 = vmatprep.subr.mxu0 0.0
        %792 = vmatpush1.msra.mxu0 %v738
        %793 = vmatprep.subr.mxu0 0.0
        %794 = vmatpush1.msra.mxu0 %v739
        %795 = vmatprep.subr.mxu0 0.0
        %796 = vmatpush1.msra.mxu0 %v740
        %797 = vmatprep.subr.mxu0 0.0
        %798 = vmatpush1.msra.mxu0 %v741
        %799 = vmatprep.subr.mxu0 0.0
        %800 = vmatpush1.msra.mxu0 %v742
        %801 = vmatprep.subr.mxu0 0.0
        %802 = vmatpush1.msra.mxu0 %v743
        %803 = vmatprep.subr.mxu0 0.0
        %804 = vmatpush1.msra.mxu0 %v744
        %805 = vmatprep.subr.mxu0 0.0
        %806 = vmatpush1.msra.mxu0 %v745
        %807 = vmatprep.subr.mxu0 0.0
        %808 = vmatpush1.msra.mxu0 %v746
        %809 = vmatprep.subr.mxu0 0.0
        %810 = vmatpush1.msra.mxu0 %v747
        %811 = vmatprep.subr.mxu0 0.0
        %812 = vmatpush1.msra.mxu0 %v748
        %813 = vmatprep.subr.mxu0 0.0
        %814 = vmatpush1.msra.mxu0 %v749
        %815 = vmatprep.subr.mxu0 0.0
        %816 = vmatpush1.msra.mxu0 %v750
        %817 = vmatprep.subr.mxu0 0.0
        %818 = vmatpush1.msra.mxu0 %v751
        %819 = vmatprep.subr.mxu0 0.0
        %820 = vmatpush1.msra.mxu0 %v752
        %821 = vmatprep.subr.mxu0 0.0
        %822 = vmatpush1.msra.mxu0 %v753
        %823 = vmatprep.subr.mxu0 0.0
        %824 = vmatpush1.msra.mxu0 %v754
        %825 = vmatprep.subr.mxu0 0.0
        %826 = vmatpush1.msra.mxu0 %v755
        %827 = vmatprep.mubr.f32.mxu0 %v693
        %828 = vmatmul.mubr.f32.gmra.mrb[0].mxu0 %v692
        %v829 = vpop.f32.mrb[0].mxu0
        %v830 = vadd.f32 %v761, %v829
        %v831 = vpop.f32.mrb[0].mxu0
        %832 = vmatprep.mubr.f32.mxu0 %v695
        %833 = vmatmul.mubr.f32.gmra.mrb[0].mxu0 %v694
        %v834 = vpop.f32.mrb[0].mxu0
        %v835 = vadd.f32 %v761, %v834
        %v836 = vpop.f32.mrb[0].mxu0
        %837 = vmatprep.mubr.f32.mxu0 %v697
        %838 = vmatmul.mubr.f32.gmra.mrb[0].mxu0 %v696
        %v839 = vpop.f32.mrb[0].mxu0
        %v840 = vadd.f32 %v761, %v839
        %v841 = vpop.f32.mrb[0].mxu0
        %842 = vmatprep.mubr.f32.mxu0 %v699
        %843 = vmatmul.mubr.f32.gmra.mrb[0].mxu0 %v698
        %v844 = vpop.f32.mrb[0].mxu0
        %v845 = vadd.f32 %v761, %v844
        %v846 = vpop.f32.mrb[0].mxu0
        %847 = vmatprep.mubr.f32.mxu0 %v701
        %848 = vmatmul.mubr.f32.gmra.mrb[0].mxu0 %v700
        %v849 = vpop.f32.mrb[0].mxu0
        %v850 = vadd.f32 %v761, %v849
        %v851 = vpop.f32.mrb[0].mxu0
        %852 = vmatprep.mubr.f32.mxu0 %v703
        %853 = vmatmul.mubr.f32.gmra.mrb[0].mxu0 %v702
        %v854 = vpop.f32.mrb[0].mxu0
        %v855 = vadd.f32 %v761, %v854
        %v856 = vpop.f32.mrb[0].mxu0
        %857 = vmatprep.mubr.f32.mxu0 %v705
        %858 = vmatmul.mubr.f32.gmra.mrb[0].mxu0 %v704
        %v859 = vpop.f32.mrb[0].mxu0
        %v860 = vadd.f32 %v761, %v859
        %v861 = vpop.f32.mrb[0].mxu0
        %862 = vmatprep.mubr.f32.mxu0 %v707
        %863 = vmatmul.mubr.f32.gmra.mrb[0].mxu0 %v706
        %v864 = vpop.f32.mrb[0].mxu0
        %v865 = vadd.f32 %v761, %v864
        %v866 = vpop.f32.mrb[0].mxu0
        %867 = vmatprep.mubr.f32.mxu0 %v709
        %868 = vmatmul.mubr.f32.gmra.mrb[0].mxu0 %v708
        %v869 = vpop.f32.mrb[0].mxu0
        %v870 = vadd.f32 %v761, %v869
        %v871 = vpop.f32.mrb[0].mxu0
        %872 = vmatprep.mubr.f32.mxu0 %v711
        %873 = vmatmul.mubr.f32.gmra.mrb[0].mxu0 %v710
        %v874 = vpop.f32.mrb[0].mxu0
        %v875 = vadd.f32 %v761, %v874
        %v876 = vpop.f32.mrb[0].mxu0
        %877 = vmatprep.mubr.f32.mxu0 %v713
        %878 = vmatmul.mubr.f32.gmra.mrb[0].mxu0 %v712
        %v879 = vpop.f32.mrb[0].mxu0
        %v880 = vadd.f32 %v761, %v879
        %v881 = vpop.f32.mrb[0].mxu0
        %882 = vmatprep.mubr.f32.mxu0 %v715
        %883 = vmatmul.mubr.f32.gmra.mrb[0].mxu0 %v714
        %v884 = vpop.f32.mrb[0].mxu0
        %v885 = vadd.f32 %v761, %v884
        %v886 = vpop.f32.mrb[0].mxu0
        %887 = vmatprep.mubr.f32.mxu0 %v717
        %888 = vmatmul.mubr.f32.gmra.mrb[0].mxu0 %v716
        %v889 = vpop.f32.mrb[0].mxu0
        %v890 = vadd.f32 %v761, %v889
        %v891 = vpop.f32.mrb[0].mxu0
        %892 = vmatprep.mubr.f32.mxu0 %v719
        %893 = vmatmul.mubr.f32.gmra.mrb[0].mxu0 %v718
        %v894 = vpop.f32.mrb[0].mxu0
        %v895 = vadd.f32 %v761, %v894
        %v896 = vpop.f32.mrb[0].mxu0
        %897 = vmatprep.mubr.f32.mxu0 %v721
        %898 = vmatmul.mubr.f32.gmra.mrb[0].mxu0 %v720
        %v899 = vpop.f32.mrb[0].mxu0
        %v900 = vadd.f32 %v761, %v899
        %v901 = vpop.f32.mrb[0].mxu0
        %902 = vmatprep.mubr.f32.mxu0 %v723
        %903 = vmatmul.mubr.f32.gmra.mrb[0].mxu0 %v722
        %v904 = vpop.f32.mrb[0].mxu0
        %v905 = vadd.f32 %v761, %v904
        %v906 = vpop.f32.mrb[0].mxu0
        %907 = vdwg.mxu0
        %v908 = vld [vmem:[%s438] sm:$0xff]
        %v909 = vld [vmem:[%s438 + $0x8] sm:$0xff]
        %v910 = vld [vmem:[%s438 + $0x10] sm:$0xff]
        %v911 = vld [vmem:[%s438 + $0x18] sm:$0xff]
        %v912 = vld [vmem:[%s438 + $0x20] sm:$0xff]
        %v913 = vld [vmem:[%s438 + $0x28] sm:$0xff]
        %v914 = vld [vmem:[%s438 + $0x30] sm:$0xff]
        %v915 = vld [vmem:[%s438 + $0x38] sm:$0xff]
        %v916 = vld [vmem:[%s444] sm:$0xff]
        %v917 = vld [vmem:[%s444 + $0x8] sm:$0xff]
        %v918 = vld [vmem:[%s444 + $0x10] sm:$0xff]
        %v919 = vld [vmem:[%s444 + $0x18] sm:$0xff]
        %v920 = vld [vmem:[%s444 + $0x20] sm:$0xff]
        %v921 = vld [vmem:[%s444 + $0x28] sm:$0xff]
        %v922 = vld [vmem:[%s444 + $0x30] sm:$0xff]
        %v923 = vld [vmem:[%s444 + $0x38] sm:$0xff]
        %v924 = vrcp.pop %v916
        %v925 = vrcp.pop %v917
        %v926 = vrcp.pop %v918
        %v927 = vrcp.pop %v919
        %v928 = vrcp.pop %v920
        %v929 = vrcp.pop %v921
        %v930 = vrcp.pop %v922
        %v931 = vrcp.pop %v923
        %v932 = vmul.f32 %v916, %v924
        %v933 = vmul.f32 %v917, %v925
        %v934 = vmul.f32 %v918, %v926
        %v935 = vmul.f32 %v919, %v927
        %v936 = vmul.f32 %v920, %v928
        %v937 = vmul.f32 %v921, %v929
        %v938 = vmul.f32 %v922, %v930
        %v939 = vmul.f32 %v923, %v931
        %v940 = vsub.f32 2.0, %v932
        %v941 = vsub.f32 2.0, %v933
        %v942 = vsub.f32 2.0, %v934
        %v943 = vsub.f32 2.0, %v935
        %v944 = vsub.f32 2.0, %v936
        %v945 = vsub.f32 2.0, %v937
        %v946 = vsub.f32 2.0, %v938
        %v947 = vsub.f32 2.0, %v939
        %v948 = vmul.f32 %v924, %v940
        %v949 = vmul.f32 %v925, %v941
        %v950 = vmul.f32 %v926, %v942
        %v951 = vmul.f32 %v927, %v943
        %v952 = vmul.f32 %v928, %v944
        %v953 = vmul.f32 %v929, %v945
        %v954 = vmul.f32 %v930, %v946
        %v955 = vmul.f32 %v931, %v947
        %s956 = sld [smem:[#allocation2]]
        %v957 = vstv %s956
        %s958 = sld [smem:[#allocation3]]
        %s959 = sld [smem:[#allocation5]]
        %s960 = sld [smem:[#allocation7]]
        %v961 = vstv %s958
        %v962 = vmul.f32 %v908, %v961
        %v963 = vmul.f32 %v909, %v961
        %v964 = vmul.f32 %v910, %v961
        %v965 = vmul.f32 %v911, %v961
        %v966 = vmul.f32 %v912, %v961
        %v967 = vmul.f32 %v913, %v961
        %v968 = vmul.f32 %v914, %v961
        %v969 = vmul.f32 %v915, %v961
        %v970 = vstv %s959
        %v971 = vadd.f32 %v962, %v970
        %v972 = vadd.f32 %v963, %v970
        %v973 = vadd.f32 %v964, %v970
        %v974 = vadd.f32 %v965, %v970
        %v975 = vadd.f32 %v966, %v970
        %v976 = vadd.f32 %v967, %v970
        %v977 = vadd.f32 %v968, %v970
        %v978 = vadd.f32 %v969, %v970
        %v979 = vmax.f32 %v971, 0.0
        %v980 = vmax.f32 %v972, 0.0
        %v981 = vmax.f32 %v973, 0.0
        %v982 = vmax.f32 %v974, 0.0
        %v983 = vmax.f32 %v975, 0.0
        %v984 = vmax.f32 %v976, 0.0
        %v985 = vmax.f32 %v977, 0.0
        %v986 = vmax.f32 %v978, 0.0
        %v987 = vstv %s960
        %v988 = vmul.f32 %v979, %v987
        %v989 = vmul.f32 %v980, %v987
        %v990 = vmul.f32 %v981, %v987
        %v991 = vmul.f32 %v982, %v987
        %v992 = vmul.f32 %v983, %v987
        %v993 = vmul.f32 %v984, %v987
        %v994 = vmul.f32 %v985, %v987
        %v995 = vmul.f32 %v986, %v987
        %v996 = vadd.f32 %v957, %v988
        %v997 = vadd.f32 %v957, %v989
        %v998 = vadd.f32 %v957, %v990
        %v999 = vadd.f32 %v957, %v991
        %v1000 = vadd.f32 %v957, %v992
        %v1001 = vadd.f32 %v957, %v993
        %v1002 = vadd.f32 %v957, %v994
        %v1003 = vadd.f32 %v957, %v995
        %s1004 = sld [smem:[#allocation3 + $0x1]]
        %s1005 = sld [smem:[#allocation5 + $0x1]]
        %s1006 = sld [smem:[#allocation7 + $0x1]]
        %v1007 = vstv %s1004
        %v1008 = vmul.f32 %v908, %v1007
        %v1009 = vmul.f32 %v909, %v1007
        %v1010 = vmul.f32 %v910, %v1007
        %v1011 = vmul.f32 %v911, %v1007
        %v1012 = vmul.f32 %v912, %v1007
        %v1013 = vmul.f32 %v913, %v1007
        %v1014 = vmul.f32 %v914, %v1007
        %v1015 = vmul.f32 %v915, %v1007
        %v1016 = vstv %s1005
        %v1017 = vadd.f32 %v1008, %v1016
        %v1018 = vadd.f32 %v1009, %v1016
        %v1019 = vadd.f32 %v1010, %v1016
        %v1020 = vadd.f32 %v1011, %v1016
        %v1021 = vadd.f32 %v1012, %v1016
        %v1022 = vadd.f32 %v1013, %v1016
        %v1023 = vadd.f32 %v1014, %v1016
        %v1024 = vadd.f32 %v1015, %v1016
        %v1025 = vmax.f32 %v1017, 0.0
        %v1026 = vmax.f32 %v1018, 0.0
        %v1027 = vmax.f32 %v1019, 0.0
        %v1028 = vmax.f32 %v1020, 0.0
        %v1029 = vmax.f32 %v1021, 0.0
        %v1030 = vmax.f32 %v1022, 0.0
        %v1031 = vmax.f32 %v1023, 0.0
        %v1032 = vmax.f32 %v1024, 0.0
        %v1033 = vstv %s1006
        %v1034 = vmul.f32 %v1025, %v1033
        %v1035 = vmul.f32 %v1026, %v1033
        %v1036 = vmul.f32 %v1027, %v1033
        %v1037 = vmul.f32 %v1028, %v1033
        %v1038 = vmul.f32 %v1029, %v1033
        %v1039 = vmul.f32 %v1030, %v1033
        %v1040 = vmul.f32 %v1031, %v1033
        %v1041 = vmul.f32 %v1032, %v1033
        %v1042 = vadd.f32 %v996, %v1034
        %v1043 = vadd.f32 %v997, %v1035
        %v1044 = vadd.f32 %v998, %v1036
        %v1045 = vadd.f32 %v999, %v1037
        %v1046 = vadd.f32 %v1000, %v1038
        %v1047 = vadd.f32 %v1001, %v1039
        %v1048 = vadd.f32 %v1002, %v1040
        %v1049 = vadd.f32 %v1003, %v1041
        %s1050 = sld [smem:[#allocation3 + $0x2]]
        %s1051 = sld [smem:[#allocation5 + $0x2]]
        %s1052 = sld [smem:[#allocation7 + $0x2]]
        %v1053 = vstv %s1050
        %v1054 = vmul.f32 %v908, %v1053
        %v1055 = vmul.f32 %v909, %v1053
        %v1056 = vmul.f32 %v910, %v1053
        %v1057 = vmul.f32 %v911, %v1053
        %v1058 = vmul.f32 %v912, %v1053
        %v1059 = vmul.f32 %v913, %v1053
        %v1060 = vmul.f32 %v914, %v1053
        %v1061 = vmul.f32 %v915, %v1053
        %v1062 = vstv %s1051
        %v1063 = vadd.f32 %v1054, %v1062
        %v1064 = vadd.f32 %v1055, %v1062
        %v1065 = vadd.f32 %v1056, %v1062
        %v1066 = vadd.f32 %v1057, %v1062
        %v1067 = vadd.f32 %v1058, %v1062
        %v1068 = vadd.f32 %v1059, %v1062
        %v1069 = vadd.f32 %v1060, %v1062
        %v1070 = vadd.f32 %v1061, %v1062
        %v1071 = vmax.f32 %v1063, 0.0
        %v1072 = vmax.f32 %v1064, 0.0
        %v1073 = vmax.f32 %v1065, 0.0
        %v1074 = vmax.f32 %v1066, 0.0
        %v1075 = vmax.f32 %v1067, 0.0
        %v1076 = vmax.f32 %v1068, 0.0
        %v1077 = vmax.f32 %v1069, 0.0
        %v1078 = vmax.f32 %v1070, 0.0
        %v1079 = vstv %s1052
        %v1080 = vmul.f32 %v1071, %v1079
        %v1081 = vmul.f32 %v1072, %v1079
        %v1082 = vmul.f32 %v1073, %v1079
        %v1083 = vmul.f32 %v1074, %v1079
        %v1084 = vmul.f32 %v1075, %v1079
        %v1085 = vmul.f32 %v1076, %v1079
        %v1086 = vmul.f32 %v1077, %v1079
        %v1087 = vmul.f32 %v1078, %v1079
        %v1088 = vadd.f32 %v1042, %v1080
        %v1089 = vadd.f32 %v1043, %v1081
        %v1090 = vadd.f32 %v1044, %v1082
        %v1091 = vadd.f32 %v1045, %v1083
        %v1092 = vadd.f32 %v1046, %v1084
        %v1093 = vadd.f32 %v1047, %v1085
        %v1094 = vadd.f32 %v1048, %v1086
        %v1095 = vadd.f32 %v1049, %v1087
        %s1096 = sld [smem:[#allocation3 + $0x3]]
        %s1097 = sld [smem:[#allocation5 + $0x3]]
        %s1098 = sld [smem:[#allocation7 + $0x3]]
        %v1099 = vstv %s1096
        %v1100 = vmul.f32 %v908, %v1099
        %v1101 = vmul.f32 %v909, %v1099
        %v1102 = vmul.f32 %v910, %v1099
        %v1103 = vmul.f32 %v911, %v1099
        %v1104 = vmul.f32 %v912, %v1099
        %v1105 = vmul.f32 %v913, %v1099
        %v1106 = vmul.f32 %v914, %v1099
        %v1107 = vmul.f32 %v915, %v1099
        %v1108 = vstv %s1097
        %v1109 = vadd.f32 %v1100, %v1108
        %v1110 = vadd.f32 %v1101, %v1108
        %v1111 = vadd.f32 %v1102, %v1108
        %v1112 = vadd.f32 %v1103, %v1108
        %v1113 = vadd.f32 %v1104, %v1108
        %v1114 = vadd.f32 %v1105, %v1108
        %v1115 = vadd.f32 %v1106, %v1108
        %v1116 = vadd.f32 %v1107, %v1108
        %v1117 = vmax.f32 %v1109, 0.0
        %v1118 = vmax.f32 %v1110, 0.0
        %v1119 = vmax.f32 %v1111, 0.0
        %v1120 = vmax.f32 %v1112, 0.0
        %v1121 = vmax.f32 %v1113, 0.0
        %v1122 = vmax.f32 %v1114, 0.0
        %v1123 = vmax.f32 %v1115, 0.0
        %v1124 = vmax.f32 %v1116, 0.0
        %v1125 = vstv %s1098
        %v1126 = vmul.f32 %v1117, %v1125
        %v1127 = vmul.f32 %v1118, %v1125
        %v1128 = vmul.f32 %v1119, %v1125
        %v1129 = vmul.f32 %v1120, %v1125
        %v1130 = vmul.f32 %v1121, %v1125
        %v1131 = vmul.f32 %v1122, %v1125
        %v1132 = vmul.f32 %v1123, %v1125
        %v1133 = vmul.f32 %v1124, %v1125
        %v1134 = vadd.f32 %v1088, %v1126
        %v1135 = vadd.f32 %v1089, %v1127
        %v1136 = vadd.f32 %v1090, %v1128
        %v1137 = vadd.f32 %v1091, %v1129
        %v1138 = vadd.f32 %v1092, %v1130
        %v1139 = vadd.f32 %v1093, %v1131
        %v1140 = vadd.f32 %v1094, %v1132
        %v1141 = vadd.f32 %v1095, %v1133
        %s1142 = sld [smem:[#allocation3 + $0x4]]
        %s1143 = sld [smem:[#allocation5 + $0x4]]
        %s1144 = sld [smem:[#allocation7 + $0x4]]
        %v1145 = vstv %s1142
        %v1146 = vmul.f32 %v908, %v1145
        %v1147 = vmul.f32 %v909, %v1145
        %v1148 = vmul.f32 %v910, %v1145
        %v1149 = vmul.f32 %v911, %v1145
        %v1150 = vmul.f32 %v912, %v1145
        %v1151 = vmul.f32 %v913, %v1145
        %v1152 = vmul.f32 %v914, %v1145
        %v1153 = vmul.f32 %v915, %v1145
        %v1154 = vstv %s1143
        %v1155 = vadd.f32 %v1146, %v1154
        %v1156 = vadd.f32 %v1147, %v1154
        %v1157 = vadd.f32 %v1148, %v1154
        %v1158 = vadd.f32 %v1149, %v1154
        %v1159 = vadd.f32 %v1150, %v1154
        %v1160 = vadd.f32 %v1151, %v1154
        %v1161 = vadd.f32 %v1152, %v1154
        %v1162 = vadd.f32 %v1153, %v1154
        %v1163 = vmax.f32 %v1155, 0.0
        %v1164 = vmax.f32 %v1156, 0.0
        %v1165 = vmax.f32 %v1157, 0.0
        %v1166 = vmax.f32 %v1158, 0.0
        %v1167 = vmax.f32 %v1159, 0.0
        %v1168 = vmax.f32 %v1160, 0.0
        %v1169 = vmax.f32 %v1161, 0.0
        %v1170 = vmax.f32 %v1162, 0.0
        %v1171 = vstv %s1144
        %v1172 = vmul.f32 %v1163, %v1171
        %v1173 = vmul.f32 %v1164, %v1171
        %v1174 = vmul.f32 %v1165, %v1171
        %v1175 = vmul.f32 %v1166, %v1171
        %v1176 = vmul.f32 %v1167, %v1171
        %v1177 = vmul.f32 %v1168, %v1171
        %v1178 = vmul.f32 %v1169, %v1171
        %v1179 = vmul.f32 %v1170, %v1171
        %v1180 = vadd.f32 %v1134, %v1172
        %v1181 = vadd.f32 %v1135, %v1173
        %v1182 = vadd.f32 %v1136, %v1174
        %v1183 = vadd.f32 %v1137, %v1175
        %v1184 = vadd.f32 %v1138, %v1176
        %v1185 = vadd.f32 %v1139, %v1177
        %v1186 = vadd.f32 %v1140, %v1178
        %v1187 = vadd.f32 %v1141, %v1179
        %s1188 = sld [smem:[#allocation3 + $0x5]]
        %s1189 = sld [smem:[#allocation5 + $0x5]]
        %s1190 = sld [smem:[#allocation7 + $0x5]]
        %v1191 = vstv %s1188
        %v1192 = vmul.f32 %v908, %v1191
        %v1193 = vmul.f32 %v909, %v1191
        %v1194 = vmul.f32 %v910, %v1191
        %v1195 = vmul.f32 %v911, %v1191
        %v1196 = vmul.f32 %v912, %v1191
        %v1197 = vmul.f32 %v913, %v1191
        %v1198 = vmul.f32 %v914, %v1191
        %v1199 = vmul.f32 %v915, %v1191
        %v1200 = vstv %s1189
        %v1201 = vadd.f32 %v1192, %v1200
        %v1202 = vadd.f32 %v1193, %v1200
        %v1203 = vadd.f32 %v1194, %v1200
        %v1204 = vadd.f32 %v1195, %v1200
        %v1205 = vadd.f32 %v1196, %v1200
        %v1206 = vadd.f32 %v1197, %v1200
        %v1207 = vadd.f32 %v1198, %v1200
        %v1208 = vadd.f32 %v1199, %v1200
        %v1209 = vmax.f32 %v1201, 0.0
        %v1210 = vmax.f32 %v1202, 0.0
        %v1211 = vmax.f32 %v1203, 0.0
        %v1212 = vmax.f32 %v1204, 0.0
        %v1213 = vmax.f32 %v1205, 0.0
        %v1214 = vmax.f32 %v1206, 0.0
        %v1215 = vmax.f32 %v1207, 0.0
        %v1216 = vmax.f32 %v1208, 0.0
        %v1217 = vstv %s1190
        %v1218 = vmul.f32 %v1209, %v1217
        %v1219 = vmul.f32 %v1210, %v1217
        %v1220 = vmul.f32 %v1211, %v1217
        %v1221 = vmul.f32 %v1212, %v1217
        %v1222 = vmul.f32 %v1213, %v1217
        %v1223 = vmul.f32 %v1214, %v1217
        %v1224 = vmul.f32 %v1215, %v1217
        %v1225 = vmul.f32 %v1216, %v1217
        %v1226 = vadd.f32 %v1180, %v1218
        %v1227 = vadd.f32 %v1181, %v1219
        %v1228 = vadd.f32 %v1182, %v1220
        %v1229 = vadd.f32 %v1183, %v1221
        %v1230 = vadd.f32 %v1184, %v1222
        %v1231 = vadd.f32 %v1185, %v1223
        %v1232 = vadd.f32 %v1186, %v1224
        %v1233 = vadd.f32 %v1187, %v1225
        %s1234 = sld [smem:[#allocation3 + $0x6]]
        %s1235 = sld [smem:[#allocation5 + $0x6]]
        %s1236 = sld [smem:[#allocation7 + $0x6]]
        %v1237 = vstv %s1234
        %v1238 = vmul.f32 %v908, %v1237
        %v1239 = vmul.f32 %v909, %v1237
        %v1240 = vmul.f32 %v910, %v1237
        %v1241 = vmul.f32 %v911, %v1237
        %v1242 = vmul.f32 %v912, %v1237
        %v1243 = vmul.f32 %v913, %v1237
        %v1244 = vmul.f32 %v914, %v1237
        %v1245 = vmul.f32 %v915, %v1237
        %v1246 = vstv %s1235
        %v1247 = vadd.f32 %v1238, %v1246
        %v1248 = vadd.f32 %v1239, %v1246
        %v1249 = vadd.f32 %v1240, %v1246
        %v1250 = vadd.f32 %v1241, %v1246
        %v1251 = vadd.f32 %v1242, %v1246
        %v1252 = vadd.f32 %v1243, %v1246
        %v1253 = vadd.f32 %v1244, %v1246
        %v1254 = vadd.f32 %v1245, %v1246
        %v1255 = vmax.f32 %v1247, 0.0
        %v1256 = vmax.f32 %v1248, 0.0
        %v1257 = vmax.f32 %v1249, 0.0
        %v1258 = vmax.f32 %v1250, 0.0
        %v1259 = vmax.f32 %v1251, 0.0
        %v1260 = vmax.f32 %v1252, 0.0
        %v1261 = vmax.f32 %v1253, 0.0
        %v1262 = vmax.f32 %v1254, 0.0
        %v1263 = vstv %s1236
        %v1264 = vmul.f32 %v1255, %v1263
        %v1265 = vmul.f32 %v1256, %v1263
        %v1266 = vmul.f32 %v1257, %v1263
        %v1267 = vmul.f32 %v1258, %v1263
        %v1268 = vmul.f32 %v1259, %v1263
        %v1269 = vmul.f32 %v1260, %v1263
        %v1270 = vmul.f32 %v1261, %v1263
        %v1271 = vmul.f32 %v1262, %v1263
        %v1272 = vadd.f32 %v1226, %v1264
        %v1273 = vadd.f32 %v1227, %v1265
        %v1274 = vadd.f32 %v1228, %v1266
        %v1275 = vadd.f32 %v1229, %v1267
        %v1276 = vadd.f32 %v1230, %v1268
        %v1277 = vadd.f32 %v1231, %v1269
        %v1278 = vadd.f32 %v1232, %v1270
        %v1279 = vadd.f32 %v1233, %v1271
        %s1280 = sld [smem:[#allocation3 + $0x7]]
        %s1281 = sld [smem:[#allocation5 + $0x7]]
        %s1282 = sld [smem:[#allocation7 + $0x7]]
        %v1283 = vstv %s1280
        %v1284 = vmul.f32 %v908, %v1283
        %v1285 = vmul.f32 %v909, %v1283
        %v1286 = vmul.f32 %v910, %v1283
        %v1287 = vmul.f32 %v911, %v1283
        %v1288 = vmul.f32 %v912, %v1283
        %v1289 = vmul.f32 %v913, %v1283
        %v1290 = vmul.f32 %v914, %v1283
        %v1291 = vmul.f32 %v915, %v1283
        %v1292 = vstv %s1281
        %v1293 = vadd.f32 %v1284, %v1292
        %v1294 = vadd.f32 %v1285, %v1292
        %v1295 = vadd.f32 %v1286, %v1292
        %v1296 = vadd.f32 %v1287, %v1292
        %v1297 = vadd.f32 %v1288, %v1292
        %v1298 = vadd.f32 %v1289, %v1292
        %v1299 = vadd.f32 %v1290, %v1292
        %v1300 = vadd.f32 %v1291, %v1292
        %v1301 = vmax.f32 %v1293, 0.0
        %v1302 = vmax.f32 %v1294, 0.0
        %v1303 = vmax.f32 %v1295, 0.0
        %v1304 = vmax.f32 %v1296, 0.0
        %v1305 = vmax.f32 %v1297, 0.0
        %v1306 = vmax.f32 %v1298, 0.0
        %v1307 = vmax.f32 %v1299, 0.0
        %v1308 = vmax.f32 %v1300, 0.0
        %v1309 = vstv %s1282
        %v1310 = vmul.f32 %v1301, %v1309
        %v1311 = vmul.f32 %v1302, %v1309
        %v1312 = vmul.f32 %v1303, %v1309
        %v1313 = vmul.f32 %v1304, %v1309
        %v1314 = vmul.f32 %v1305, %v1309
        %v1315 = vmul.f32 %v1306, %v1309
        %v1316 = vmul.f32 %v1307, %v1309
        %v1317 = vmul.f32 %v1308, %v1309
        %v1318 = vadd.f32 %v1272, %v1310
        %v1319 = vadd.f32 %v1273, %v1311
        %v1320 = vadd.f32 %v1274, %v1312
        %v1321 = vadd.f32 %v1275, %v1313
        %v1322 = vadd.f32 %v1276, %v1314
        %v1323 = vadd.f32 %v1277, %v1315
        %v1324 = vadd.f32 %v1278, %v1316
        %v1325 = vadd.f32 %v1279, %v1317
        %s1326 = sld [smem:[#allocation3 + $0x8]]
        %s1327 = sld [smem:[#allocation5 + $0x8]]
        %s1328 = sld [smem:[#allocation7 + $0x8]]
        %v1329 = vstv %s1326
        %v1330 = vmul.f32 %v908, %v1329
        %v1331 = vmul.f32 %v909, %v1329
        %v1332 = vmul.f32 %v910, %v1329
        %v1333 = vmul.f32 %v911, %v1329
        %v1334 = vmul.f32 %v912, %v1329
        %v1335 = vmul.f32 %v913, %v1329
        %v1336 = vmul.f32 %v914, %v1329
        %v1337 = vmul.f32 %v915, %v1329
        %v1338 = vstv %s1327
        %v1339 = vadd.f32 %v1330, %v1338
        %v1340 = vadd.f32 %v1331, %v1338
        %v1341 = vadd.f32 %v1332, %v1338
        %v1342 = vadd.f32 %v1333, %v1338
        %v1343 = vadd.f32 %v1334, %v1338
        %v1344 = vadd.f32 %v1335, %v1338
        %v1345 = vadd.f32 %v1336, %v1338
        %v1346 = vadd.f32 %v1337, %v1338
        %v1347 = vmax.f32 %v1339, 0.0
        %v1348 = vmax.f32 %v1340, 0.0
        %v1349 = vmax.f32 %v1341, 0.0
        %v1350 = vmax.f32 %v1342, 0.0
        %v1351 = vmax.f32 %v1343, 0.0
        %v1352 = vmax.f32 %v1344, 0.0
        %v1353 = vmax.f32 %v1345, 0.0
        %v1354 = vmax.f32 %v1346, 0.0
        %v1355 = vstv %s1328
        %v1356 = vmul.f32 %v1347, %v1355
        %v1357 = vmul.f32 %v1348, %v1355
        %v1358 = vmul.f32 %v1349, %v1355
        %v1359 = vmul.f32 %v1350, %v1355
        %v1360 = vmul.f32 %v1351, %v1355
        %v1361 = vmul.f32 %v1352, %v1355
        %v1362 = vmul.f32 %v1353, %v1355
        %v1363 = vmul.f32 %v1354, %v1355
        %v1364 = vadd.f32 %v1318, %v1356
        %v1365 = vadd.f32 %v1319, %v1357
        %v1366 = vadd.f32 %v1320, %v1358
        %v1367 = vadd.f32 %v1321, %v1359
        %v1368 = vadd.f32 %v1322, %v1360
        %v1369 = vadd.f32 %v1323, %v1361
        %v1370 = vadd.f32 %v1324, %v1362
        %v1371 = vadd.f32 %v1325, %v1363
        %s1372 = sld [smem:[#allocation3 + $0x9]]
        %s1373 = sld [smem:[#allocation5 + $0x9]]
        %s1374 = sld [smem:[#allocation7 + $0x9]]
        %v1375 = vstv %s1372
        %v1376 = vmul.f32 %v908, %v1375
        %v1377 = vmul.f32 %v909, %v1375
        %v1378 = vmul.f32 %v910, %v1375
        %v1379 = vmul.f32 %v911, %v1375
        %v1380 = vmul.f32 %v912, %v1375
        %v1381 = vmul.f32 %v913, %v1375
        %v1382 = vmul.f32 %v914, %v1375
        %v1383 = vmul.f32 %v915, %v1375
        %v1384 = vstv %s1373
        %v1385 = vadd.f32 %v1376, %v1384
        %v1386 = vadd.f32 %v1377, %v1384
        %v1387 = vadd.f32 %v1378, %v1384
        %v1388 = vadd.f32 %v1379, %v1384
        %v1389 = vadd.f32 %v1380, %v1384
        %v1390 = vadd.f32 %v1381, %v1384
        %v1391 = vadd.f32 %v1382, %v1384
        %v1392 = vadd.f32 %v1383, %v1384
        %v1393 = vmax.f32 %v1385, 0.0
        %v1394 = vmax.f32 %v1386, 0.0
        %v1395 = vmax.f32 %v1387, 0.0
        %v1396 = vmax.f32 %v1388, 0.0
        %v1397 = vmax.f32 %v1389, 0.0
        %v1398 = vmax.f32 %v1390, 0.0
        %v1399 = vmax.f32 %v1391, 0.0
        %v1400 = vmax.f32 %v1392, 0.0
        %v1401 = vstv %s1374
        %v1402 = vmul.f32 %v1393, %v1401
        %v1403 = vmul.f32 %v1394, %v1401
        %v1404 = vmul.f32 %v1395, %v1401
        %v1405 = vmul.f32 %v1396, %v1401
        %v1406 = vmul.f32 %v1397, %v1401
        %v1407 = vmul.f32 %v1398, %v1401
        %v1408 = vmul.f32 %v1399, %v1401
        %v1409 = vmul.f32 %v1400, %v1401
        %v1410 = vadd.f32 %v1364, %v1402
        %v1411 = vadd.f32 %v1365, %v1403
        %v1412 = vadd.f32 %v1366, %v1404
        %v1413 = vadd.f32 %v1367, %v1405
        %v1414 = vadd.f32 %v1368, %v1406
        %v1415 = vadd.f32 %v1369, %v1407
        %v1416 = vadd.f32 %v1370, %v1408
        %v1417 = vadd.f32 %v1371, %v1409
        %s1418 = sld [smem:[#allocation3 + $0xa]]
        %s1419 = sld [smem:[#allocation5 + $0xa]]
        %s1420 = sld [smem:[#allocation7 + $0xa]]
        %v1421 = vstv %s1418
        %v1422 = vmul.f32 %v908, %v1421
        %v1423 = vmul.f32 %v909, %v1421
        %v1424 = vmul.f32 %v910, %v1421
        %v1425 = vmul.f32 %v911, %v1421
        %v1426 = vmul.f32 %v912, %v1421
        %v1427 = vmul.f32 %v913, %v1421
        %v1428 = vmul.f32 %v914, %v1421
        %v1429 = vmul.f32 %v915, %v1421
        %v1430 = vstv %s1419
        %v1431 = vadd.f32 %v1422, %v1430
        %v1432 = vadd.f32 %v1423, %v1430
        %v1433 = vadd.f32 %v1424, %v1430
        %v1434 = vadd.f32 %v1425, %v1430
        %v1435 = vadd.f32 %v1426, %v1430
        %v1436 = vadd.f32 %v1427, %v1430
        %v1437 = vadd.f32 %v1428, %v1430
        %v1438 = vadd.f32 %v1429, %v1430
        %v1439 = vmax.f32 %v1431, 0.0
        %v1440 = vmax.f32 %v1432, 0.0
        %v1441 = vmax.f32 %v1433, 0.0
        %v1442 = vmax.f32 %v1434, 0.0
        %v1443 = vmax.f32 %v1435, 0.0
        %v1444 = vmax.f32 %v1436, 0.0
        %v1445 = vmax.f32 %v1437, 0.0
        %v1446 = vmax.f32 %v1438, 0.0
        %v1447 = vstv %s1420
        %v1448 = vmul.f32 %v1439, %v1447
        %v1449 = vmul.f32 %v1440, %v1447
        %v1450 = vmul.f32 %v1441, %v1447
        %v1451 = vmul.f32 %v1442, %v1447
        %v1452 = vmul.f32 %v1443, %v1447
        %v1453 = vmul.f32 %v1444, %v1447
        %v1454 = vmul.f32 %v1445, %v1447
        %v1455 = vmul.f32 %v1446, %v1447
        %v1456 = vadd.f32 %v1410, %v1448
        %v1457 = vadd.f32 %v1411, %v1449
        %v1458 = vadd.f32 %v1412, %v1450
        %v1459 = vadd.f32 %v1413, %v1451
        %v1460 = vadd.f32 %v1414, %v1452
        %v1461 = vadd.f32 %v1415, %v1453
        %v1462 = vadd.f32 %v1416, %v1454
        %v1463 = vadd.f32 %v1417, %v1455
        %s1464 = sld [smem:[#allocation3 + $0xb]]
        %s1465 = sld [smem:[#allocation5 + $0xb]]
        %s1466 = sld [smem:[#allocation7 + $0xb]]
        %v1467 = vstv %s1464
        %v1468 = vmul.f32 %v908, %v1467
        %v1469 = vmul.f32 %v909, %v1467
        %v1470 = vmul.f32 %v910, %v1467
        %v1471 = vmul.f32 %v911, %v1467
        %v1472 = vmul.f32 %v912, %v1467
        %v1473 = vmul.f32 %v913, %v1467
        %v1474 = vmul.f32 %v914, %v1467
        %v1475 = vmul.f32 %v915, %v1467
        %v1476 = vstv %s1465
        %v1477 = vadd.f32 %v1468, %v1476
        %v1478 = vadd.f32 %v1469, %v1476
        %v1479 = vadd.f32 %v1470, %v1476
        %v1480 = vadd.f32 %v1471, %v1476
        %v1481 = vadd.f32 %v1472, %v1476
        %v1482 = vadd.f32 %v1473, %v1476
        %v1483 = vadd.f32 %v1474, %v1476
        %v1484 = vadd.f32 %v1475, %v1476
        %v1485 = vmax.f32 %v1477, 0.0
        %v1486 = vmax.f32 %v1478, 0.0
        %v1487 = vmax.f32 %v1479, 0.0
        %v1488 = vmax.f32 %v1480, 0.0
        %v1489 = vmax.f32 %v1481, 0.0
        %v1490 = vmax.f32 %v1482, 0.0
        %v1491 = vmax.f32 %v1483, 0.0
        %v1492 = vmax.f32 %v1484, 0.0
        %v1493 = vstv %s1466
        %v1494 = vmul.f32 %v1485, %v1493
        %v1495 = vmul.f32 %v1486, %v1493
        %v1496 = vmul.f32 %v1487, %v1493
        %v1497 = vmul.f32 %v1488, %v1493
        %v1498 = vmul.f32 %v1489, %v1493
        %v1499 = vmul.f32 %v1490, %v1493
        %v1500 = vmul.f32 %v1491, %v1493
        %v1501 = vmul.f32 %v1492, %v1493
        %v1502 = vadd.f32 %v1456, %v1494
        %v1503 = vadd.f32 %v1457, %v1495
        %v1504 = vadd.f32 %v1458, %v1496
        %v1505 = vadd.f32 %v1459, %v1497
        %v1506 = vadd.f32 %v1460, %v1498
        %v1507 = vadd.f32 %v1461, %v1499
        %v1508 = vadd.f32 %v1462, %v1500
        %v1509 = vadd.f32 %v1463, %v1501
        %s1510 = sld [smem:[#allocation3 + $0xc]]
        %s1511 = sld [smem:[#allocation5 + $0xc]]
        %s1512 = sld [smem:[#allocation7 + $0xc]]
        %v1513 = vstv %s1510
        %v1514 = vmul.f32 %v908, %v1513
        %v1515 = vmul.f32 %v909, %v1513
        %v1516 = vmul.f32 %v910, %v1513
        %v1517 = vmul.f32 %v911, %v1513
        %v1518 = vmul.f32 %v912, %v1513
        %v1519 = vmul.f32 %v913, %v1513
        %v1520 = vmul.f32 %v914, %v1513
        %v1521 = vmul.f32 %v915, %v1513
        %v1522 = vstv %s1511
        %v1523 = vadd.f32 %v1514, %v1522
        %v1524 = vadd.f32 %v1515, %v1522
        %v1525 = vadd.f32 %v1516, %v1522
        %v1526 = vadd.f32 %v1517, %v1522
        %v1527 = vadd.f32 %v1518, %v1522
        %v1528 = vadd.f32 %v1519, %v1522
        %v1529 = vadd.f32 %v1520, %v1522
        %v1530 = vadd.f32 %v1521, %v1522
        %v1531 = vmax.f32 %v1523, 0.0
        %v1532 = vmax.f32 %v1524, 0.0
        %v1533 = vmax.f32 %v1525, 0.0
        %v1534 = vmax.f32 %v1526, 0.0
        %v1535 = vmax.f32 %v1527, 0.0
        %v1536 = vmax.f32 %v1528, 0.0
        %v1537 = vmax.f32 %v1529, 0.0
        %v1538 = vmax.f32 %v1530, 0.0
        %v1539 = vstv %s1512
        %v1540 = vmul.f32 %v1531, %v1539
        %v1541 = vmul.f32 %v1532, %v1539
        %v1542 = vmul.f32 %v1533, %v1539
        %v1543 = vmul.f32 %v1534, %v1539
        %v1544 = vmul.f32 %v1535, %v1539
        %v1545 = vmul.f32 %v1536, %v1539
        %v1546 = vmul.f32 %v1537, %v1539
        %v1547 = vmul.f32 %v1538, %v1539
        %v1548 = vadd.f32 %v1502, %v1540
        %v1549 = vadd.f32 %v1503, %v1541
        %v1550 = vadd.f32 %v1504, %v1542
        %v1551 = vadd.f32 %v1505, %v1543
        %v1552 = vadd.f32 %v1506, %v1544
        %v1553 = vadd.f32 %v1507, %v1545
        %v1554 = vadd.f32 %v1508, %v1546
        %v1555 = vadd.f32 %v1509, %v1547
        %s1556 = sld [smem:[#allocation3 + $0xd]]
        %s1557 = sld [smem:[#allocation5 + $0xd]]
        %s1558 = sld [smem:[#allocation7 + $0xd]]
        %v1559 = vstv %s1556
        %v1560 = vmul.f32 %v908, %v1559
        %v1561 = vmul.f32 %v909, %v1559
        %v1562 = vmul.f32 %v910, %v1559
        %v1563 = vmul.f32 %v911, %v1559
        %v1564 = vmul.f32 %v912, %v1559
        %v1565 = vmul.f32 %v913, %v1559
        %v1566 = vmul.f32 %v914, %v1559
        %v1567 = vmul.f32 %v915, %v1559
        %v1568 = vstv %s1557
        %v1569 = vadd.f32 %v1560, %v1568
        %v1570 = vadd.f32 %v1561, %v1568
        %v1571 = vadd.f32 %v1562, %v1568
        %v1572 = vadd.f32 %v1563, %v1568
        %v1573 = vadd.f32 %v1564, %v1568
        %v1574 = vadd.f32 %v1565, %v1568
        %v1575 = vadd.f32 %v1566, %v1568
        %v1576 = vadd.f32 %v1567, %v1568
        %v1577 = vmax.f32 %v1569, 0.0
        %v1578 = vmax.f32 %v1570, 0.0
        %v1579 = vmax.f32 %v1571, 0.0
        %v1580 = vmax.f32 %v1572, 0.0
        %v1581 = vmax.f32 %v1573, 0.0
        %v1582 = vmax.f32 %v1574, 0.0
        %v1583 = vmax.f32 %v1575, 0.0
        %v1584 = vmax.f32 %v1576, 0.0
        %v1585 = vstv %s1558
        %v1586 = vmul.f32 %v1577, %v1585
        %v1587 = vmul.f32 %v1578, %v1585
        %v1588 = vmul.f32 %v1579, %v1585
        %v1589 = vmul.f32 %v1580, %v1585
        %v1590 = vmul.f32 %v1581, %v1585
        %v1591 = vmul.f32 %v1582, %v1585
        %v1592 = vmul.f32 %v1583, %v1585
        %v1593 = vmul.f32 %v1584, %v1585
        %v1594 = vadd.f32 %v1548, %v1586
        %v1595 = vadd.f32 %v1549, %v1587
        %v1596 = vadd.f32 %v1550, %v1588
        %v1597 = vadd.f32 %v1551, %v1589
        %v1598 = vadd.f32 %v1552, %v1590
        %v1599 = vadd.f32 %v1553, %v1591
        %v1600 = vadd.f32 %v1554, %v1592
        %v1601 = vadd.f32 %v1555, %v1593
        %s1602 = sld [smem:[#allocation3 + $0xe]]
        %s1603 = sld [smem:[#allocation5 + $0xe]]
        %s1604 = sld [smem:[#allocation7 + $0xe]]
        %v1605 = vstv %s1602
        %v1606 = vmul.f32 %v908, %v1605
        %v1607 = vmul.f32 %v909, %v1605
        %v1608 = vmul.f32 %v910, %v1605
        %v1609 = vmul.f32 %v911, %v1605
        %v1610 = vmul.f32 %v912, %v1605
        %v1611 = vmul.f32 %v913, %v1605
        %v1612 = vmul.f32 %v914, %v1605
        %v1613 = vmul.f32 %v915, %v1605
        %v1614 = vstv %s1603
        %v1615 = vadd.f32 %v1606, %v1614
        %v1616 = vadd.f32 %v1607, %v1614
        %v1617 = vadd.f32 %v1608, %v1614
        %v1618 = vadd.f32 %v1609, %v1614
        %v1619 = vadd.f32 %v1610, %v1614
        %v1620 = vadd.f32 %v1611, %v1614
        %v1621 = vadd.f32 %v1612, %v1614
        %v1622 = vadd.f32 %v1613, %v1614
        %v1623 = vmax.f32 %v1615, 0.0
        %v1624 = vmax.f32 %v1616, 0.0
        %v1625 = vmax.f32 %v1617, 0.0
        %v1626 = vmax.f32 %v1618, 0.0
        %v1627 = vmax.f32 %v1619, 0.0
        %v1628 = vmax.f32 %v1620, 0.0
        %v1629 = vmax.f32 %v1621, 0.0
        %v1630 = vmax.f32 %v1622, 0.0
        %v1631 = vstv %s1604
        %v1632 = vmul.f32 %v1623, %v1631
        %v1633 = vmul.f32 %v1624, %v1631
        %v1634 = vmul.f32 %v1625, %v1631
        %v1635 = vmul.f32 %v1626, %v1631
        %v1636 = vmul.f32 %v1627, %v1631
        %v1637 = vmul.f32 %v1628, %v1631
        %v1638 = vmul.f32 %v1629, %v1631
        %v1639 = vmul.f32 %v1630, %v1631
        %v1640 = vadd.f32 %v1594, %v1632
        %v1641 = vadd.f32 %v1595, %v1633
        %v1642 = vadd.f32 %v1596, %v1634
        %v1643 = vadd.f32 %v1597, %v1635
        %v1644 = vadd.f32 %v1598, %v1636
        %v1645 = vadd.f32 %v1599, %v1637
        %v1646 = vadd.f32 %v1600, %v1638
        %v1647 = vadd.f32 %v1601, %v1639
        %s1648 = sld [smem:[#allocation3 + $0xf]]
        %s1649 = sld [smem:[#allocation5 + $0xf]]
        %s1650 = sld [smem:[#allocation7 + $0xf]]
        %v1651 = vstv %s1648
        %v1652 = vmul.f32 %v908, %v1651
        %v1653 = vmul.f32 %v909, %v1651
        %v1654 = vmul.f32 %v910, %v1651
        %v1655 = vmul.f32 %v911, %v1651
        %v1656 = vmul.f32 %v912, %v1651
        %v1657 = vmul.f32 %v913, %v1651
        %v1658 = vmul.f32 %v914, %v1651
        %v1659 = vmul.f32 %v915, %v1651
        %v1660 = vstv %s1649
        %v1661 = vadd.f32 %v1652, %v1660
        %v1662 = vadd.f32 %v1653, %v1660
        %v1663 = vadd.f32 %v1654, %v1660
        %v1664 = vadd.f32 %v1655, %v1660
        %v1665 = vadd.f32 %v1656, %v1660
        %v1666 = vadd.f32 %v1657, %v1660
        %v1667 = vadd.f32 %v1658, %v1660
        %v1668 = vadd.f32 %v1659, %v1660
        %v1669 = vmax.f32 %v1661, 0.0
        %v1670 = vmax.f32 %v1662, 0.0
        %v1671 = vmax.f32 %v1663, 0.0
        %v1672 = vmax.f32 %v1664, 0.0
        %v1673 = vmax.f32 %v1665, 0.0
        %v1674 = vmax.f32 %v1666, 0.0
        %v1675 = vmax.f32 %v1667, 0.0
        %v1676 = vmax.f32 %v1668, 0.0
        %v1677 = vstv %s1650
        %v1678 = vmul.f32 %v1669, %v1677
        %v1679 = vmul.f32 %v1670, %v1677
        %v1680 = vmul.f32 %v1671, %v1677
        %v1681 = vmul.f32 %v1672, %v1677
        %v1682 = vmul.f32 %v1673, %v1677
        %v1683 = vmul.f32 %v1674, %v1677
        %v1684 = vmul.f32 %v1675, %v1677
        %v1685 = vmul.f32 %v1676, %v1677
        %v1686 = vadd.f32 %v1640, %v1678
        %v1687 = vadd.f32 %v1641, %v1679
        %v1688 = vadd.f32 %v1642, %v1680
        %v1689 = vadd.f32 %v1643, %v1681
        %v1690 = vadd.f32 %v1644, %v1682
        %v1691 = vadd.f32 %v1645, %v1683
        %v1692 = vadd.f32 %v1646, %v1684
        %v1693 = vadd.f32 %v1647, %v1685
        %s1694 = sld [smem:[#allocation3 + $0x10]]
        %s1695 = sld [smem:[#allocation5 + $0x10]]
        %s1696 = sld [smem:[#allocation7 + $0x10]]
        %v1697 = vstv %s1694
        %v1698 = vmul.f32 %v908, %v1697
        %v1699 = vmul.f32 %v909, %v1697
        %v1700 = vmul.f32 %v910, %v1697
        %v1701 = vmul.f32 %v911, %v1697
        %v1702 = vmul.f32 %v912, %v1697
        %v1703 = vmul.f32 %v913, %v1697
        %v1704 = vmul.f32 %v914, %v1697
        %v1705 = vmul.f32 %v915, %v1697
        %v1706 = vstv %s1695
        %v1707 = vadd.f32 %v1698, %v1706
        %v1708 = vadd.f32 %v1699, %v1706
        %v1709 = vadd.f32 %v1700, %v1706
        %v1710 = vadd.f32 %v1701, %v1706
        %v1711 = vadd.f32 %v1702, %v1706
        %v1712 = vadd.f32 %v1703, %v1706
        %v1713 = vadd.f32 %v1704, %v1706
        %v1714 = vadd.f32 %v1705, %v1706
        %v1715 = vmax.f32 %v1707, 0.0
        %v1716 = vmax.f32 %v1708, 0.0
        %v1717 = vmax.f32 %v1709, 0.0
        %v1718 = vmax.f32 %v1710, 0.0
        %v1719 = vmax.f32 %v1711, 0.0
        %v1720 = vmax.f32 %v1712, 0.0
        %v1721 = vmax.f32 %v1713, 0.0
        %v1722 = vmax.f32 %v1714, 0.0
        %v1723 = vstv %s1696
        %v1724 = vmul.f32 %v1715, %v1723
        %v1725 = vmul.f32 %v1716, %v1723
        %v1726 = vmul.f32 %v1717, %v1723
        %v1727 = vmul.f32 %v1718, %v1723
        %v1728 = vmul.f32 %v1719, %v1723
        %v1729 = vmul.f32 %v1720, %v1723
        %v1730 = vmul.f32 %v1721, %v1723
        %v1731 = vmul.f32 %v1722, %v1723
        %v1732 = vadd.f32 %v1686, %v1724
        %v1733 = vadd.f32 %v1687, %v1725
        %v1734 = vadd.f32 %v1688, %v1726
        %v1735 = vadd.f32 %v1689, %v1727
        %v1736 = vadd.f32 %v1690, %v1728
        %v1737 = vadd.f32 %v1691, %v1729
        %v1738 = vadd.f32 %v1692, %v1730
        %v1739 = vadd.f32 %v1693, %v1731
        %s1740 = sld [smem:[#allocation3 + $0x11]]
        %s1741 = sld [smem:[#allocation5 + $0x11]]
        %s1742 = sld [smem:[#allocation7 + $0x11]]
        %v1743 = vstv %s1740
        %v1744 = vmul.f32 %v908, %v1743
        %v1745 = vmul.f32 %v909, %v1743
        %v1746 = vmul.f32 %v910, %v1743
        %v1747 = vmul.f32 %v911, %v1743
        %v1748 = vmul.f32 %v912, %v1743
        %v1749 = vmul.f32 %v913, %v1743
        %v1750 = vmul.f32 %v914, %v1743
        %v1751 = vmul.f32 %v915, %v1743
        %v1752 = vstv %s1741
        %v1753 = vadd.f32 %v1744, %v1752
        %v1754 = vadd.f32 %v1745, %v1752
        %v1755 = vadd.f32 %v1746, %v1752
        %v1756 = vadd.f32 %v1747, %v1752
        %v1757 = vadd.f32 %v1748, %v1752
        %v1758 = vadd.f32 %v1749, %v1752
        %v1759 = vadd.f32 %v1750, %v1752
        %v1760 = vadd.f32 %v1751, %v1752
        %v1761 = vmax.f32 %v1753, 0.0
        %v1762 = vmax.f32 %v1754, 0.0
        %v1763 = vmax.f32 %v1755, 0.0
        %v1764 = vmax.f32 %v1756, 0.0
        %v1765 = vmax.f32 %v1757, 0.0
        %v1766 = vmax.f32 %v1758, 0.0
        %v1767 = vmax.f32 %v1759, 0.0
        %v1768 = vmax.f32 %v1760, 0.0
        %v1769 = vstv %s1742
        %v1770 = vmul.f32 %v1761, %v1769
        %v1771 = vmul.f32 %v1762, %v1769
        %v1772 = vmul.f32 %v1763, %v1769
        %v1773 = vmul.f32 %v1764, %v1769
        %v1774 = vmul.f32 %v1765, %v1769
        %v1775 = vmul.f32 %v1766, %v1769
        %v1776 = vmul.f32 %v1767, %v1769
        %v1777 = vmul.f32 %v1768, %v1769
        %v1778 = vadd.f32 %v1732, %v1770
        %v1779 = vadd.f32 %v1733, %v1771
        %v1780 = vadd.f32 %v1734, %v1772
        %v1781 = vadd.f32 %v1735, %v1773
        %v1782 = vadd.f32 %v1736, %v1774
        %v1783 = vadd.f32 %v1737, %v1775
        %v1784 = vadd.f32 %v1738, %v1776
        %v1785 = vadd.f32 %v1739, %v1777
        %s1786 = sld [smem:[#allocation3 + $0x12]]
        %s1787 = sld [smem:[#allocation5 + $0x12]]
        %s1788 = sld [smem:[#allocation7 + $0x12]]
        %v1789 = vstv %s1786
        %v1790 = vmul.f32 %v908, %v1789
        %v1791 = vmul.f32 %v909, %v1789
        %v1792 = vmul.f32 %v910, %v1789
        %v1793 = vmul.f32 %v911, %v1789
        %v1794 = vmul.f32 %v912, %v1789
        %v1795 = vmul.f32 %v913, %v1789
        %v1796 = vmul.f32 %v914, %v1789
        %v1797 = vmul.f32 %v915, %v1789
        %v1798 = vstv %s1787
        %v1799 = vadd.f32 %v1790, %v1798
        %v1800 = vadd.f32 %v1791, %v1798
        %v1801 = vadd.f32 %v1792, %v1798
        %v1802 = vadd.f32 %v1793, %v1798
        %v1803 = vadd.f32 %v1794, %v1798
        %v1804 = vadd.f32 %v1795, %v1798
        %v1805 = vadd.f32 %v1796, %v1798
        %v1806 = vadd.f32 %v1797, %v1798
        %v1807 = vmax.f32 %v1799, 0.0
        %v1808 = vmax.f32 %v1800, 0.0
        %v1809 = vmax.f32 %v1801, 0.0
        %v1810 = vmax.f32 %v1802, 0.0
        %v1811 = vmax.f32 %v1803, 0.0
        %v1812 = vmax.f32 %v1804, 0.0
        %v1813 = vmax.f32 %v1805, 0.0
        %v1814 = vmax.f32 %v1806, 0.0
        %v1815 = vstv %s1788
        %v1816 = vmul.f32 %v1807, %v1815
        %v1817 = vmul.f32 %v1808, %v1815
        %v1818 = vmul.f32 %v1809, %v1815
        %v1819 = vmul.f32 %v1810, %v1815
        %v1820 = vmul.f32 %v1811, %v1815
        %v1821 = vmul.f32 %v1812, %v1815
        %v1822 = vmul.f32 %v1813, %v1815
        %v1823 = vmul.f32 %v1814, %v1815
        %v1824 = vadd.f32 %v1778, %v1816
        %v1825 = vadd.f32 %v1779, %v1817
        %v1826 = vadd.f32 %v1780, %v1818
        %v1827 = vadd.f32 %v1781, %v1819
        %v1828 = vadd.f32 %v1782, %v1820
        %v1829 = vadd.f32 %v1783, %v1821
        %v1830 = vadd.f32 %v1784, %v1822
        %v1831 = vadd.f32 %v1785, %v1823
        %s1832 = sld [smem:[#allocation3 + $0x13]]
        %s1833 = sld [smem:[#allocation5 + $0x13]]
        %s1834 = sld [smem:[#allocation7 + $0x13]]
        %v1835 = vstv %s1832
        %v1836 = vmul.f32 %v908, %v1835
        %v1837 = vmul.f32 %v909, %v1835
        %v1838 = vmul.f32 %v910, %v1835
        %v1839 = vmul.f32 %v911, %v1835
        %v1840 = vmul.f32 %v912, %v1835
        %v1841 = vmul.f32 %v913, %v1835
        %v1842 = vmul.f32 %v914, %v1835
        %v1843 = vmul.f32 %v915, %v1835
        %v1844 = vstv %s1833
        %v1845 = vadd.f32 %v1836, %v1844
        %v1846 = vadd.f32 %v1837, %v1844
        %v1847 = vadd.f32 %v1838, %v1844
        %v1848 = vadd.f32 %v1839, %v1844
        %v1849 = vadd.f32 %v1840, %v1844
        %v1850 = vadd.f32 %v1841, %v1844
        %v1851 = vadd.f32 %v1842, %v1844
        %v1852 = vadd.f32 %v1843, %v1844
        %v1853 = vmax.f32 %v1845, 0.0
        %v1854 = vmax.f32 %v1846, 0.0
        %v1855 = vmax.f32 %v1847, 0.0
        %v1856 = vmax.f32 %v1848, 0.0
        %v1857 = vmax.f32 %v1849, 0.0
        %v1858 = vmax.f32 %v1850, 0.0
        %v1859 = vmax.f32 %v1851, 0.0
        %v1860 = vmax.f32 %v1852, 0.0
        %v1861 = vstv %s1834
        %v1862 = vmul.f32 %v1853, %v1861
        %v1863 = vmul.f32 %v1854, %v1861
        %v1864 = vmul.f32 %v1855, %v1861
        %v1865 = vmul.f32 %v1856, %v1861
        %v1866 = vmul.f32 %v1857, %v1861
        %v1867 = vmul.f32 %v1858, %v1861
        %v1868 = vmul.f32 %v1859, %v1861
        %v1869 = vmul.f32 %v1860, %v1861
        %v1870 = vadd.f32 %v1824, %v1862
        %v1871 = vadd.f32 %v1825, %v1863
        %v1872 = vadd.f32 %v1826, %v1864
        %v1873 = vadd.f32 %v1827, %v1865
        %v1874 = vadd.f32 %v1828, %v1866
        %v1875 = vadd.f32 %v1829, %v1867
        %v1876 = vadd.f32 %v1830, %v1868
        %v1877 = vadd.f32 %v1831, %v1869
        %s1878 = sld [smem:[#allocation3 + $0x14]]
        %s1879 = sld [smem:[#allocation5 + $0x14]]
        %s1880 = sld [smem:[#allocation7 + $0x14]]
        %v1881 = vstv %s1878
        %v1882 = vmul.f32 %v908, %v1881
        %v1883 = vmul.f32 %v909, %v1881
        %v1884 = vmul.f32 %v910, %v1881
        %v1885 = vmul.f32 %v911, %v1881
        %v1886 = vmul.f32 %v912, %v1881
        %v1887 = vmul.f32 %v913, %v1881
        %v1888 = vmul.f32 %v914, %v1881
        %v1889 = vmul.f32 %v915, %v1881
        %v1890 = vstv %s1879
        %v1891 = vadd.f32 %v1882, %v1890
        %v1892 = vadd.f32 %v1883, %v1890
        %v1893 = vadd.f32 %v1884, %v1890
        %v1894 = vadd.f32 %v1885, %v1890
        %v1895 = vadd.f32 %v1886, %v1890
        %v1896 = vadd.f32 %v1887, %v1890
        %v1897 = vadd.f32 %v1888, %v1890
        %v1898 = vadd.f32 %v1889, %v1890
        %v1899 = vmax.f32 %v1891, 0.0
        %v1900 = vmax.f32 %v1892, 0.0
        %v1901 = vmax.f32 %v1893, 0.0
        %v1902 = vmax.f32 %v1894, 0.0
        %v1903 = vmax.f32 %v1895, 0.0
        %v1904 = vmax.f32 %v1896, 0.0
        %v1905 = vmax.f32 %v1897, 0.0
        %v1906 = vmax.f32 %v1898, 0.0
        %v1907 = vstv %s1880
        %v1908 = vmul.f32 %v1899, %v1907
        %v1909 = vmul.f32 %v1900, %v1907
        %v1910 = vmul.f32 %v1901, %v1907
        %v1911 = vmul.f32 %v1902, %v1907
        %v1912 = vmul.f32 %v1903, %v1907
        %v1913 = vmul.f32 %v1904, %v1907
        %v1914 = vmul.f32 %v1905, %v1907
        %v1915 = vmul.f32 %v1906, %v1907
        %v1916 = vadd.f32 %v1870, %v1908
        %v1917 = vadd.f32 %v1871, %v1909
        %v1918 = vadd.f32 %v1872, %v1910
        %v1919 = vadd.f32 %v1873, %v1911
        %v1920 = vadd.f32 %v1874, %v1912
        %v1921 = vadd.f32 %v1875, %v1913
        %v1922 = vadd.f32 %v1876, %v1914
        %v1923 = vadd.f32 %v1877, %v1915
        %s1924 = sld [smem:[#allocation3 + $0x15]]
        %s1925 = sld [smem:[#allocation5 + $0x15]]
        %s1926 = sld [smem:[#allocation7 + $0x15]]
        %v1927 = vstv %s1924
        %v1928 = vmul.f32 %v908, %v1927
        %v1929 = vmul.f32 %v909, %v1927
        %v1930 = vmul.f32 %v910, %v1927
        %v1931 = vmul.f32 %v911, %v1927
        %v1932 = vmul.f32 %v912, %v1927
        %v1933 = vmul.f32 %v913, %v1927
        %v1934 = vmul.f32 %v914, %v1927
        %v1935 = vmul.f32 %v915, %v1927
        %v1936 = vstv %s1925
        %v1937 = vadd.f32 %v1928, %v1936
        %v1938 = vadd.f32 %v1929, %v1936
        %v1939 = vadd.f32 %v1930, %v1936
        %v1940 = vadd.f32 %v1931, %v1936
        %v1941 = vadd.f32 %v1932, %v1936
        %v1942 = vadd.f32 %v1933, %v1936
        %v1943 = vadd.f32 %v1934, %v1936
        %v1944 = vadd.f32 %v1935, %v1936
        %v1945 = vmax.f32 %v1937, 0.0
        %v1946 = vmax.f32 %v1938, 0.0
        %v1947 = vmax.f32 %v1939, 0.0
        %v1948 = vmax.f32 %v1940, 0.0
        %v1949 = vmax.f32 %v1941, 0.0
        %v1950 = vmax.f32 %v1942, 0.0
        %v1951 = vmax.f32 %v1943, 0.0
        %v1952 = vmax.f32 %v1944, 0.0
        %v1953 = vstv %s1926
        %v1954 = vmul.f32 %v1945, %v1953
        %v1955 = vmul.f32 %v1946, %v1953
        %v1956 = vmul.f32 %v1947, %v1953
        %v1957 = vmul.f32 %v1948, %v1953
        %v1958 = vmul.f32 %v1949, %v1953
        %v1959 = vmul.f32 %v1950, %v1953
        %v1960 = vmul.f32 %v1951, %v1953
        %v1961 = vmul.f32 %v1952, %v1953
        %v1962 = vadd.f32 %v1916, %v1954
        %v1963 = vadd.f32 %v1917, %v1955
        %v1964 = vadd.f32 %v1918, %v1956
        %v1965 = vadd.f32 %v1919, %v1957
        %v1966 = vadd.f32 %v1920, %v1958
        %v1967 = vadd.f32 %v1921, %v1959
        %v1968 = vadd.f32 %v1922, %v1960
        %v1969 = vadd.f32 %v1923, %v1961
        %s1970 = sld [smem:[#allocation3 + $0x16]]
        %s1971 = sld [smem:[#allocation5 + $0x16]]
        %s1972 = sld [smem:[#allocation7 + $0x16]]
        %v1973 = vstv %s1970
        %v1974 = vmul.f32 %v908, %v1973
        %v1975 = vmul.f32 %v909, %v1973
        %v1976 = vmul.f32 %v910, %v1973
        %v1977 = vmul.f32 %v911, %v1973
        %v1978 = vmul.f32 %v912, %v1973
        %v1979 = vmul.f32 %v913, %v1973
        %v1980 = vmul.f32 %v914, %v1973
        %v1981 = vmul.f32 %v915, %v1973
        %v1982 = vstv %s1971
        %v1983 = vadd.f32 %v1974, %v1982
        %v1984 = vadd.f32 %v1975, %v1982
        %v1985 = vadd.f32 %v1976, %v1982
        %v1986 = vadd.f32 %v1977, %v1982
        %v1987 = vadd.f32 %v1978, %v1982
        %v1988 = vadd.f32 %v1979, %v1982
        %v1989 = vadd.f32 %v1980, %v1982
        %v1990 = vadd.f32 %v1981, %v1982
        %v1991 = vmax.f32 %v1983, 0.0
        %v1992 = vmax.f32 %v1984, 0.0
        %v1993 = vmax.f32 %v1985, 0.0
        %v1994 = vmax.f32 %v1986, 0.0
        %v1995 = vmax.f32 %v1987, 0.0
        %v1996 = vmax.f32 %v1988, 0.0
        %v1997 = vmax.f32 %v1989, 0.0
        %v1998 = vmax.f32 %v1990, 0.0
        %v1999 = vstv %s1972
        %v2000 = vmul.f32 %v1991, %v1999
        %v2001 = vmul.f32 %v1992, %v1999
        %v2002 = vmul.f32 %v1993, %v1999
        %v2003 = vmul.f32 %v1994, %v1999
        %v2004 = vmul.f32 %v1995, %v1999
        %v2005 = vmul.f32 %v1996, %v1999
        %v2006 = vmul.f32 %v1997, %v1999
        %v2007 = vmul.f32 %v1998, %v1999
        %v2008 = vadd.f32 %v1962, %v2000
        %v2009 = vadd.f32 %v1963, %v2001
        %v2010 = vadd.f32 %v1964, %v2002
        %v2011 = vadd.f32 %v1965, %v2003
        %v2012 = vadd.f32 %v1966, %v2004
        %v2013 = vadd.f32 %v1967, %v2005
        %v2014 = vadd.f32 %v1968, %v2006
        %v2015 = vadd.f32 %v1969, %v2007
        %s2016 = sld [smem:[#allocation3 + $0x17]]
        %s2017 = sld [smem:[#allocation5 + $0x17]]
        %s2018 = sld [smem:[#allocation7 + $0x17]]
        %v2019 = vstv %s2016
        %v2020 = vmul.f32 %v908, %v2019
        %v2021 = vmul.f32 %v909, %v2019
        %v2022 = vmul.f32 %v910, %v2019
        %v2023 = vmul.f32 %v911, %v2019
        %v2024 = vmul.f32 %v912, %v2019
        %v2025 = vmul.f32 %v913, %v2019
        %v2026 = vmul.f32 %v914, %v2019
        %v2027 = vmul.f32 %v915, %v2019
        %v2028 = vstv %s2017
        %v2029 = vadd.f32 %v2020, %v2028
        %v2030 = vadd.f32 %v2021, %v2028
        %v2031 = vadd.f32 %v2022, %v2028
        %v2032 = vadd.f32 %v2023, %v2028
        %v2033 = vadd.f32 %v2024, %v2028
        %v2034 = vadd.f32 %v2025, %v2028
        %v2035 = vadd.f32 %v2026, %v2028
        %v2036 = vadd.f32 %v2027, %v2028
        %v2037 = vmax.f32 %v2029, 0.0
        %v2038 = vmax.f32 %v2030, 0.0
        %v2039 = vmax.f32 %v2031, 0.0
        %v2040 = vmax.f32 %v2032, 0.0
        %v2041 = vmax.f32 %v2033, 0.0
        %v2042 = vmax.f32 %v2034, 0.0
        %v2043 = vmax.f32 %v2035, 0.0
        %v2044 = vmax.f32 %v2036, 0.0
        %v2045 = vstv %s2018
        %v2046 = vmul.f32 %v2037, %v2045
        %v2047 = vmul.f32 %v2038, %v2045
        %v2048 = vmul.f32 %v2039, %v2045
        %v2049 = vmul.f32 %v2040, %v2045
        %v2050 = vmul.f32 %v2041, %v2045
        %v2051 = vmul.f32 %v2042, %v2045
        %v2052 = vmul.f32 %v2043, %v2045
        %v2053 = vmul.f32 %v2044, %v2045
        %v2054 = vadd.f32 %v2008, %v2046
        %v2055 = vadd.f32 %v2009, %v2047
        %v2056 = vadd.f32 %v2010, %v2048
        %v2057 = vadd.f32 %v2011, %v2049
        %v2058 = vadd.f32 %v2012, %v2050
        %v2059 = vadd.f32 %v2013, %v2051
        %v2060 = vadd.f32 %v2014, %v2052
        %v2061 = vadd.f32 %v2015, %v2053
        %s2062 = sld [smem:[#allocation3 + $0x18]]
        %s2063 = sld [smem:[#allocation5 + $0x18]]
        %s2064 = sld [smem:[#allocation7 + $0x18]]
        %v2065 = vstv %s2062
        %v2066 = vmul.f32 %v908, %v2065
        %v2067 = vmul.f32 %v909, %v2065
        %v2068 = vmul.f32 %v910, %v2065
        %v2069 = vmul.f32 %v911, %v2065
        %v2070 = vmul.f32 %v912, %v2065
        %v2071 = vmul.f32 %v913, %v2065
        %v2072 = vmul.f32 %v914, %v2065
        %v2073 = vmul.f32 %v915, %v2065
        %v2074 = vstv %s2063
        %v2075 = vadd.f32 %v2066, %v2074
        %v2076 = vadd.f32 %v2067, %v2074
        %v2077 = vadd.f32 %v2068, %v2074
        %v2078 = vadd.f32 %v2069, %v2074
        %v2079 = vadd.f32 %v2070, %v2074
        %v2080 = vadd.f32 %v2071, %v2074
        %v2081 = vadd.f32 %v2072, %v2074
        %v2082 = vadd.f32 %v2073, %v2074
        %v2083 = vmax.f32 %v2075, 0.0
        %v2084 = vmax.f32 %v2076, 0.0
        %v2085 = vmax.f32 %v2077, 0.0
        %v2086 = vmax.f32 %v2078, 0.0
        %v2087 = vmax.f32 %v2079, 0.0
        %v2088 = vmax.f32 %v2080, 0.0
        %v2089 = vmax.f32 %v2081, 0.0
        %v2090 = vmax.f32 %v2082, 0.0
        %v2091 = vstv %s2064
        %v2092 = vmul.f32 %v2083, %v2091
        %v2093 = vmul.f32 %v2084, %v2091
        %v2094 = vmul.f32 %v2085, %v2091
        %v2095 = vmul.f32 %v2086, %v2091
        %v2096 = vmul.f32 %v2087, %v2091
        %v2097 = vmul.f32 %v2088, %v2091
        %v2098 = vmul.f32 %v2089, %v2091
        %v2099 = vmul.f32 %v2090, %v2091
        %v2100 = vadd.f32 %v2054, %v2092
        %v2101 = vadd.f32 %v2055, %v2093
        %v2102 = vadd.f32 %v2056, %v2094
        %v2103 = vadd.f32 %v2057, %v2095
        %v2104 = vadd.f32 %v2058, %v2096
        %v2105 = vadd.f32 %v2059, %v2097
        %v2106 = vadd.f32 %v2060, %v2098
        %v2107 = vadd.f32 %v2061, %v2099
        %s2108 = sld [smem:[#allocation3 + $0x19]]
        %s2109 = sld [smem:[#allocation5 + $0x19]]
        %s2110 = sld [smem:[#allocation7 + $0x19]]
        %v2111 = vstv %s2108
        %v2112 = vmul.f32 %v908, %v2111
        %v2113 = vmul.f32 %v909, %v2111
        %v2114 = vmul.f32 %v910, %v2111
        %v2115 = vmul.f32 %v911, %v2111
        %v2116 = vmul.f32 %v912, %v2111
        %v2117 = vmul.f32 %v913, %v2111
        %v2118 = vmul.f32 %v914, %v2111
        %v2119 = vmul.f32 %v915, %v2111
        %v2120 = vstv %s2109
        %v2121 = vadd.f32 %v2112, %v2120
        %v2122 = vadd.f32 %v2113, %v2120
        %v2123 = vadd.f32 %v2114, %v2120
        %v2124 = vadd.f32 %v2115, %v2120
        %v2125 = vadd.f32 %v2116, %v2120
        %v2126 = vadd.f32 %v2117, %v2120
        %v2127 = vadd.f32 %v2118, %v2120
        %v2128 = vadd.f32 %v2119, %v2120
        %v2129 = vmax.f32 %v2121, 0.0
        %v2130 = vmax.f32 %v2122, 0.0
        %v2131 = vmax.f32 %v2123, 0.0
        %v2132 = vmax.f32 %v2124, 0.0
        %v2133 = vmax.f32 %v2125, 0.0
        %v2134 = vmax.f32 %v2126, 0.0
        %v2135 = vmax.f32 %v2127, 0.0
        %v2136 = vmax.f32 %v2128, 0.0
        %v2137 = vstv %s2110
        %v2138 = vmul.f32 %v2129, %v2137
        %v2139 = vmul.f32 %v2130, %v2137
        %v2140 = vmul.f32 %v2131, %v2137
        %v2141 = vmul.f32 %v2132, %v2137
        %v2142 = vmul.f32 %v2133, %v2137
        %v2143 = vmul.f32 %v2134, %v2137
        %v2144 = vmul.f32 %v2135, %v2137
        %v2145 = vmul.f32 %v2136, %v2137
        %v2146 = vadd.f32 %v2100, %v2138
        %v2147 = vadd.f32 %v2101, %v2139
        %v2148 = vadd.f32 %v2102, %v2140
        %v2149 = vadd.f32 %v2103, %v2141
        %v2150 = vadd.f32 %v2104, %v2142
        %v2151 = vadd.f32 %v2105, %v2143
        %v2152 = vadd.f32 %v2106, %v2144
        %v2153 = vadd.f32 %v2107, %v2145
        %s2154 = sld [smem:[#allocation3 + $0x1a]]
        %s2155 = sld [smem:[#allocation5 + $0x1a]]
        %s2156 = sld [smem:[#allocation7 + $0x1a]]
        %v2157 = vstv %s2154
        %v2158 = vmul.f32 %v908, %v2157
        %v2159 = vmul.f32 %v909, %v2157
        %v2160 = vmul.f32 %v910, %v2157
        %v2161 = vmul.f32 %v911, %v2157
        %v2162 = vmul.f32 %v912, %v2157
        %v2163 = vmul.f32 %v913, %v2157
        %v2164 = vmul.f32 %v914, %v2157
        %v2165 = vmul.f32 %v915, %v2157
        %v2166 = vstv %s2155
        %v2167 = vadd.f32 %v2158, %v2166
        %v2168 = vadd.f32 %v2159, %v2166
        %v2169 = vadd.f32 %v2160, %v2166
        %v2170 = vadd.f32 %v2161, %v2166
        %v2171 = vadd.f32 %v2162, %v2166
        %v2172 = vadd.f32 %v2163, %v2166
        %v2173 = vadd.f32 %v2164, %v2166
        %v2174 = vadd.f32 %v2165, %v2166
        %v2175 = vmax.f32 %v2167, 0.0
        %v2176 = vmax.f32 %v2168, 0.0
        %v2177 = vmax.f32 %v2169, 0.0
        %v2178 = vmax.f32 %v2170, 0.0
        %v2179 = vmax.f32 %v2171, 0.0
        %v2180 = vmax.f32 %v2172, 0.0
        %v2181 = vmax.f32 %v2173, 0.0
        %v2182 = vmax.f32 %v2174, 0.0
        %v2183 = vstv %s2156
        %v2184 = vmul.f32 %v2175, %v2183
        %v2185 = vmul.f32 %v2176, %v2183
        %v2186 = vmul.f32 %v2177, %v2183
        %v2187 = vmul.f32 %v2178, %v2183
        %v2188 = vmul.f32 %v2179, %v2183
        %v2189 = vmul.f32 %v2180, %v2183
        %v2190 = vmul.f32 %v2181, %v2183
        %v2191 = vmul.f32 %v2182, %v2183
        %v2192 = vadd.f32 %v2146, %v2184
        %v2193 = vadd.f32 %v2147, %v2185
        %v2194 = vadd.f32 %v2148, %v2186
        %v2195 = vadd.f32 %v2149, %v2187
        %v2196 = vadd.f32 %v2150, %v2188
        %v2197 = vadd.f32 %v2151, %v2189
        %v2198 = vadd.f32 %v2152, %v2190
        %v2199 = vadd.f32 %v2153, %v2191
        %s2200 = sld [smem:[#allocation3 + $0x1b]]
        %s2201 = sld [smem:[#allocation5 + $0x1b]]
        %s2202 = sld [smem:[#allocation7 + $0x1b]]
        %v2203 = vstv %s2200
        %v2204 = vmul.f32 %v908, %v2203
        %v2205 = vmul.f32 %v909, %v2203
        %v2206 = vmul.f32 %v910, %v2203
        %v2207 = vmul.f32 %v911, %v2203
        %v2208 = vmul.f32 %v912, %v2203
        %v2209 = vmul.f32 %v913, %v2203
        %v2210 = vmul.f32 %v914, %v2203
        %v2211 = vmul.f32 %v915, %v2203
        %v2212 = vstv %s2201
        %v2213 = vadd.f32 %v2204, %v2212
        %v2214 = vadd.f32 %v2205, %v2212
        %v2215 = vadd.f32 %v2206, %v2212
        %v2216 = vadd.f32 %v2207, %v2212
        %v2217 = vadd.f32 %v2208, %v2212
        %v2218 = vadd.f32 %v2209, %v2212
        %v2219 = vadd.f32 %v2210, %v2212
        %v2220 = vadd.f32 %v2211, %v2212
        %v2221 = vmax.f32 %v2213, 0.0
        %v2222 = vmax.f32 %v2214, 0.0
        %v2223 = vmax.f32 %v2215, 0.0
        %v2224 = vmax.f32 %v2216, 0.0
        %v2225 = vmax.f32 %v2217, 0.0
        %v2226 = vmax.f32 %v2218, 0.0
        %v2227 = vmax.f32 %v2219, 0.0
        %v2228 = vmax.f32 %v2220, 0.0
        %v2229 = vstv %s2202
        %v2230 = vmul.f32 %v2221, %v2229
        %v2231 = vmul.f32 %v2222, %v2229
        %v2232 = vmul.f32 %v2223, %v2229
        %v2233 = vmul.f32 %v2224, %v2229
        %v2234 = vmul.f32 %v2225, %v2229
        %v2235 = vmul.f32 %v2226, %v2229
        %v2236 = vmul.f32 %v2227, %v2229
        %v2237 = vmul.f32 %v2228, %v2229
        %v2238 = vadd.f32 %v2192, %v2230
        %v2239 = vadd.f32 %v2193, %v2231
        %v2240 = vadd.f32 %v2194, %v2232
        %v2241 = vadd.f32 %v2195, %v2233
        %v2242 = vadd.f32 %v2196, %v2234
        %v2243 = vadd.f32 %v2197, %v2235
        %v2244 = vadd.f32 %v2198, %v2236
        %v2245 = vadd.f32 %v2199, %v2237
        %s2246 = sld [smem:[#allocation3 + $0x1c]]
        %s2247 = sld [smem:[#allocation5 + $0x1c]]
        %s2248 = sld [smem:[#allocation7 + $0x1c]]
        %v2249 = vstv %s2246
        %v2250 = vmul.f32 %v908, %v2249
        %v2251 = vmul.f32 %v909, %v2249
        %v2252 = vmul.f32 %v910, %v2249
        %v2253 = vmul.f32 %v911, %v2249
        %v2254 = vmul.f32 %v912, %v2249
        %v2255 = vmul.f32 %v913, %v2249
        %v2256 = vmul.f32 %v914, %v2249
        %v2257 = vmul.f32 %v915, %v2249
        %v2258 = vstv %s2247
        %v2259 = vadd.f32 %v2250, %v2258
        %v2260 = vadd.f32 %v2251, %v2258
        %v2261 = vadd.f32 %v2252, %v2258
        %v2262 = vadd.f32 %v2253, %v2258
        %v2263 = vadd.f32 %v2254, %v2258
        %v2264 = vadd.f32 %v2255, %v2258
        %v2265 = vadd.f32 %v2256, %v2258
        %v2266 = vadd.f32 %v2257, %v2258
        %v2267 = vmax.f32 %v2259, 0.0
        %v2268 = vmax.f32 %v2260, 0.0
        %v2269 = vmax.f32 %v2261, 0.0
        %v2270 = vmax.f32 %v2262, 0.0
        %v2271 = vmax.f32 %v2263, 0.0
        %v2272 = vmax.f32 %v2264, 0.0
        %v2273 = vmax.f32 %v2265, 0.0
        %v2274 = vmax.f32 %v2266, 0.0
        %v2275 = vstv %s2248
        %v2276 = vmul.f32 %v2267, %v2275
        %v2277 = vmul.f32 %v2268, %v2275
        %v2278 = vmul.f32 %v2269, %v2275
        %v2279 = vmul.f32 %v2270, %v2275
        %v2280 = vmul.f32 %v2271, %v2275
        %v2281 = vmul.f32 %v2272, %v2275
        %v2282 = vmul.f32 %v2273, %v2275
        %v2283 = vmul.f32 %v2274, %v2275
        %v2284 = vadd.f32 %v2238, %v2276
        %v2285 = vadd.f32 %v2239, %v2277
        %v2286 = vadd.f32 %v2240, %v2278
        %v2287 = vadd.f32 %v2241, %v2279
        %v2288 = vadd.f32 %v2242, %v2280
        %v2289 = vadd.f32 %v2243, %v2281
        %v2290 = vadd.f32 %v2244, %v2282
        %v2291 = vadd.f32 %v2245, %v2283
        %s2292 = sld [smem:[#allocation3 + $0x1d]]
        %s2293 = sld [smem:[#allocation5 + $0x1d]]
        %s2294 = sld [smem:[#allocation7 + $0x1d]]
        %v2295 = vstv %s2292
        %v2296 = vmul.f32 %v908, %v2295
        %v2297 = vmul.f32 %v909, %v2295
        %v2298 = vmul.f32 %v910, %v2295
        %v2299 = vmul.f32 %v911, %v2295
        %v2300 = vmul.f32 %v912, %v2295
        %v2301 = vmul.f32 %v913, %v2295
        %v2302 = vmul.f32 %v914, %v2295
        %v2303 = vmul.f32 %v915, %v2295
        %v2304 = vstv %s2293
        %v2305 = vadd.f32 %v2296, %v2304
        %v2306 = vadd.f32 %v2297, %v2304
        %v2307 = vadd.f32 %v2298, %v2304
        %v2308 = vadd.f32 %v2299, %v2304
        %v2309 = vadd.f32 %v2300, %v2304
        %v2310 = vadd.f32 %v2301, %v2304
        %v2311 = vadd.f32 %v2302, %v2304
        %v2312 = vadd.f32 %v2303, %v2304
        %v2313 = vmax.f32 %v2305, 0.0
        %v2314 = vmax.f32 %v2306, 0.0
        %v2315 = vmax.f32 %v2307, 0.0
        %v2316 = vmax.f32 %v2308, 0.0
        %v2317 = vmax.f32 %v2309, 0.0
        %v2318 = vmax.f32 %v2310, 0.0
        %v2319 = vmax.f32 %v2311, 0.0
        %v2320 = vmax.f32 %v2312, 0.0
        %v2321 = vstv %s2294
        %v2322 = vmul.f32 %v2313, %v2321
        %v2323 = vmul.f32 %v2314, %v2321
        %v2324 = vmul.f32 %v2315, %v2321
        %v2325 = vmul.f32 %v2316, %v2321
        %v2326 = vmul.f32 %v2317, %v2321
        %v2327 = vmul.f32 %v2318, %v2321
        %v2328 = vmul.f32 %v2319, %v2321
        %v2329 = vmul.f32 %v2320, %v2321
        %v2330 = vadd.f32 %v2284, %v2322
        %v2331 = vadd.f32 %v2285, %v2323
        %v2332 = vadd.f32 %v2286, %v2324
        %v2333 = vadd.f32 %v2287, %v2325
        %v2334 = vadd.f32 %v2288, %v2326
        %v2335 = vadd.f32 %v2289, %v2327
        %v2336 = vadd.f32 %v2290, %v2328
        %v2337 = vadd.f32 %v2291, %v2329
        %s2338 = sld [smem:[#allocation3 + $0x1e]]
        %s2339 = sld [smem:[#allocation5 + $0x1e]]
        %s2340 = sld [smem:[#allocation7 + $0x1e]]
        %v2341 = vstv %s2338
        %v2342 = vmul.f32 %v908, %v2341
        %v2343 = vmul.f32 %v909, %v2341
        %v2344 = vmul.f32 %v910, %v2341
        %v2345 = vmul.f32 %v911, %v2341
        %v2346 = vmul.f32 %v912, %v2341
        %v2347 = vmul.f32 %v913, %v2341
        %v2348 = vmul.f32 %v914, %v2341
        %v2349 = vmul.f32 %v915, %v2341
        %v2350 = vstv %s2339
        %v2351 = vadd.f32 %v2342, %v2350
        %v2352 = vadd.f32 %v2343, %v2350
        %v2353 = vadd.f32 %v2344, %v2350
        %v2354 = vadd.f32 %v2345, %v2350
        %v2355 = vadd.f32 %v2346, %v2350
        %v2356 = vadd.f32 %v2347, %v2350
        %v2357 = vadd.f32 %v2348, %v2350
        %v2358 = vadd.f32 %v2349, %v2350
        %v2359 = vmax.f32 %v2351, 0.0
        %v2360 = vmax.f32 %v2352, 0.0
        %v2361 = vmax.f32 %v2353, 0.0
        %v2362 = vmax.f32 %v2354, 0.0
        %v2363 = vmax.f32 %v2355, 0.0
        %v2364 = vmax.f32 %v2356, 0.0
        %v2365 = vmax.f32 %v2357, 0.0
        %v2366 = vmax.f32 %v2358, 0.0
        %v2367 = vstv %s2340
        %v2368 = vmul.f32 %v2359, %v2367
        %v2369 = vmul.f32 %v2360, %v2367
        %v2370 = vmul.f32 %v2361, %v2367
        %v2371 = vmul.f32 %v2362, %v2367
        %v2372 = vmul.f32 %v2363, %v2367
        %v2373 = vmul.f32 %v2364, %v2367
        %v2374 = vmul.f32 %v2365, %v2367
        %v2375 = vmul.f32 %v2366, %v2367
        %v2376 = vadd.f32 %v2330, %v2368
        %v2377 = vadd.f32 %v2331, %v2369
        %v2378 = vadd.f32 %v2332, %v2370
        %v2379 = vadd.f32 %v2333, %v2371
        %v2380 = vadd.f32 %v2334, %v2372
        %v2381 = vadd.f32 %v2335, %v2373
        %v2382 = vadd.f32 %v2336, %v2374
        %v2383 = vadd.f32 %v2337, %v2375
        %s2384 = sld [smem:[#allocation3 + $0x1f]]
        %s2385 = sld [smem:[#allocation5 + $0x1f]]
        %s2386 = sld [smem:[#allocation7 + $0x1f]]
        %v2387 = vstv %s2384
        %v2388 = vmul.f32 %v908, %v2387
        %v2389 = vmul.f32 %v909, %v2387
        %v2390 = vmul.f32 %v910, %v2387
        %v2391 = vmul.f32 %v911, %v2387
        %v2392 = vmul.f32 %v912, %v2387
        %v2393 = vmul.f32 %v913, %v2387
        %v2394 = vmul.f32 %v914, %v2387
        %v2395 = vmul.f32 %v915, %v2387
        %v2396 = vstv %s2385
        %v2397 = vadd.f32 %v2388, %v2396
        %v2398 = vadd.f32 %v2389, %v2396
        %v2399 = vadd.f32 %v2390, %v2396
        %v2400 = vadd.f32 %v2391, %v2396
        %v2401 = vadd.f32 %v2392, %v2396
        %v2402 = vadd.f32 %v2393, %v2396
        %v2403 = vadd.f32 %v2394, %v2396
        %v2404 = vadd.f32 %v2395, %v2396
        %v2405 = vmax.f32 %v2397, 0.0
        %v2406 = vmax.f32 %v2398, 0.0
        %v2407 = vmax.f32 %v2399, 0.0
        %v2408 = vmax.f32 %v2400, 0.0
        %v2409 = vmax.f32 %v2401, 0.0
        %v2410 = vmax.f32 %v2402, 0.0
        %v2411 = vmax.f32 %v2403, 0.0
        %v2412 = vmax.f32 %v2404, 0.0
        %v2413 = vstv %s2386
        %v2414 = vmul.f32 %v2405, %v2413
        %v2415 = vmul.f32 %v2406, %v2413
        %v2416 = vmul.f32 %v2407, %v2413
        %v2417 = vmul.f32 %v2408, %v2413
        %v2418 = vmul.f32 %v2409, %v2413
        %v2419 = vmul.f32 %v2410, %v2413
        %v2420 = vmul.f32 %v2411, %v2413
        %v2421 = vmul.f32 %v2412, %v2413
        %v2422 = vadd.f32 %v2376, %v2414
        %v2423 = vadd.f32 %v2377, %v2415
        %v2424 = vadd.f32 %v2378, %v2416
        %v2425 = vadd.f32 %v2379, %v2417
        %v2426 = vadd.f32 %v2380, %v2418
        %v2427 = vadd.f32 %v2381, %v2419
        %v2428 = vadd.f32 %v2382, %v2420
        %v2429 = vadd.f32 %v2383, %v2421
        %v2430 = vmul.f32 %v2422, %v948
        %v2431 = vmul.f32 %v2423, %v949
        %v2432 = vmul.f32 %v2424, %v950
        %v2433 = vmul.f32 %v2425, %v951
        %v2434 = vmul.f32 %v2426, %v952
        %v2435 = vmul.f32 %v2427, %v953
        %v2436 = vmul.f32 %v2428, %v954
        %v2437 = vmul.f32 %v2429, %v955
        %2438 = vmatprep.subr.mxu0 0.0
        %2439 = vmatpush1.msra.mxu0 %v830
        %2440 = vmatprep.subr.mxu0 0.0
        %2441 = vmatpush1.msra.mxu0 %v835
        %2442 = vmatprep.subr.mxu0 0.0
        %2443 = vmatpush1.msra.mxu0 %v840
        %2444 = vmatprep.subr.mxu0 0.0
        %2445 = vmatpush1.msra.mxu0 %v845
        %2446 = vmatprep.subr.mxu0 0.0
        %2447 = vmatpush1.msra.mxu0 %v850
        %2448 = vmatprep.subr.mxu0 0.0
        %2449 = vmatpush1.msra.mxu0 %v855
        %2450 = vmatprep.subr.mxu0 0.0
        %2451 = vmatpush1.msra.mxu0 %v860
        %2452 = vmatprep.subr.mxu0 0.0
        %2453 = vmatpush1.msra.mxu0 %v865
        %2454 = vmatprep.subr.mxu0 0.0
        %2455 = vmatpush1.msra.mxu0 %v870
        %2456 = vmatprep.subr.mxu0 0.0
        %2457 = vmatpush1.msra.mxu0 %v875
        %2458 = vmatprep.subr.mxu0 0.0
        %2459 = vmatpush1.msra.mxu0 %v880
        %2460 = vmatprep.subr.mxu0 0.0
        %2461 = vmatpush1.msra.mxu0 %v885
        %2462 = vmatprep.subr.mxu0 0.0
        %2463 = vmatpush1.msra.mxu0 %v890
        %2464 = vmatprep.subr.mxu0 0.0
        %2465 = vmatpush1.msra.mxu0 %v895
        %2466 = vmatprep.subr.mxu0 0.0
        %2467 = vmatpush1.msra.mxu0 %v900
        %2468 = vmatprep.subr.mxu0 0.0
        %2469 = vmatpush1.msra.mxu0 %v905
        %2470 = vmatprep.subr.mxu0 0.0
        %2471 = vmatpush1.msra.mxu0 0.0
        %2472 = vmatprep.subr.mxu0 0.0
        %2473 = vmatpush1.msra.mxu0 0.0
        %2474 = vmatprep.subr.mxu0 0.0
        %2475 = vmatpush1.msra.mxu0 0.0
        %2476 = vmatprep.subr.mxu0 0.0
        %2477 = vmatpush1.msra.mxu0 0.0
        %2478 = vmatprep.subr.mxu0 0.0
        %2479 = vmatpush1.msra.mxu0 0.0
        %2480 = vmatprep.subr.mxu0 0.0
        %2481 = vmatpush1.msra.mxu0 0.0
        %2482 = vmatprep.subr.mxu0 0.0
        %2483 = vmatpush1.msra.mxu0 0.0
        %2484 = vmatprep.subr.mxu0 0.0
        %2485 = vmatpush1.msra.mxu0 0.0
        %2486 = vmatprep.subr.mxu0 0.0
        %2487 = vmatpush1.msra.mxu0 0.0
        %2488 = vmatprep.subr.mxu0 0.0
        %2489 = vmatpush1.msra.mxu0 0.0
        %2490 = vmatprep.subr.mxu0 0.0
        %2491 = vmatpush1.msra.mxu0 0.0
        %2492 = vmatprep.subr.mxu0 0.0
        %2493 = vmatpush1.msra.mxu0 0.0
        %2494 = vmatprep.subr.mxu0 0.0
        %2495 = vmatpush1.msra.mxu0 0.0
        %2496 = vmatprep.subr.mxu0 0.0
        %2497 = vmatpush1.msra.mxu0 0.0
        %2498 = vmatprep.subr.mxu0 0.0
        %2499 = vmatpush1.msra.mxu0 0.0
        %2500 = vmatprep.subr.mxu0 0.0
        %2501 = vmatpush1.msra.mxu0 0.0
        %2502 = vmatprep.mubr.f32.mxu0 0.0
        %2503 = vmatmul.mubr.f32.gmra.mrb[0].mxu0 %v2430
        %v2504 = vpop.f32.mrb[0].mxu0
        %v2505 = vadd.f32 0.0, %v2504
        %v2506 = vpop.f32.mrb[0].mxu0
        %2507 = vmatprep.mubr.f32.mxu0 0.0
        %2508 = vmatmul.mubr.f32.gmra.mrb[0].mxu0 %v2431
        %v2509 = vpop.f32.mrb[0].mxu0
        %v2510 = vadd.f32 0.0, %v2509
        %v2511 = vpop.f32.mrb[0].mxu0
        %2512 = vmatprep.mubr.f32.mxu0 0.0
        %2513 = vmatmul.mubr.f32.gmra.mrb[0].mxu0 %v2432
        %v2514 = vpop.f32.mrb[0].mxu0
        %v2515 = vadd.f32 0.0, %v2514
        %v2516 = vpop.f32.mrb[0].mxu0
        %2517 = vmatprep.mubr.f32.mxu0 0.0
        %2518 = vmatmul.mubr.f32.gmra.mrb[0].mxu0 %v2433
        %v2519 = vpop.f32.mrb[0].mxu0
        %v2520 = vadd.f32 0.0, %v2519
        %v2521 = vpop.f32.mrb[0].mxu0
        %2522 = vmatprep.mubr.f32.mxu0 0.0
        %2523 = vmatmul.mubr.f32.gmra.mrb[0].mxu0 %v2434
        %v2524 = vpop.f32.mrb[0].mxu0
        %v2525 = vadd.f32 0.0, %v2524
        %v2526 = vpop.f32.mrb[0].mxu0
        %2527 = vmatprep.mubr.f32.mxu0 0.0
        %2528 = vmatmul.mubr.f32.gmra.mrb[0].mxu0 %v2435
        %v2529 = vpop.f32.mrb[0].mxu0
        %v2530 = vadd.f32 0.0, %v2529
        %v2531 = vpop.f32.mrb[0].mxu0
        %2532 = vmatprep.mubr.f32.mxu0 0.0
        %2533 = vmatmul.mubr.f32.gmra.mrb[0].mxu0 %v2436
        %v2534 = vpop.f32.mrb[0].mxu0
        %v2535 = vadd.f32 0.0, %v2534
        %v2536 = vpop.f32.mrb[0].mxu0
        %2537 = vmatprep.mubr.f32.mxu0 0.0
        %2538 = vmatmul.mubr.f32.gmra.mrb[0].mxu0 %v2437
        %v2539 = vpop.f32.mrb[0].mxu0
        %v2540 = vadd.f32 0.0, %v2539
        %v2541 = vpop.f32.mrb[0].mxu0
        %2542 = vdwg.mxu0
        %vm2543 = vcmask 130048
        %2544 = vst.msk [vmem:[%s450] sm:$0xff] %vm2543, %v2505
        %2545 = vst.msk [vmem:[%s450 + $0x8] sm:$0xff] %vm2543, %v2510
        %2546 = vst.msk [vmem:[%s450 + $0x10] sm:$0xff] %vm2543, %v2515
        %2547 = vst.msk [vmem:[%s450 + $0x18] sm:$0xff] %vm2543, %v2520
        %2548 = vst.msk [vmem:[%s450 + $0x20] sm:$0xff] %vm2543, %v2525
        %2549 = vst.msk [vmem:[%s450 + $0x28] sm:$0xff] %vm2543, %v2530
        %2550 = vst.msk [vmem:[%s450 + $0x30] sm:$0xff] %vm2543, %v2535
        %2551 = vst.msk [vmem:[%s450 + $0x38] sm:$0xff] %vm2543, %v2540
        %s2552 = smul.u32 8, %s25
        %p2553 = scmp.lt.s32.totalorder %s2552, 15
        %s2554 = scalar_select %p2553, %s2552, 15
        %s2555 = smul.addr %s2554, 8
        %s2556 = scalar_lea.vmem %s11, %s2555
        // Predicated region
        $region77: #{tpu_custom_call.1} parent=63 // pred_check
          %p2557 = pneg %p284
        $region78: #{tpu_custom_call.1} parent=63 // pred_check_branch
          %2559 = sbr.rel (%p2557) target = $region80
        $region79: #{tpu_custom_call.1} parent=63 // pred_region
          %s2560 = smul.u32 8, %s25
        $region80: #{tpu_custom_call.1} parent=63 // pred_fallthru
          _
      $region64: #{tpu_custom_call.1} parent=5 // pred_fallthru
        _
      %p2561 = scmp.le.s32.totalorder 2, %s20
      // Predicated region
      $region81: #{tpu_custom_call.1} parent=5 // pred_check
        %p2562 = pneg %p2561
      $region82: #{tpu_custom_call.1} parent=5 // pred_check_branch
        %2564 = sbr.rel (%p2562) target = $region84
      $region83: #{tpu_custom_call.1} parent=5 // pred_region
        %s2565 = ssub.s32 %s20, 2
        // Predicated region
        $region85: #{tpu_custom_call.1} parent=83 // pred_check
          %p2566 = pneg %p290
        $region86: #{tpu_custom_call.1} parent=83 // pred_check_branch
          %2568 = sbr.rel (%p2566) target = $region88
        $region87: #{tpu_custom_call.1} parent=83 // pred_region
          %s2569 = smul.u32 8, %s26
          %p2570 = scmp.lt.s32.totalorder %s2569, 15
          %s2571 = scalar_select %p2570, %s2569, 15
          %s2572 = smul.addr %s2571, 8
          %s2573 = scalar_lea.vmem %s11, %s2572
        $region88: #{tpu_custom_call.1} parent=83 // pred_fallthru
          _
      $region84: #{tpu_custom_call.1} parent=5 // pred_fallthru
        _
    $region6: #{tpu_custom_call.1} parent=1 // loop_footer
      %s24 = sadd.s32 1, %s20
    $region7: #{tpu_custom_call.1} parent=1 // loop_footer_branch
      %19 = sbr.rel target = $region3
    $region8: #{tpu_custom_call.1} parent=1 // loop_exit
      _
    %2574 = vsyncpa [#allocation4], 1
    %s2575 = scalar_lea.sflag [#allocation4], 1
    %2576 = vsyncpa %s2575, 1
    %2577 = vsyncpa [#allocation6], 1

</llo_original>
